<compile_context>
chip_gen: v7x
topology: tpu7x:2x2x1
jax: 0.10.0
libtpu: 0.0.40
codegen_flags: <defaults>
</compile_context>

<pallas_src>
import jax
import jax.numpy as jnp
from jax.experimental import pallas as pl
from jax.experimental.pallas import tpu as pltpu

# Model hyper-parameters (from the PyTorch module defaults).
VOCAB = 25          # input_dim
EMBED = 44          # embed_dim
HIDDEN = 64         # gru_units
SEQ = 24            # flatten expects gru_units * 24
DENSE1 = 128
DENSE2 = 64
OUT = 2
OUT_PAD = 128       # lane-dense padded output width (real logits are columns 0..1)
_MAX_BLOCK_B = 256  # per perf review: 128-256


def _round_up(x, m):
    return ((x + m - 1) // m) * m


def _pick_block_b(batch):
    """Batch tile: full (padded-to-8) batch for small B; 128/256 tiles (>=2 grid tiles,
    all specs lane-dense) for large B."""
    bp = _round_up(batch, 8)
    if bp <= 128:
        return bp                      # single tile; block == full array, always legal
    return 128 if bp <= 512 else _MAX_BLOCK_B


def gru_emb_kernel(xi_ref, emb_ref, whh_ref, bhhn_ref,
                   w1_ref, b1_ref, w2_ref, b2_ref, wo_ref, bo_ref,
                   out_ref, gx_ref, hseq_ref):
    # xi_ref:   (T, Bt) int32 token ids (time-major; transposed wrapper-side)
    # emb_ref:  (V, 3H) bf16  embedding table folded with W_ih^T + b_ih (+ b_hr, b_hz)
    # whh_ref:  (H, 3H) bf16  fused recurrent weights [whh_r | whh_z | whh_n]
    # bhhn_ref: (1, H)  f32   recurrent bias of the n gate (cannot be folded)
    # w1_ref:(T*H, D1) bf16  b1_ref:(1, D1) f32   w2_ref:(D1, D2) bf16  b2_ref:(1, D2) f32
    # wo_ref:(D2, 128) bf16  bo_ref:(1, 128) f32
    # out_ref:  (Bt, 128) f32
    # gx_ref:   (T, Bt, 3H) f32 VMEM scratch -- staged input-gate pre-activations
    # hseq_ref: (Bt, T*H) bf16 VMEM scratch -- lane-dense flatten of GRU outputs
    T, Bt = xi_ref.shape
    V, G = emb_ref.shape
    H = G // 3

    # --- Embedding + ALL input-gate projections: ONE fused (T*Bt,V)@(V,3H) matmul, then
    #     staged to VMEM so nothing large stays live in vregs across the unrolled loop. --
    idx_t = xi_ref[...]                                                   # (T, Bt)
    iota_v = jax.lax.broadcasted_iota(jnp.int32, (T, Bt, V), 2)
    onehot = (idx_t[:, :, None] == iota_v).astype(jnp.float32)            # (T, Bt, V)
    onehot2 = onehot.reshape(T * Bt, V).astype(jnp.bfloat16)              # bf16 MXU operand
    gx_all = jnp.dot(onehot2, emb_ref[...],
                     preferred_element_type=jnp.float32)                  # (T*Bt, 3H) f32
    gx_ref[...] = gx_all.reshape(T, Bt, G)

    # Hoist loop invariants (no per-step broadcast_in_dim / weight reload).
    whh = whh_ref[...]                                                    # (H, 3H) bf16
    bhh_n = jnp.broadcast_to(bhhn_ref[...], (Bt, H))                      # (Bt, H) f32

    # --- GRU recurrence, fully unrolled (T=24 static). ONE fused (Bt,H)@(H,3H) MXU
    #     round-trip per step; gate math in f32 on the VPU/EUP. ------------------------
    h = jnp.zeros((Bt, H), jnp.float32)
    hb = h.astype(jnp.bfloat16)
    h_even = hb
    for t in range(T):
        gh = jnp.dot(hb, whh, preferred_element_type=jnp.float32)         # (Bt, 3H) f32
        gx_t = gx_ref[t]                                                  # (Bt, 3H) f32
        # sigmoid(x) = 0.5*(1 + tanh(0.5*x)): one EUP op per gate instead of exp+recip.
        r = 0.5 * (1.0 + jnp.tanh(0.5 * (gx_t[:, 0:H] + gh[:, 0:H])))
        z = 0.5 * (1.0 + jnp.tanh(0.5 * (gx_t[:, H:2 * H] + gh[:, H:2 * H])))
        n = jnp.tanh(gx_t[:, 2 * H:] + r * (gh[:, 2 * H:] + bhh_n))
        h = (1.0 - z) * n + z * h
        hb = h.astype(jnp.bfloat16)
        if t % 2 == 0:
            h_even = hb
        else:
            # Paired store: 128 lanes wide, 128-lane aligned -> unmasked full-vreg vst.
            hseq_ref[:, (t - 1) * H:(t + 1) * H] = jnp.concatenate([h_even, hb], axis=1)

    # --- Dense stack: single K=1536 bf16 matmul for dense-1, then small tails ----------
    flat = hseq_ref[...]                                                  # (Bt, T*H) bf16
    d1 = jnp.maximum(jnp.dot(flat, w1_ref[...],
                             preferred_element_type=jnp.float32) + b1_ref[...], 0.0)
    d2 = jnp.maximum(jnp.dot(d1.astype(jnp.bfloat16), w2_ref[...],
                             preferred_element_type=jnp.float32) + b2_ref[...], 0.0)
    out_ref[...] = jnp.dot(d2.astype(jnp.bfloat16), wo_ref[...],
                           preferred_element_type=jnp.float32) + bo_ref[...]


@jax.jit
def gru_emb_forward(x, params):
    """x: (B, T=24) integer token ids. Returns (B, 2) float32 logits."""
    B, T = x.shape
    assert T == SEQ
    H = HIDDEN

    # ---- Fold embedding table + input biases into ONE (V, 3H) projection table -------
    # (params-only preprocessing; PyTorch gate order r, z, n). b_hr/b_hz fold through the
    # sigmoid add; b_hn must stay inside r*(...).
    emb_all = params["table"] @ params["wih_t"] + params["bih"]           # (V, 3H)
    bhh = params["bhh"]                                                   # (1, 3H)
    fold = jnp.concatenate([bhh[:, :2 * H], jnp.zeros((1, H), jnp.float32)], axis=1)
    emb_all = (emb_all + fold).astype(jnp.bfloat16)
    whh_all = params["whh_t"].astype(jnp.bfloat16)                        # (H, 3H) fused
    bhh_n = bhh[:, 2 * H:]                                                # (1, H) f32
    w1 = params["w1t"].astype(jnp.bfloat16)
    w2 = params["w2t"].astype(jnp.bfloat16)
    # Pad the output head to a lane-dense 128-wide slab (extra columns are exact zeros).
    wo = jnp.zeros((DENSE2, OUT_PAD), jnp.float32).at[:, :OUT].set(params["wot"])
    wo = wo.astype(jnp.bfloat16)
    bo = jnp.zeros((1, OUT_PAD), jnp.float32).at[:, :OUT].set(params["bo"])

    # ---- Batch tiling: pad to the tile size and grid over batch ----------------------
    block_b = _pick_block_b(B)
    Bp = _round_up(B, block_b)
    xi_t = jnp.transpose(x.astype(jnp.int32))                             # (T, B) time-major
    if Bp != B:
        xi_t = jnp.pad(xi_t, ((0, 0), (0, Bp - B)))   # token 0 is in-vocab; rows sliced off
    grid = (Bp // block_b,)

    const = lambda b: (0, 0)                          # weights stay VMEM-resident
    out = pl.pallas_call(
        gru_emb_kernel,
        out_shape=jax.ShapeDtypeStruct((Bp, OUT_PAD), jnp.float32),
        grid=grid,
        in_specs=[
            pl.BlockSpec((SEQ, block_b), lambda b: (0, b)),               # token ids (T, Bt)
            pl.BlockSpec((VOCAB, 3 * H), const),                          # emb_all (25, 192)
            pl.BlockSpec((H, 3 * H), const),                              # whh_all (64, 192)
            pl.BlockSpec((1, H), const),                                  # bhh_n
            pl.BlockSpec((SEQ * H, DENSE1), const),                       # w1 (1536, 128)
            pl.BlockSpec((1, DENSE1), const),                             # b1
            pl.BlockSpec((DENSE1, DENSE2), const),                        # w2
            pl.BlockSpec((1, DENSE2), const),                             # b2
            pl.BlockSpec((DENSE2, OUT_PAD), const),                       # wo (64, 128)
            pl.BlockSpec((1, OUT_PAD), const),                            # bo
        ],
        out_specs=pl.BlockSpec((block_b, OUT_PAD), lambda b: (b, 0)),
        scratch_shapes=[
            pltpu.VMEM((SEQ, block_b, 3 * H), jnp.float32),   # staged input-gate pre-acts
            pltpu.VMEM((block_b, SEQ * H), jnp.bfloat16),     # lane-dense flattened h_t
        ],
        compiler_params=pltpu.CompilerParams(
            dimension_semantics=("parallel",),
            vmem_limit_bytes=32 * 1024 * 1024),
    )(xi_t, emb_all, whh_all, bhh_n, w1, params["b1"], w2, params["b2"], wo, bo)
    return out[:B, :OUT]


def init_params(key):
    ks = jax.random.split(key, 11)
    s = 0.1
    return {
        "table": jax.random.normal(ks[0], (VOCAB, EMBED), jnp.float32) * s,
        # GRU weights stored transposed: (in_features, 3*H), gate order r, z, n.
        "wih_t": jax.random.normal(ks[1], (EMBED, 3 * HIDDEN), jnp.float32) * s,
        "whh_t": jax.random.normal(ks[2], (HIDDEN, 3 * HIDDEN), jnp.float32) * s,
        "bih": jax.random.normal(ks[3], (1, 3 * HIDDEN), jnp.float32) * s,
        "bhh": jax.random.normal(ks[4], (1, 3 * HIDDEN), jnp.float32) * s,
        # Dense 1: nn.Linear(T*H -> D1), stored transposed (T*H, D1); flatten index t*H + j.
        "w1t": jax.random.normal(ks[5], (SEQ * HIDDEN, DENSE1), jnp.float32) * s,
        "b1": jax.random.normal(ks[6], (1, DENSE1), jnp.float32) * s,
        "w2t": jax.random.normal(ks[7], (DENSE1, DENSE2), jnp.float32) * s,
        "b2": jax.random.normal(ks[8], (1, DENSE2), jnp.float32) * s,
        "wot": jax.random.normal(ks[9], (DENSE2, OUT), jnp.float32) * s,
        "bo": jax.random.normal(ks[10], (1, OUT), jnp.float32) * s,
    }


@jax.jit
def reference_forward(x, p):
    """Pure-JAX f32 reference mirroring the PyTorch forward (eval mode)."""
    B, T = x.shape
    H = HIDDEN
    emb = p["table"][x]                                                   # (B, T, E)
    h = jnp.zeros((B, H), jnp.float32)
    hs = []
    for t in range(T):
        gx = emb[:, t, :] @ p["wih_t"] + p["bih"]
        gh = h @ p["whh_t"] + p["bhh"]
        r = jax.nn.sigmoid(gx[:, :H] + gh[:, :H])
        z = jax.nn.sigmoid(gx[:, H:2 * H] + gh[:, H:2 * H])
        n = jnp.tanh(gx[:, 2 * H:] + r * gh[:, 2 * H:])
        h = (1.0 - z) * n + z * h
        hs.append(h)
    flat = jnp.concatenate(hs, axis=1)                                    # (B, T*H)
    d1 = jax.nn.relu(flat @ p["w1t"] + p["b1"])
    d2 = jax.nn.relu(d1 @ p["w2t"] + p["b2"])
    return d2 @ p["wot"] + p["bo"]


if __name__ == "__main__":
    key = jax.random.PRNGKey(0)
    pkey, xkey = jax.random.split(key)
    params = init_params(pkey)

    B = 16   # small validation batch (single tile); large batches use 128/256-wide tiles
    x = jax.random.randint(xkey, (B, SEQ), 0, VOCAB, dtype=jnp.int32)

    out = jax.block_until_ready(gru_emb_forward(x, params))
    ref = reference_forward(x, params)

    assert out.shape == (B, OUT)
    # bf16 matmul operands (per the perf review) + f32 accumulation: tolerance is looser
    # than the f32-operand version (error is dominated by the K=1536 dense-1 reduction).
    assert jnp.allclose(out, ref, atol=5e-2, rtol=5e-2), (out, ref)

    print("KERNEL_OK")
</pallas_src>

<mosaic_0001>
module attributes {stable_mosaic.version = 11 : i64} {
  func.func @gru_emb_kernel(%arg0: i32, %arg1: memref<24x16xi32, #tpu.memory_space<vmem>>, %arg2: memref<25x192xbf16, #tpu.memory_space<vmem>>, %arg3: memref<64x192xbf16, #tpu.memory_space<vmem>>, %arg4: memref<1x64xf32, #tpu.memory_space<vmem>>, %arg5: memref<1536x128xbf16, #tpu.memory_space<vmem>>, %arg6: memref<1x128xf32, #tpu.memory_space<vmem>>, %arg7: memref<128x64xbf16, #tpu.memory_space<vmem>>, %arg8: memref<1x64xf32, #tpu.memory_space<vmem>>, %arg9: memref<64x128xbf16, #tpu.memory_space<vmem>>, %arg10: memref<1x128xf32, #tpu.memory_space<vmem>>, %arg11: memref<16x128xf32, #tpu.memory_space<vmem>>, %arg12: memref<24x16x192xf32, #tpu.memory_space<vmem>>, %arg13: memref<16x1536xbf16, #tpu.memory_space<vmem>>) attributes {dimension_semantics = [#tpu.dimension_semantics<parallel>], iteration_bounds = array<i64: 1>, scalar_prefetch = 0 : i64, scratch_operands = 2 : i64, tpu.core_type = #tpu.core_type<tc>, window_params = [{transform_indices = @transform_0, window_bounds = array<i64: 24, 16>}, {pipeline_mode = #tpu.pipeline_mode<synchronous>, transform_indices = @transform_1, window_bounds = array<i64: 25, 192>}, {pipeline_mode = #tpu.pipeline_mode<synchronous>, transform_indices = @transform_2, window_bounds = array<i64: 64, 192>}, {pipeline_mode = #tpu.pipeline_mode<synchronous>, transform_indices = @transform_3, window_bounds = array<i64: 1, 64>}, {pipeline_mode = #tpu.pipeline_mode<synchronous>, transform_indices = @transform_4, window_bounds = array<i64: 1536, 128>}, {pipeline_mode = #tpu.pipeline_mode<synchronous>, transform_indices = @transform_5, window_bounds = array<i64: 1, 128>}, {pipeline_mode = #tpu.pipeline_mode<synchronous>, transform_indices = @transform_6, window_bounds = array<i64: 128, 64>}, {pipeline_mode = #tpu.pipeline_mode<synchronous>, transform_indices = @transform_7, window_bounds = array<i64: 1, 64>}, {pipeline_mode = #tpu.pipeline_mode<synchronous>, transform_indices = @transform_8, window_bounds = array<i64: 64, 128>}, {pipeline_mode = #tpu.pipeline_mode<synchronous>, transform_indices = @transform_9, window_bounds = array<i64: 1, 128>}, {transform_indices = @transform_10, window_bounds = array<i64: 16, 128>}]} {
    %c0 = arith.constant 0 : index
    %c0_0 = arith.constant 0 : index
    %0 = vector.load %arg1[%c0, %c0_0] : memref<24x16xi32, #tpu.memory_space<vmem>>, vector<24x16xi32>
    %1 = tpu.iota {dimensions = array<i32: 2>} : vector<24x16x25xi32>
    %2 = vector.shape_cast %0 : vector<24x16xi32> to vector<24x16x1xi32>
    %3 = vector.broadcast %2 : vector<24x16x1xi32> to vector<24x16x25xi32>
    %4 = arith.cmpi eq, %3, %1 : vector<24x16x25xi32>
    %5 = arith.extui %4 : vector<24x16x25xi1> to vector<24x16x25xi32>
    %6 = arith.sitofp %5 : vector<24x16x25xi32> to vector<24x16x25xf32>
    %7 = vector.shape_cast %6 : vector<24x16x25xf32> to vector<384x25xf32>
    %8 = arith.truncf %7 : vector<384x25xf32> to vector<384x25xbf16>
    %c0_1 = arith.constant 0 : index
    %c0_2 = arith.constant 0 : index
    %9 = vector.load %arg2[%c0_1, %c0_2] : memref<25x192xbf16, #tpu.memory_space<vmem>>, vector<25x192xbf16>
    %cst = arith.constant dense<0.000000e+00> : vector<384x192xf32>
    %10 = tpu.matmul %8, %9, %cst {dimension_numbers = #tpu.dot_dimension_numbers<[1], [0], [0], [1], [0, 0, 1, 1], [], []>} : vector<384x25xbf16>, vector<25x192xbf16>, vector<384x192xf32> -> vector<384x192xf32>
    %11 = vector.shape_cast %10 : vector<384x192xf32> to vector<24x16x192xf32>
    %c0_3 = arith.constant 0 : index
    %c0_4 = arith.constant 0 : index
    %c0_5 = arith.constant 0 : index
    %12 = vector.load %arg12[%c0_3, %c0_4, %c0_5] : memref<24x16x192xf32, #tpu.memory_space<vmem>>, vector<24x16x192xf32>
    tpu.vector_store %arg12[%c0_3, %c0_4, %c0_5], %11 {strides = array<i32>} : memref<24x16x192xf32, #tpu.memory_space<vmem>>, vector<24x16x192xf32>,
    %c0_6 = arith.constant 0 : index
    %c0_7 = arith.constant 0 : index
    %13 = vector.load %arg3[%c0_6, %c0_7] : memref<64x192xbf16, #tpu.memory_space<vmem>>, vector<64x192xbf16>
    %c0_8 = arith.constant 0 : index
    %c0_9 = arith.constant 0 : index
    %14 = vector.load %arg4[%c0_8, %c0_9] : memref<1x64xf32, #tpu.memory_space<vmem>>, vector<1x64xf32>
    %15 = vector.shape_cast %14 : vector<1x64xf32> to vector<1x64xf32>
    %16 = vector.broadcast %15 : vector<1x64xf32> to vector<16x64xf32>
    %cst_10 = arith.constant 0.000000e+00 : f32
    %17 = vector.broadcast %cst_10 : f32 to vector<16x64xf32>
    %18 = arith.truncf %17 : vector<16x64xf32> to vector<16x64xbf16>
    %cst_11 = arith.constant dense<0.000000e+00> : vector<16x192xf32>
    %19 = tpu.matmul %18, %13, %cst_11 {dimension_numbers = #tpu.dot_dimension_numbers<[1], [0], [0], [1], [0, 0, 1, 1], [], []>} : vector<16x64xbf16>, vector<64x192xbf16>, vector<16x192xf32> -> vector<16x192xf32>
    %c0_12 = arith.constant 0 : index
    %c0_13 = arith.constant 0 : index
    %c0_14 = arith.constant 0 : index
    %20 = vector.load %arg12[%c0_12, %c0_13, %c0_14] : memref<24x16x192xf32, #tpu.memory_space<vmem>>, vector<1x16x192xf32>
    %21 = vector.shape_cast %20 : vector<1x16x192xf32> to vector<16x192xf32>
    %22 = vector.extract_strided_slice %21 {offsets = [0, 0], sizes = [16, 64], strides = [1, 1]} : vector<16x192xf32> to vector<16x64xf32>
    %23 = vector.extract_strided_slice %19 {offsets = [0, 0], sizes = [16, 64], strides = [1, 1]} : vector<16x192xf32> to vector<16x64xf32>
    %24 = arith.addf %22, %23 : vector<16x64xf32>
    %cst_15 = arith.constant 5.000000e-01 : f32
    %25 = vector.broadcast %cst_15 : f32 to vector<16x64xf32>
    %26 = arith.mulf %25, %24 : vector<16x64xf32>
    %27 = math.tanh %26 : vector<16x64xf32>
    %cst_16 = arith.constant 1.000000e+00 : f32
    %28 = vector.broadcast %cst_16 : f32 to vector<16x64xf32>
    %29 = arith.addf %28, %27 : vector<16x64xf32>
    %cst_17 = arith.constant 5.000000e-01 : f32
    %30 = vector.broadcast %cst_17 : f32 to vector<16x64xf32>
    %31 = arith.mulf %30, %29 : vector<16x64xf32>
    %32 = vector.extract_strided_slice %21 {offsets = [0, 64], sizes = [16, 64], strides = [1, 1]} : vector<16x192xf32> to vector<16x64xf32>
    %33 = vector.extract_strided_slice %19 {offsets = [0, 64], sizes = [16, 64], strides = [1, 1]} : vector<16x192xf32> to vector<16x64xf32>
    %34 = arith.addf %32, %33 : vector<16x64xf32>
    %cst_18 = arith.constant 5.000000e-01 : f32
    %35 = vector.broadcast %cst_18 : f32 to vector<16x64xf32>
    %36 = arith.mulf %35, %34 : vector<16x64xf32>
    %37 = math.tanh %36 : vector<16x64xf32>
    %cst_19 = arith.constant 1.000000e+00 : f32
    %38 = vector.broadcast %cst_19 : f32 to vector<16x64xf32>
    %39 = arith.addf %38, %37 : vector<16x64xf32>
    %cst_20 = arith.constant 5.000000e-01 : f32
    %40 = vector.broadcast %cst_20 : f32 to vector<16x64xf32>
    %41 = arith.mulf %40, %39 : vector<16x64xf32>
    %42 = vector.extract_strided_slice %21 {offsets = [0, 128], sizes = [16, 64], strides = [1, 1]} : vector<16x192xf32> to vector<16x64xf32>
    %43 = vector.extract_strided_slice %19 {offsets = [0, 128], sizes = [16, 64], strides = [1, 1]} : vector<16x192xf32> to vector<16x64xf32>
    %44 = arith.addf %43, %16 : vector<16x64xf32>
    %45 = arith.mulf %31, %44 : vector<16x64xf32>
    %46 = arith.addf %42, %45 : vector<16x64xf32>
    %47 = math.tanh %46 : vector<16x64xf32>
    %cst_21 = arith.constant 1.000000e+00 : f32
    %48 = vector.broadcast %cst_21 : f32 to vector<16x64xf32>
    %49 = arith.subf %48, %41 : vector<16x64xf32>
    %50 = arith.mulf %49, %47 : vector<16x64xf32>
    %51 = arith.mulf %41, %17 : vector<16x64xf32>
    %52 = arith.addf %50, %51 : vector<16x64xf32>
    %53 = arith.truncf %52 : vector<16x64xf32> to vector<16x64xbf16>
    %cst_22 = arith.constant dense<0.000000e+00> : vector<16x192xf32>
    %54 = tpu.matmul %53, %13, %cst_22 {dimension_numbers = #tpu.dot_dimension_numbers<[1], [0], [0], [1], [0, 0, 1, 1], [], []>} : vector<16x64xbf16>, vector<64x192xbf16>, vector<16x192xf32> -> vector<16x192xf32>
    %c1 = arith.constant 1 : index
    %c0_23 = arith.constant 0 : index
    %c0_24 = arith.constant 0 : index
    %55 = vector.load %arg12[%c1, %c0_23, %c0_24] : memref<24x16x192xf32, #tpu.memory_space<vmem>>, vector<1x16x192xf32>
    %56 = vector.shape_cast %55 : vector<1x16x192xf32> to vector<16x192xf32>
    %57 = vector.extract_strided_slice %56 {offsets = [0, 0], sizes = [16, 64], strides = [1, 1]} : vector<16x192xf32> to vector<16x64xf32>
    %58 = vector.extract_strided_slice %54 {offsets = [0, 0], sizes = [16, 64], strides = [1, 1]} : vector<16x192xf32> to vector<16x64xf32>
    %59 = arith.addf %57, %58 : vector<16x64xf32>
    %cst_25 = arith.constant 5.000000e-01 : f32
    %60 = vector.broadcast %cst_25 : f32 to vector<16x64xf32>
    %61 = arith.mulf %60, %59 : vector<16x64xf32>
    %62 = math.tanh %61 : vector<16x64xf32>
    %cst_26 = arith.constant 1.000000e+00 : f32
    %63 = vector.broadcast %cst_26 : f32 to vector<16x64xf32>
    %64 = arith.addf %63, %62 : vector<16x64xf32>
    %cst_27 = arith.constant 5.000000e-01 : f32
    %65 = vector.broadcast %cst_27 : f32 to vector<16x64xf32>
    %66 = arith.mulf %65, %64 : vector<16x64xf32>
    %67 = vector.extract_strided_slice %56 {offsets = [0, 64], sizes = [16, 64], strides = [1, 1]} : vector<16x192xf32> to vector<16x64xf32>
    %68 = vector.extract_strided_slice %54 {offsets = [0, 64], sizes = [16, 64], strides = [1, 1]} : vector<16x192xf32> to vector<16x64xf32>
    %69 = arith.addf %67, %68 : vector<16x64xf32>
    %cst_28 = arith.constant 5.000000e-01 : f32
    %70 = vector.broadcast %cst_28 : f32 to vector<16x64xf32>
    %71 = arith.mulf %70, %69 : vector<16x64xf32>
    %72 = math.tanh %71 : vector<16x64xf32>
    %cst_29 = arith.constant 1.000000e+00 : f32
    %73 = vector.broadcast %cst_29 : f32 to vector<16x64xf32>
    %74 = arith.addf %73, %72 : vector<16x64xf32>
    %cst_30 = arith.constant 5.000000e-01 : f32
    %75 = vector.broadcast %cst_30 : f32 to vector<16x64xf32>
    %76 = arith.mulf %75, %74 : vector<16x64xf32>
    %77 = vector.extract_strided_slice %56 {offsets = [0, 128], sizes = [16, 64], strides = [1, 1]} : vector<16x192xf32> to vector<16x64xf32>
    %78 = vector.extract_strided_slice %54 {offsets = [0, 128], sizes = [16, 64], strides = [1, 1]} : vector<16x192xf32> to vector<16x64xf32>
    %79 = arith.addf %78, %16 : vector<16x64xf32>
    %80 = arith.mulf %66, %79 : vector<16x64xf32>
    %81 = arith.addf %77, %80 : vector<16x64xf32>
    %82 = math.tanh %81 : vector<16x64xf32>
    %cst_31 = arith.constant 1.000000e+00 : f32
    %83 = vector.broadcast %cst_31 : f32 to vector<16x64xf32>
    %84 = arith.subf %83, %76 : vector<16x64xf32>
    %85 = arith.mulf %84, %82 : vector<16x64xf32>
    %86 = arith.mulf %76, %52 : vector<16x64xf32>
    %87 = arith.addf %85, %86 : vector<16x64xf32>
    %88 = arith.truncf %87 : vector<16x64xf32> to vector<16x64xbf16>
    %89 = tpu.concatenate %53, %88 in 1 : vector<16x64xbf16>, vector<16x64xbf16> -> vector<16x128xbf16>
    %c0_32 = arith.constant 0 : index
    %c0_33 = arith.constant 0 : index
    %90 = vector.load %arg13[%c0_32, %c0_33] : memref<16x1536xbf16, #tpu.memory_space<vmem>>, vector<16x128xbf16>
    tpu.vector_store %arg13[%c0_32, %c0_33], %89 {strides = array<i32>} : memref<16x1536xbf16, #tpu.memory_space<vmem>>, vector<16x128xbf16>,
    %cst_34 = arith.constant dense<0.000000e+00> : vector<16x192xf32>
    %91 = tpu.matmul %88, %13, %cst_34 {dimension_numbers = #tpu.dot_dimension_numbers<[1], [0], [0], [1], [0, 0, 1, 1], [], []>} : vector<16x64xbf16>, vector<64x192xbf16>, vector<16x192xf32> -> vector<16x192xf32>
    %c2 = arith.constant 2 : index
    %c0_35 = arith.constant 0 : index
    %c0_36 = arith.constant 0 : index
    %92 = vector.load %arg12[%c2, %c0_35, %c0_36] : memref<24x16x192xf32, #tpu.memory_space<vmem>>, vector<1x16x192xf32>
    %93 = vector.shape_cast %92 : vector<1x16x192xf32> to vector<16x192xf32>
    %94 = vector.extract_strided_slice %93 {offsets = [0, 0], sizes = [16, 64], strides = [1, 1]} : vector<16x192xf32> to vector<16x64xf32>
    %95 = vector.extract_strided_slice %91 {offsets = [0, 0], sizes = [16, 64], strides = [1, 1]} : vector<16x192xf32> to vector<16x64xf32>
    %96 = arith.addf %94, %95 : vector<16x64xf32>
    %cst_37 = arith.constant 5.000000e-01 : f32
    %97 = vector.broadcast %cst_37 : f32 to vector<16x64xf32>
    %98 = arith.mulf %97, %96 : vector<16x64xf32>
    %99 = math.tanh %98 : vector<16x64xf32>
    %cst_38 = arith.constant 1.000000e+00 : f32
    %100 = vector.broadcast %cst_38 : f32 to vector<16x64xf32>
    %101 = arith.addf %100, %99 : vector<16x64xf32>
    %cst_39 = arith.constant 5.000000e-01 : f32
    %102 = vector.broadcast %cst_39 : f32 to vector<16x64xf32>
    %103 = arith.mulf %102, %101 : vector<16x64xf32>
    %104 = vector.extract_strided_slice %93 {offsets = [0, 64], sizes = [16, 64], strides = [1, 1]} : vector<16x192xf32> to vector<16x64xf32>
    %105 = vector.extract_strided_slice %91 {offsets = [0, 64], sizes = [16, 64], strides = [1, 1]} : vector<16x192xf32> to vector<16x64xf32>
    %106 = arith.addf %104, %105 : vector<16x64xf32>
    %cst_40 = arith.constant 5.000000e-01 : f32
    %107 = vector.broadcast %cst_40 : f32 to vector<16x64xf32>
    %108 = arith.mulf %107, %106 : vector<16x64xf32>
    %109 = math.tanh %108 : vector<16x64xf32>
    %cst_41 = arith.constant 1.000000e+00 : f32
    %110 = vector.broadcast %cst_41 : f32 to vector<16x64xf32>
    %111 = arith.addf %110, %109 : vector<16x64xf32>
    %cst_42 = arith.constant 5.000000e-01 : f32
    %112 = vector.broadcast %cst_42 : f32 to vector<16x64xf32>
    %113 = arith.mulf %112, %111 : vector<16x64xf32>
    %114 = vector.extract_strided_slice %93 {offsets = [0, 128], sizes = [16, 64], strides = [1, 1]} : vector<16x192xf32> to vector<16x64xf32>
    %115 = vector.extract_strided_slice %91 {offsets = [0, 128], sizes = [16, 64], strides = [1, 1]} : vector<16x192xf32> to vector<16x64xf32>
    %116 = arith.addf %115, %16 : vector<16x64xf32>
    %117 = arith.mulf %103, %116 : vector<16x64xf32>
    %118 = arith.addf %114, %117 : vector<16x64xf32>
    %119 = math.tanh %118 : vector<16x64xf32>
    %cst_43 = arith.constant 1.000000e+00 : f32
    %120 = vector.broadcast %cst_43 : f32 to vector<16x64xf32>
    %121 = arith.subf %120, %113 : vector<16x64xf32>
    %122 = arith.mulf %121, %119 : vector<16x64xf32>
    %123 = arith.mulf %113, %87 : vector<16x64xf32>
    %124 = arith.addf %122, %123 : vector<16x64xf32>
    %125 = arith.truncf %124 : vector<16x64xf32> to vector<16x64xbf16>
    %cst_44 = arith.constant dense<0.000000e+00> : vector<16x192xf32>
    %126 = tpu.matmul %125, %13, %cst_44 {dimension_numbers = #tpu.dot_dimension_numbers<[1], [0], [0], [1], [0, 0, 1, 1], [], []>} : vector<16x64xbf16>, vector<64x192xbf16>, vector<16x192xf32> -> vector<16x192xf32>
    %c3 = arith.constant 3 : index
    %c0_45 = arith.constant 0 : index
    %c0_46 = arith.constant 0 : index
    %127 = vector.load %arg12[%c3, %c0_45, %c0_46] : memref<24x16x192xf32, #tpu.memory_space<vmem>>, vector<1x16x192xf32>
    %128 = vector.shape_cast %127 : vector<1x16x192xf32> to vector<16x192xf32>
    %129 = vector.extract_strided_slice %128 {offsets = [0, 0], sizes = [16, 64], strides = [1, 1]} : vector<16x192xf32> to vector<16x64xf32>
    %130 = vector.extract_strided_slice %126 {offsets = [0, 0], sizes = [16, 64], strides = [1, 1]} : vector<16x192xf32> to vector<16x64xf32>
    %131 = arith.addf %129, %130 : vector<16x64xf32>
    %cst_47 = arith.constant 5.000000e-01 : f32
    %132 = vector.broadcast %cst_47 : f32 to vector<16x64xf32>
    %133 = arith.mulf %132, %131 : vector<16x64xf32>
    %134 = math.tanh %133 : vector<16x64xf32>
    %cst_48 = arith.constant 1.000000e+00 : f32
    %135 = vector.broadcast %cst_48 : f32 to vector<16x64xf32>
    %136 = arith.addf %135, %134 : vector<16x64xf32>
    %cst_49 = arith.constant 5.000000e-01 : f32
    %137 = vector.broadcast %cst_49 : f32 to vector<16x64xf32>
    %138 = arith.mulf %137, %136 : vector<16x64xf32>
    %139 = vector.extract_strided_slice %128 {offsets = [0, 64], sizes = [16, 64], strides = [1, 1]} : vector<16x192xf32> to vector<16x64xf32>
    %140 = vector.extract_strided_slice %126 {offsets = [0, 64], sizes = [16, 64], strides = [1, 1]} : vector<16x192xf32> to vector<16x64xf32>
    %141 = arith.addf %139, %140 : vector<16x64xf32>
    %cst_50 = arith.constant 5.000000e-01 : f32
    %142 = vector.broadcast %cst_50 : f32 to vector<16x64xf32>
    %143 = arith.mulf %142, %141 : vector<16x64xf32>
    %144 = math.tanh %143 : vector<16x64xf32>
    %cst_51 = arith.constant 1.000000e+00 : f32
    %145 = vector.broadcast %cst_51 : f32 to vector<16x64xf32>
    %146 = arith.addf %145, %144 : vector<16x64xf32>
    %cst_52 = arith.constant 5.000000e-01 : f32
    %147 = vector.broadcast %cst_52 : f32 to vector<16x64xf32>
    %148 = arith.mulf %147, %146 : vector<16x64xf32>
    %149 = vector.extract_strided_slice %128 {offsets = [0, 128], sizes = [16, 64], strides = [1, 1]} : vector<16x192xf32> to vector<16x64xf32>
    %150 = vector.extract_strided_slice %126 {offsets = [0, 128], sizes = [16, 64], strides = [1, 1]} : vector<16x192xf32> to vector<16x64xf32>
    %151 = arith.addf %150, %16 : vector<16x64xf32>
    %152 = arith.mulf %138, %151 : vector<16x64xf32>
    %153 = arith.addf %149, %152 : vector<16x64xf32>
    %154 = math.tanh %153 : vector<16x64xf32>
    %cst_53 = arith.constant 1.000000e+00 : f32
    %155 = vector.broadcast %cst_53 : f32 to vector<16x64xf32>
    %156 = arith.subf %155, %148 : vector<16x64xf32>
    %157 = arith.mulf %156, %154 : vector<16x64xf32>
    %158 = arith.mulf %148, %124 : vector<16x64xf32>
    %159 = arith.addf %157, %158 : vector<16x64xf32>
    %160 = arith.truncf %159 : vector<16x64xf32> to vector<16x64xbf16>
    %161 = tpu.concatenate %125, %160 in 1 : vector<16x64xbf16>, vector<16x64xbf16> -> vector<16x128xbf16>
    %c0_54 = arith.constant 0 : index
    %c128 = arith.constant 128 : index
    %162 = vector.load %arg13[%c0_54, %c128] : memref<16x1536xbf16, #tpu.memory_space<vmem>>, vector<16x128xbf16>
    tpu.vector_store %arg13[%c0_54, %c128], %161 {strides = array<i32>} : memref<16x1536xbf16, #tpu.memory_space<vmem>>, vector<16x128xbf16>,
    %cst_55 = arith.constant dense<0.000000e+00> : vector<16x192xf32>
    %163 = tpu.matmul %160, %13, %cst_55 {dimension_numbers = #tpu.dot_dimension_numbers<[1], [0], [0], [1], [0, 0, 1, 1], [], []>} : vector<16x64xbf16>, vector<64x192xbf16>, vector<16x192xf32> -> vector<16x192xf32>
    %c4 = arith.constant 4 : index
    %c0_56 = arith.constant 0 : index
    %c0_57 = arith.constant 0 : index
    %164 = vector.load %arg12[%c4, %c0_56, %c0_57] : memref<24x16x192xf32, #tpu.memory_space<vmem>>, vector<1x16x192xf32>
    %165 = vector.shape_cast %164 : vector<1x16x192xf32> to vector<16x192xf32>
    %166 = vector.extract_strided_slice %165 {offsets = [0, 0], sizes = [16, 64], strides = [1, 1]} : vector<16x192xf32> to vector<16x64xf32>
    %167 = vector.extract_strided_slice %163 {offsets = [0, 0], sizes = [16, 64], strides = [1, 1]} : vector<16x192xf32> to vector<16x64xf32>
    %168 = arith.addf %166, %167 : vector<16x64xf32>
    %cst_58 = arith.constant 5.000000e-01 : f32
    %169 = vector.broadcast %cst_58 : f32 to vector<16x64xf32>
    %170 = arith.mulf %169, %168 : vector<16x64xf32>
    %171 = math.tanh %170 : vector<16x64xf32>
    %cst_59 = arith.constant 1.000000e+00 : f32
    %172 = vector.broadcast %cst_59 : f32 to vector<16x64xf32>
    %173 = arith.addf %172, %171 : vector<16x64xf32>
    %cst_60 = arith.constant 5.000000e-01 : f32
    %174 = vector.broadcast %cst_60 : f32 to vector<16x64xf32>
    %175 = arith.mulf %174, %173 : vector<16x64xf32>
    %176 = vector.extract_strided_slice %165 {offsets = [0, 64], sizes = [16, 64], strides = [1, 1]} : vector<16x192xf32> to vector<16x64xf32>
    %177 = vector.extract_strided_slice %163 {offsets = [0, 64], sizes = [16, 64], strides = [1, 1]} : vector<16x192xf32> to vector<16x64xf32>
    %178 = arith.addf %176, %177 : vector<16x64xf32>
    %cst_61 = arith.constant 5.000000e-01 : f32
    %179 = vector.broadcast %cst_61 : f32 to vector<16x64xf32>
    %180 = arith.mulf %179, %178 : vector<16x64xf32>
    %181 = math.tanh %180 : vector<16x64xf32>
    %cst_62 = arith.constant 1.000000e+00 : f32
    %182 = vector.broadcast %cst_62 : f32 to vector<16x64xf32>
    %183 = arith.addf %182, %181 : vector<16x64xf32>
    %cst_63 = arith.constant 5.000000e-01 : f32
    %184 = vector.broadcast %cst_63 : f32 to vector<16x64xf32>
    %185 = arith.mulf %184, %183 : vector<16x64xf32>
    %186 = vector.extract_strided_slice %165 {offsets = [0, 128], sizes = [16, 64], strides = [1, 1]} : vector<16x192xf32> to vector<16x64xf32>
    %187 = vector.extract_strided_slice %163 {offsets = [0, 128], sizes = [16, 64], strides = [1, 1]} : vector<16x192xf32> to vector<16x64xf32>
    %188 = arith.addf %187, %16 : vector<16x64xf32>
    %189 = arith.mulf %175, %188 : vector<16x64xf32>
    %190 = arith.addf %186, %189 : vector<16x64xf32>
    %191 = math.tanh %190 : vector<16x64xf32>
    %cst_64 = arith.constant 1.000000e+00 : f32
    %192 = vector.broadcast %cst_64 : f32 to vector<16x64xf32>
    %193 = arith.subf %192, %185 : vector<16x64xf32>
    %194 = arith.mulf %193, %191 : vector<16x64xf32>
    %195 = arith.mulf %185, %159 : vector<16x64xf32>
    %196 = arith.addf %194, %195 : vector<16x64xf32>
    %197 = arith.truncf %196 : vector<16x64xf32> to vector<16x64xbf16>
    %cst_65 = arith.constant dense<0.000000e+00> : vector<16x192xf32>
    %198 = tpu.matmul %197, %13, %cst_65 {dimension_numbers = #tpu.dot_dimension_numbers<[1], [0], [0], [1], [0, 0, 1, 1], [], []>} : vector<16x64xbf16>, vector<64x192xbf16>, vector<16x192xf32> -> vector<16x192xf32>
    %c5 = arith.constant 5 : index
    %c0_66 = arith.constant 0 : index
    %c0_67 = arith.constant 0 : index
    %199 = vector.load %arg12[%c5, %c0_66, %c0_67] : memref<24x16x192xf32, #tpu.memory_space<vmem>>, vector<1x16x192xf32>
    %200 = vector.shape_cast %199 : vector<1x16x192xf32> to vector<16x192xf32>
    %201 = vector.extract_strided_slice %200 {offsets = [0, 0], sizes = [16, 64], strides = [1, 1]} : vector<16x192xf32> to vector<16x64xf32>
    %202 = vector.extract_strided_slice %198 {offsets = [0, 0], sizes = [16, 64], strides = [1, 1]} : vector<16x192xf32> to vector<16x64xf32>
    %203 = arith.addf %201, %202 : vector<16x64xf32>
    %cst_68 = arith.constant 5.000000e-01 : f32
    %204 = vector.broadcast %cst_68 : f32 to vector<16x64xf32>
    %205 = arith.mulf %204, %203 : vector<16x64xf32>
    %206 = math.tanh %205 : vector<16x64xf32>
    %cst_69 = arith.constant 1.000000e+00 : f32
    %207 = vector.broadcast %cst_69 : f32 to vector<16x64xf32>
    %208 = arith.addf %207, %206 : vector<16x64xf32>
    %cst_70 = arith.constant 5.000000e-01 : f32
    %209 = vector.broadcast %cst_70 : f32 to vector<16x64xf32>
    %210 = arith.mulf %209, %208 : vector<16x64xf32>
    %211 = vector.extract_strided_slice %200 {offsets = [0, 64], sizes = [16, 64], strides = [1, 1]} : vector<16x192xf32> to vector<16x64xf32>
    %212 = vector.extract_strided_slice %198 {offsets = [0, 64], sizes = [16, 64], strides = [1, 1]} : vector<16x192xf32> to vector<16x64xf32>
    %213 = arith.addf %211, %212 : vector<16x64xf32>
    %cst_71 = arith.constant 5.000000e-01 : f32
    %214 = vector.broadcast %cst_71 : f32 to vector<16x64xf32>
    %215 = arith.mulf %214, %213 : vector<16x64xf32>
    %216 = math.tanh %215 : vector<16x64xf32>
    %cst_72 = arith.constant 1.000000e+00 : f32
    %217 = vector.broadcast %cst_72 : f32 to vector<16x64xf32>
    %218 = arith.addf %217, %216 : vector<16x64xf32>
    %cst_73 = arith.constant 5.000000e-01 : f32
    %219 = vector.broadcast %cst_73 : f32 to vector<16x64xf32>
    %220 = arith.mulf %219, %218 : vector<16x64xf32>
    %221 = vector.extract_strided_slice %200 {offsets = [0, 128], sizes = [16, 64], strides = [1, 1]} : vector<16x192xf32> to vector<16x64xf32>
    %222 = vector.extract_strided_slice %198 {offsets = [0, 128], sizes = [16, 64], strides = [1, 1]} : vector<16x192xf32> to vector<16x64xf32>
    %223 = arith.addf %222, %16 : vector<16x64xf32>
    %224 = arith.mulf %210, %223 : vector<16x64xf32>
    %225 = arith.addf %221, %224 : vector<16x64xf32>
    %226 = math.tanh %225 : vector<16x64xf32>
    %cst_74 = arith.constant 1.000000e+00 : f32
    %227 = vector.broadcast %cst_74 : f32 to vector<16x64xf32>
    %228 = arith.subf %227, %220 : vector<16x64xf32>
    %229 = arith.mulf %228, %226 : vector<16x64xf32>
    %230 = arith.mulf %220, %196 : vector<16x64xf32>
    %231 = arith.addf %229, %230 : vector<16x64xf32>
    %232 = arith.truncf %231 : vector<16x64xf32> to vector<16x64xbf16>
    %233 = tpu.concatenate %197, %232 in 1 : vector<16x64xbf16>, vector<16x64xbf16> -> vector<16x128xbf16>
    %c0_75 = arith.constant 0 : index
    %c256 = arith.constant 256 : index
    %234 = vector.load %arg13[%c0_75, %c256] : memref<16x1536xbf16, #tpu.memory_space<vmem>>, vector<16x128xbf16>
    tpu.vector_store %arg13[%c0_75, %c256], %233 {strides = array<i32>} : memref<16x1536xbf16, #tpu.memory_space<vmem>>, vector<16x128xbf16>,
    %cst_76 = arith.constant dense<0.000000e+00> : vector<16x192xf32>
    %235 = tpu.matmul %232, %13, %cst_76 {dimension_numbers = #tpu.dot_dimension_numbers<[1], [0], [0], [1], [0, 0, 1, 1], [], []>} : vector<16x64xbf16>, vector<64x192xbf16>, vector<16x192xf32> -> vector<16x192xf32>
    %c6 = arith.constant 6 : index
    %c0_77 = arith.constant 0 : index
    %c0_78 = arith.constant 0 : index
    %236 = vector.load %arg12[%c6, %c0_77, %c0_78] : memref<24x16x192xf32, #tpu.memory_space<vmem>>, vector<1x16x192xf32>
    %237 = vector.shape_cast %236 : vector<1x16x192xf32> to vector<16x192xf32>
    %238 = vector.extract_strided_slice %237 {offsets = [0, 0], sizes = [16, 64], strides = [1, 1]} : vector<16x192xf32> to vector<16x64xf32>
    %239 = vector.extract_strided_slice %235 {offsets = [0, 0], sizes = [16, 64], strides = [1, 1]} : vector<16x192xf32> to vector<16x64xf32>
    %240 = arith.addf %238, %239 : vector<16x64xf32>
    %cst_79 = arith.constant 5.000000e-01 : f32
    %241 = vector.broadcast %cst_79 : f32 to vector<16x64xf32>
    %242 = arith.mulf %241, %240 : vector<16x64xf32>
    %243 = math.tanh %242 : vector<16x64xf32>
    %cst_80 = arith.constant 1.000000e+00 : f32
    %244 = vector.broadcast %cst_80 : f32 to vector<16x64xf32>
    %245 = arith.addf %244, %243 : vector<16x64xf32>
    %cst_81 = arith.constant 5.000000e-01 : f32
    %246 = vector.broadcast %cst_81 : f32 to vector<16x64xf32>
    %247 = arith.mulf %246, %245 : vector<16x64xf32>
    %248 = vector.extract_strided_slice %237 {offsets = [0, 64], sizes = [16, 64], strides = [1, 1]} : vector<16x192xf32> to vector<16x64xf32>
    %249 = vector.extract_strided_slice %235 {offsets = [0, 64], sizes = [16, 64], strides = [1, 1]} : vector<16x192xf32> to vector<16x64xf32>
    %250 = arith.addf %248, %249 : vector<16x64xf32>
    %cst_82 = arith.constant 5.000000e-01 : f32
    %251 = vector.broadcast %cst_82 : f32 to vector<16x64xf32>
    %252 = arith.mulf %251, %250 : vector<16x64xf32>
    %253 = math.tanh %252 : vector<16x64xf32>
    %cst_83 = arith.constant 1.000000e+00 : f32
    %254 = vector.broadcast %cst_83 : f32 to vector<16x64xf32>
    %255 = arith.addf %254, %253 : vector<16x64xf32>
    %cst_84 = arith.constant 5.000000e-01 : f32
    %256 = vector.broadcast %cst_84 : f32 to vector<16x64xf32>
    %257 = arith.mulf %256, %255 : vector<16x64xf32>
    %258 = vector.extract_strided_slice %237 {offsets = [0, 128], sizes = [16, 64], strides = [1, 1]} : vector<16x192xf32> to vector<16x64xf32>
    %259 = vector.extract_strided_slice %235 {offsets = [0, 128], sizes = [16, 64], strides = [1, 1]} : vector<16x192xf32> to vector<16x64xf32>
    %260 = arith.addf %259, %16 : vector<16x64xf32>
    %261 = arith.mulf %247, %260 : vector<16x64xf32>
    %262 = arith.addf %258, %261 : vector<16x64xf32>
    %263 = math.tanh %262 : vector<16x64xf32>
    %cst_85 = arith.constant 1.000000e+00 : f32
    %264 = vector.broadcast %cst_85 : f32 to vector<16x64xf32>
    %265 = arith.subf %264, %257 : vector<16x64xf32>
    %266 = arith.mulf %265, %263 : vector<16x64xf32>
    %267 = arith.mulf %257, %231 : vector<16x64xf32>
    %268 = arith.addf %266, %267 : vector<16x64xf32>
    %269 = arith.truncf %268 : vector<16x64xf32> to vector<16x64xbf16>
    %cst_86 = arith.constant dense<0.000000e+00> : vector<16x192xf32>
    %270 = tpu.matmul %269, %13, %cst_86 {dimension_numbers = #tpu.dot_dimension_numbers<[1], [0], [0], [1], [0, 0, 1, 1], [], []>} : vector<16x64xbf16>, vector<64x192xbf16>, vector<16x192xf32> -> vector<16x192xf32>
    %c7 = arith.constant 7 : index
    %c0_87 = arith.constant 0 : index
    %c0_88 = arith.constant 0 : index
    %271 = vector.load %arg12[%c7, %c0_87, %c0_88] : memref<24x16x192xf32, #tpu.memory_space<vmem>>, vector<1x16x192xf32>
    %272 = vector.shape_cast %271 : vector<1x16x192xf32> to vector<16x192xf32>
    %273 = vector.extract_strided_slice %272 {offsets = [0, 0], sizes = [16, 64], strides = [1, 1]} : vector<16x192xf32> to vector<16x64xf32>
    %274 = vector.extract_strided_slice %270 {offsets = [0, 0], sizes = [16, 64], strides = [1, 1]} : vector<16x192xf32> to vector<16x64xf32>
    %275 = arith.addf %273, %274 : vector<16x64xf32>
    %cst_89 = arith.constant 5.000000e-01 : f32
    %276 = vector.broadcast %cst_89 : f32 to vector<16x64xf32>
    %277 = arith.mulf %276, %275 : vector<16x64xf32>
    %278 = math.tanh %277 : vector<16x64xf32>
    %cst_90 = arith.constant 1.000000e+00 : f32
    %279 = vector.broadcast %cst_90 : f32 to vector<16x64xf32>
    %280 = arith.addf %279, %278 : vector<16x64xf32>
    %cst_91 = arith.constant 5.000000e-01 : f32
    %281 = vector.broadcast %cst_91 : f32 to vector<16x64xf32>
    %282 = arith.mulf %281, %280 : vector<16x64xf32>
    %283 = vector.extract_strided_slice %272 {offsets = [0, 64], sizes = [16, 64], strides = [1, 1]} : vector<16x192xf32> to vector<16x64xf32>
    %284 = vector.extract_strided_slice %270 {offsets = [0, 64], sizes = [16, 64], strides = [1, 1]} : vector<16x192xf32> to vector<16x64xf32>
    %285 = arith.addf %283, %284 : vector<16x64xf32>
    %cst_92 = arith.constant 5.000000e-01 : f32
    %286 = vector.broadcast %cst_92 : f32 to vector<16x64xf32>
    %287 = arith.mulf %286, %285 : vector<16x64xf32>
    %288 = math.tanh %287 : vector<16x64xf32>
    %cst_93 = arith.constant 1.000000e+00 : f32
    %289 = vector.broadcast %cst_93 : f32 to vector<16x64xf32>
    %290 = arith.addf %289, %288 : vector<16x64xf32>
    %cst_94 = arith.constant 5.000000e-01 : f32
    %291 = vector.broadcast %cst_94 : f32 to vector<16x64xf32>
    %292 = arith.mulf %291, %290 : vector<16x64xf32>
    %293 = vector.extract_strided_slice %272 {offsets = [0, 128], sizes = [16, 64], strides = [1, 1]} : vector<16x192xf32> to vector<16x64xf32>
    %294 = vector.extract_strided_slice %270 {offsets = [0, 128], sizes = [16, 64], strides = [1, 1]} : vector<16x192xf32> to vector<16x64xf32>
    %295 = arith.addf %294, %16 : vector<16x64xf32>
    %296 = arith.mulf %282, %295 : vector<16x64xf32>
    %297 = arith.addf %293, %296 : vector<16x64xf32>
    %298 = math.tanh %297 : vector<16x64xf32>
    %cst_95 = arith.constant 1.000000e+00 : f32
    %299 = vector.broadcast %cst_95 : f32 to vector<16x64xf32>
    %300 = arith.subf %299, %292 : vector<16x64xf32>
    %301 = arith.mulf %300, %298 : vector<16x64xf32>
    %302 = arith.mulf %292, %268 : vector<16x64xf32>
    %303 = arith.addf %301, %302 : vector<16x64xf32>
    %304 = arith.truncf %303 : vector<16x64xf32> to vector<16x64xbf16>
    %305 = tpu.concatenate %269, %304 in 1 : vector<16x64xbf16>, vector<16x64xbf16> -> vector<16x128xbf16>
    %c0_96 = arith.constant 0 : index
    %c384 = arith.constant 384 : index
    %306 = vector.load %arg13[%c0_96, %c384] : memref<16x1536xbf16, #tpu.memory_space<vmem>>, vector<16x128xbf16>
    tpu.vector_store %arg13[%c0_96, %c384], %305 {strides = array<i32>} : memref<16x1536xbf16, #tpu.memory_space<vmem>>, vector<16x128xbf16>,
    %cst_97 = arith.constant dense<0.000000e+00> : vector<16x192xf32>
    %307 = tpu.matmul %304, %13, %cst_97 {dimension_numbers = #tpu.dot_dimension_numbers<[1], [0], [0], [1], [0, 0, 1, 1], [], []>} : vector<16x64xbf16>, vector<64x192xbf16>, vector<16x192xf32> -> vector<16x192xf32>
    %c8 = arith.constant 8 : index
    %c0_98 = arith.constant 0 : index
    %c0_99 = arith.constant 0 : index
    %308 = vector.load %arg12[%c8, %c0_98, %c0_99] : memref<24x16x192xf32, #tpu.memory_space<vmem>>, vector<1x16x192xf32>
    %309 = vector.shape_cast %308 : vector<1x16x192xf32> to vector<16x192xf32>
    %310 = vector.extract_strided_slice %309 {offsets = [0, 0], sizes = [16, 64], strides = [1, 1]} : vector<16x192xf32> to vector<16x64xf32>
    %311 = vector.extract_strided_slice %307 {offsets = [0, 0], sizes = [16, 64], strides = [1, 1]} : vector<16x192xf32> to vector<16x64xf32>
    %312 = arith.addf %310, %311 : vector<16x64xf32>
    %cst_100 = arith.constant 5.000000e-01 : f32
    %313 = vector.broadcast %cst_100 : f32 to vector<16x64xf32>
    %314 = arith.mulf %313, %312 : vector<16x64xf32>
    %315 = math.tanh %314 : vector<16x64xf32>
    %cst_101 = arith.constant 1.000000e+00 : f32
    %316 = vector.broadcast %cst_101 : f32 to vector<16x64xf32>
    %317 = arith.addf %316, %315 : vector<16x64xf32>
    %cst_102 = arith.constant 5.000000e-01 : f32
    %318 = vector.broadcast %cst_102 : f32 to vector<16x64xf32>
    %319 = arith.mulf %318, %317 : vector<16x64xf32>
    %320 = vector.extract_strided_slice %309 {offsets = [0, 64], sizes = [16, 64], strides = [1, 1]} : vector<16x192xf32> to vector<16x64xf32>
    %321 = vector.extract_strided_slice %307 {offsets = [0, 64], sizes = [16, 64], strides = [1, 1]} : vector<16x192xf32> to vector<16x64xf32>
    %322 = arith.addf %320, %321 : vector<16x64xf32>
    %cst_103 = arith.constant 5.000000e-01 : f32
    %323 = vector.broadcast %cst_103 : f32 to vector<16x64xf32>
    %324 = arith.mulf %323, %322 : vector<16x64xf32>
    %325 = math.tanh %324 : vector<16x64xf32>
    %cst_104 = arith.constant 1.000000e+00 : f32
    %326 = vector.broadcast %cst_104 : f32 to vector<16x64xf32>
    %327 = arith.addf %326, %325 : vector<16x64xf32>
    %cst_105 = arith.constant 5.000000e-01 : f32
    %328 = vector.broadcast %cst_105 : f32 to vector<16x64xf32>
    %329 = arith.mulf %328, %327 : vector<16x64xf32>
    %330 = vector.extract_strided_slice %309 {offsets = [0, 128], sizes = [16, 64], strides = [1, 1]} : vector<16x192xf32> to vector<16x64xf32>
    %331 = vector.extract_strided_slice %307 {offsets = [0, 128], sizes = [16, 64], strides = [1, 1]} : vector<16x192xf32> to vector<16x64xf32>
    %332 = arith.addf %331, %16 : vector<16x64xf32>
    %333 = arith.mulf %319, %332 : vector<16x64xf32>
    %334 = arith.addf %330, %333 : vector<16x64xf32>
    %335 = math.tanh %334 : vector<16x64xf32>
    %cst_106 = arith.constant 1.000000e+00 : f32
    %336 = vector.broadcast %cst_106 : f32 to vector<16x64xf32>
    %337 = arith.subf %336, %329 : vector<16x64xf32>
    %338 = arith.mulf %337, %335 : vector<16x64xf32>
    %339 = arith.mulf %329, %303 : vector<16x64xf32>
    %340 = arith.addf %338, %339 : vector<16x64xf32>
    %341 = arith.truncf %340 : vector<16x64xf32> to vector<16x64xbf16>
    %cst_107 = arith.constant dense<0.000000e+00> : vector<16x192xf32>
    %342 = tpu.matmul %341, %13, %cst_107 {dimension_numbers = #tpu.dot_dimension_numbers<[1], [0], [0], [1], [0, 0, 1, 1], [], []>} : vector<16x64xbf16>, vector<64x192xbf16>, vector<16x192xf32> -> vector<16x192xf32>
    %c9 = arith.constant 9 : index
    %c0_108 = arith.constant 0 : index
    %c0_109 = arith.constant 0 : index
    %343 = vector.load %arg12[%c9, %c0_108, %c0_109] : memref<24x16x192xf32, #tpu.memory_space<vmem>>, vector<1x16x192xf32>
    %344 = vector.shape_cast %343 : vector<1x16x192xf32> to vector<16x192xf32>
    %345 = vector.extract_strided_slice %344 {offsets = [0, 0], sizes = [16, 64], strides = [1, 1]} : vector<16x192xf32> to vector<16x64xf32>
    %346 = vector.extract_strided_slice %342 {offsets = [0, 0], sizes = [16, 64], strides = [1, 1]} : vector<16x192xf32> to vector<16x64xf32>
    %347 = arith.addf %345, %346 : vector<16x64xf32>
    %cst_110 = arith.constant 5.000000e-01 : f32
    %348 = vector.broadcast %cst_110 : f32 to vector<16x64xf32>
    %349 = arith.mulf %348, %347 : vector<16x64xf32>
    %350 = math.tanh %349 : vector<16x64xf32>
    %cst_111 = arith.constant 1.000000e+00 : f32
    %351 = vector.broadcast %cst_111 : f32 to vector<16x64xf32>
    %352 = arith.addf %351, %350 : vector<16x64xf32>
    %cst_112 = arith.constant 5.000000e-01 : f32
    %353 = vector.broadcast %cst_112 : f32 to vector<16x64xf32>
    %354 = arith.mulf %353, %352 : vector<16x64xf32>
    %355 = vector.extract_strided_slice %344 {offsets = [0, 64], sizes = [16, 64], strides = [1, 1]} : vector<16x192xf32> to vector<16x64xf32>
    %356 = vector.extract_strided_slice %342 {offsets = [0, 64], sizes = [16, 64], strides = [1, 1]} : vector<16x192xf32> to vector<16x64xf32>
    %357 = arith.addf %355, %356 : vector<16x64xf32>
    %cst_113 = arith.constant 5.000000e-01 : f32
    %358 = vector.broadcast %cst_113 : f32 to vector<16x64xf32>
    %359 = arith.mulf %358, %357 : vector<16x64xf32>
    %360 = math.tanh %359 : vector<16x64xf32>
    %cst_114 = arith.constant 1.000000e+00 : f32
    %361 = vector.broadcast %cst_114 : f32 to vector<16x64xf32>
    %362 = arith.addf %361, %360 : vector<16x64xf32>
    %cst_115 = arith.constant 5.000000e-01 : f32
    %363 = vector.broadcast %cst_115 : f32 to vector<16x64xf32>
    %364 = arith.mulf %363, %362 : vector<16x64xf32>
    %365 = vector.extract_strided_slice %344 {offsets = [0, 128], sizes = [16, 64], strides = [1, 1]} : vector<16x192xf32> to vector<16x64xf32>
    %366 = vector.extract_strided_slice %342 {offsets = [0, 128], sizes = [16, 64], strides = [1, 1]} : vector<16x192xf32> to vector<16x64xf32>
    %367 = arith.addf %366, %16 : vector<16x64xf32>
    %368 = arith.mulf %354, %367 : vector<16x64xf32>
    %369 = arith.addf %365, %368 : vector<16x64xf32>
    %370 = math.tanh %369 : vector<16x64xf32>
    %cst_116 = arith.constant 1.000000e+00 : f32
    %371 = vector.broadcast %cst_116 : f32 to vector<16x64xf32>
    %372 = arith.subf %371, %364 : vector<16x64xf32>
    %373 = arith.mulf %372, %370 : vector<16x64xf32>
    %374 = arith.mulf %364, %340 : vector<16x64xf32>
    %375 = arith.addf %373, %374 : vector<16x64xf32>
    %376 = arith.truncf %375 : vector<16x64xf32> to vector<16x64xbf16>
    %377 = tpu.concatenate %341, %376 in 1 : vector<16x64xbf16>, vector<16x64xbf16> -> vector<16x128xbf16>
    %c0_117 = arith.constant 0 : index
    %c512 = arith.constant 512 : index
    %378 = vector.load %arg13[%c0_117, %c512] : memref<16x1536xbf16, #tpu.memory_space<vmem>>, vector<16x128xbf16>
    tpu.vector_store %arg13[%c0_117, %c512], %377 {strides = array<i32>} : memref<16x1536xbf16, #tpu.memory_space<vmem>>, vector<16x128xbf16>,
    %cst_118 = arith.constant dense<0.000000e+00> : vector<16x192xf32>
    %379 = tpu.matmul %376, %13, %cst_118 {dimension_numbers = #tpu.dot_dimension_numbers<[1], [0], [0], [1], [0, 0, 1, 1], [], []>} : vector<16x64xbf16>, vector<64x192xbf16>, vector<16x192xf32> -> vector<16x192xf32>
    %c10 = arith.constant 10 : index
    %c0_119 = arith.constant 0 : index
    %c0_120 = arith.constant 0 : index
    %380 = vector.load %arg12[%c10, %c0_119, %c0_120] : memref<24x16x192xf32, #tpu.memory_space<vmem>>, vector<1x16x192xf32>
    %381 = vector.shape_cast %380 : vector<1x16x192xf32> to vector<16x192xf32>
    %382 = vector.extract_strided_slice %381 {offsets = [0, 0], sizes = [16, 64], strides = [1, 1]} : vector<16x192xf32> to vector<16x64xf32>
    %383 = vector.extract_strided_slice %379 {offsets = [0, 0], sizes = [16, 64], strides = [1, 1]} : vector<16x192xf32> to vector<16x64xf32>
    %384 = arith.addf %382, %383 : vector<16x64xf32>
    %cst_121 = arith.constant 5.000000e-01 : f32
    %385 = vector.broadcast %cst_121 : f32 to vector<16x64xf32>
    %386 = arith.mulf %385, %384 : vector<16x64xf32>
    %387 = math.tanh %386 : vector<16x64xf32>
    %cst_122 = arith.constant 1.000000e+00 : f32
    %388 = vector.broadcast %cst_122 : f32 to vector<16x64xf32>
    %389 = arith.addf %388, %387 : vector<16x64xf32>
    %cst_123 = arith.constant 5.000000e-01 : f32
    %390 = vector.broadcast %cst_123 : f32 to vector<16x64xf32>
    %391 = arith.mulf %390, %389 : vector<16x64xf32>
    %392 = vector.extract_strided_slice %381 {offsets = [0, 64], sizes = [16, 64], strides = [1, 1]} : vector<16x192xf32> to vector<16x64xf32>
    %393 = vector.extract_strided_slice %379 {offsets = [0, 64], sizes = [16, 64], strides = [1, 1]} : vector<16x192xf32> to vector<16x64xf32>
    %394 = arith.addf %392, %393 : vector<16x64xf32>
    %cst_124 = arith.constant 5.000000e-01 : f32
    %395 = vector.broadcast %cst_124 : f32 to vector<16x64xf32>
    %396 = arith.mulf %395, %394 : vector<16x64xf32>
    %397 = math.tanh %396 : vector<16x64xf32>
    %cst_125 = arith.constant 1.000000e+00 : f32
    %398 = vector.broadcast %cst_125 : f32 to vector<16x64xf32>
    %399 = arith.addf %398, %397 : vector<16x64xf32>
    %cst_126 = arith.constant 5.000000e-01 : f32
    %400 = vector.broadcast %cst_126 : f32 to vector<16x64xf32>
    %401 = arith.mulf %400, %399 : vector<16x64xf32>
    %402 = vector.extract_strided_slice %381 {offsets = [0, 128], sizes = [16, 64], strides = [1, 1]} : vector<16x192xf32> to vector<16x64xf32>
    %403 = vector.extract_strided_slice %379 {offsets = [0, 128], sizes = [16, 64], strides = [1, 1]} : vector<16x192xf32> to vector<16x64xf32>
    %404 = arith.addf %403, %16 : vector<16x64xf32>
    %405 = arith.mulf %391, %404 : vector<16x64xf32>
    %406 = arith.addf %402, %405 : vector<16x64xf32>
    %407 = math.tanh %406 : vector<16x64xf32>
    %cst_127 = arith.constant 1.000000e+00 : f32
    %408 = vector.broadcast %cst_127 : f32 to vector<16x64xf32>
    %409 = arith.subf %408, %401 : vector<16x64xf32>
    %410 = arith.mulf %409, %407 : vector<16x64xf32>
    %411 = arith.mulf %401, %375 : vector<16x64xf32>
    %412 = arith.addf %410, %411 : vector<16x64xf32>
    %413 = arith.truncf %412 : vector<16x64xf32> to vector<16x64xbf16>
    %cst_128 = arith.constant dense<0.000000e+00> : vector<16x192xf32>
    %414 = tpu.matmul %413, %13, %cst_128 {dimension_numbers = #tpu.dot_dimension_numbers<[1], [0], [0], [1], [0, 0, 1, 1], [], []>} : vector<16x64xbf16>, vector<64x192xbf16>, vector<16x192xf32> -> vector<16x192xf32>
    %c11 = arith.constant 11 : index
    %c0_129 = arith.constant 0 : index
    %c0_130 = arith.constant 0 : index
    %415 = vector.load %arg12[%c11, %c0_129, %c0_130] : memref<24x16x192xf32, #tpu.memory_space<vmem>>, vector<1x16x192xf32>
    %416 = vector.shape_cast %415 : vector<1x16x192xf32> to vector<16x192xf32>
    %417 = vector.extract_strided_slice %416 {offsets = [0, 0], sizes = [16, 64], strides = [1, 1]} : vector<16x192xf32> to vector<16x64xf32>
    %418 = vector.extract_strided_slice %414 {offsets = [0, 0], sizes = [16, 64], strides = [1, 1]} : vector<16x192xf32> to vector<16x64xf32>
    %419 = arith.addf %417, %418 : vector<16x64xf32>
    %cst_131 = arith.constant 5.000000e-01 : f32
    %420 = vector.broadcast %cst_131 : f32 to vector<16x64xf32>
    %421 = arith.mulf %420, %419 : vector<16x64xf32>
    %422 = math.tanh %421 : vector<16x64xf32>
    %cst_132 = arith.constant 1.000000e+00 : f32
    %423 = vector.broadcast %cst_132 : f32 to vector<16x64xf32>
    %424 = arith.addf %423, %422 : vector<16x64xf32>
    %cst_133 = arith.constant 5.000000e-01 : f32
    %425 = vector.broadcast %cst_133 : f32 to vector<16x64xf32>
    %426 = arith.mulf %425, %424 : vector<16x64xf32>
    %427 = vector.extract_strided_slice %416 {offsets = [0, 64], sizes = [16, 64], strides = [1, 1]} : vector<16x192xf32> to vector<16x64xf32>
    %428 = vector.extract_strided_slice %414 {offsets = [0, 64], sizes = [16, 64], strides = [1, 1]} : vector<16x192xf32> to vector<16x64xf32>
    %429 = arith.addf %427, %428 : vector<16x64xf32>
    %cst_134 = arith.constant 5.000000e-01 : f32
    %430 = vector.broadcast %cst_134 : f32 to vector<16x64xf32>
    %431 = arith.mulf %430, %429 : vector<16x64xf32>
    %432 = math.tanh %431 : vector<16x64xf32>
    %cst_135 = arith.constant 1.000000e+00 : f32
    %433 = vector.broadcast %cst_135 : f32 to vector<16x64xf32>
    %434 = arith.addf %433, %432 : vector<16x64xf32>
    %cst_136 = arith.constant 5.000000e-01 : f32
    %435 = vector.broadcast %cst_136 : f32 to vector<16x64xf32>
    %436 = arith.mulf %435, %434 : vector<16x64xf32>
    %437 = vector.extract_strided_slice %416 {offsets = [0, 128], sizes = [16, 64], strides = [1, 1]} : vector<16x192xf32> to vector<16x64xf32>
    %438 = vector.extract_strided_slice %414 {offsets = [0, 128], sizes = [16, 64], strides = [1, 1]} : vector<16x192xf32> to vector<16x64xf32>
    %439 = arith.addf %438, %16 : vector<16x64xf32>
    %440 = arith.mulf %426, %439 : vector<16x64xf32>
    %441 = arith.addf %437, %440 : vector<16x64xf32>
    %442 = math.tanh %441 : vector<16x64xf32>
    %cst_137 = arith.constant 1.000000e+00 : f32
    %443 = vector.broadcast %cst_137 : f32 to vector<16x64xf32>
    %444 = arith.subf %443, %436 : vector<16x64xf32>
    %445 = arith.mulf %444, %442 : vector<16x64xf32>
    %446 = arith.mulf %436, %412 : vector<16x64xf32>
    %447 = arith.addf %445, %446 : vector<16x64xf32>
    %448 = arith.truncf %447 : vector<16x64xf32> to vector<16x64xbf16>
    %449 = tpu.concatenate %413, %448 in 1 : vector<16x64xbf16>, vector<16x64xbf16> -> vector<16x128xbf16>
    %c0_138 = arith.constant 0 : index
    %c640 = arith.constant 640 : index
    %450 = vector.load %arg13[%c0_138, %c640] : memref<16x1536xbf16, #tpu.memory_space<vmem>>, vector<16x128xbf16>
    tpu.vector_store %arg13[%c0_138, %c640], %449 {strides = array<i32>} : memref<16x1536xbf16, #tpu.memory_space<vmem>>, vector<16x128xbf16>,
    %cst_139 = arith.constant dense<0.000000e+00> : vector<16x192xf32>
    %451 = tpu.matmul %448, %13, %cst_139 {dimension_numbers = #tpu.dot_dimension_numbers<[1], [0], [0], [1], [0, 0, 1, 1], [], []>} : vector<16x64xbf16>, vector<64x192xbf16>, vector<16x192xf32> -> vector<16x192xf32>
    %c12 = arith.constant 12 : index
    %c0_140 = arith.constant 0 : index
    %c0_141 = arith.constant 0 : index
    %452 = vector.load %arg12[%c12, %c0_140, %c0_141] : memref<24x16x192xf32, #tpu.memory_space<vmem>>, vector<1x16x192xf32>
    %453 = vector.shape_cast %452 : vector<1x16x192xf32> to vector<16x192xf32>
    %454 = vector.extract_strided_slice %453 {offsets = [0, 0], sizes = [16, 64], strides = [1, 1]} : vector<16x192xf32> to vector<16x64xf32>
    %455 = vector.extract_strided_slice %451 {offsets = [0, 0], sizes = [16, 64], strides = [1, 1]} : vector<16x192xf32> to vector<16x64xf32>
    %456 = arith.addf %454, %455 : vector<16x64xf32>
    %cst_142 = arith.constant 5.000000e-01 : f32
    %457 = vector.broadcast %cst_142 : f32 to vector<16x64xf32>
    %458 = arith.mulf %457, %456 : vector<16x64xf32>
    %459 = math.tanh %458 : vector<16x64xf32>
    %cst_143 = arith.constant 1.000000e+00 : f32
    %460 = vector.broadcast %cst_143 : f32 to vector<16x64xf32>
    %461 = arith.addf %460, %459 : vector<16x64xf32>
    %cst_144 = arith.constant 5.000000e-01 : f32
    %462 = vector.broadcast %cst_144 : f32 to vector<16x64xf32>
    %463 = arith.mulf %462, %461 : vector<16x64xf32>
    %464 = vector.extract_strided_slice %453 {offsets = [0, 64], sizes = [16, 64], strides = [1, 1]} : vector<16x192xf32> to vector<16x64xf32>
    %465 = vector.extract_strided_slice %451 {offsets = [0, 64], sizes = [16, 64], strides = [1, 1]} : vector<16x192xf32> to vector<16x64xf32>
    %466 = arith.addf %464, %465 : vector<16x64xf32>
    %cst_145 = arith.constant 5.000000e-01 : f32
    %467 = vector.broadcast %cst_145 : f32 to vector<16x64xf32>
    %468 = arith.mulf %467, %466 : vector<16x64xf32>
    %469 = math.tanh %468 : vector<16x64xf32>
    %cst_146 = arith.constant 1.000000e+00 : f32
    %470 = vector.broadcast %cst_146 : f32 to vector<16x64xf32>
    %471 = arith.addf %470, %469 : vector<16x64xf32>
    %cst_147 = arith.constant 5.000000e-01 : f32
    %472 = vector.broadcast %cst_147 : f32 to vector<16x64xf32>
    %473 = arith.mulf %472, %471 : vector<16x64xf32>
    %474 = vector.extract_strided_slice %453 {offsets = [0, 128], sizes = [16, 64], strides = [1, 1]} : vector<16x192xf32> to vector<16x64xf32>
    %475 = vector.extract_strided_slice %451 {offsets = [0, 128], sizes = [16, 64], strides = [1, 1]} : vector<16x192xf32> to vector<16x64xf32>
    %476 = arith.addf %475, %16 : vector<16x64xf32>
    %477 = arith.mulf %463, %476 : vector<16x64xf32>
    %478 = arith.addf %474, %477 : vector<16x64xf32>
    %479 = math.tanh %478 : vector<16x64xf32>
    %cst_148 = arith.constant 1.000000e+00 : f32
    %480 = vector.broadcast %cst_148 : f32 to vector<16x64xf32>
    %481 = arith.subf %480, %473 : vector<16x64xf32>
    %482 = arith.mulf %481, %479 : vector<16x64xf32>
    %483 = arith.mulf %473, %447 : vector<16x64xf32>
    %484 = arith.addf %482, %483 : vector<16x64xf32>
    %485 = arith.truncf %484 : vector<16x64xf32> to vector<16x64xbf16>
    %cst_149 = arith.constant dense<0.000000e+00> : vector<16x192xf32>
    %486 = tpu.matmul %485, %13, %cst_149 {dimension_numbers = #tpu.dot_dimension_numbers<[1], [0], [0], [1], [0, 0, 1, 1], [], []>} : vector<16x64xbf16>, vector<64x192xbf16>, vector<16x192xf32> -> vector<16x192xf32>
    %c13 = arith.constant 13 : index
    %c0_150 = arith.constant 0 : index
    %c0_151 = arith.constant 0 : index
    %487 = vector.load %arg12[%c13, %c0_150, %c0_151] : memref<24x16x192xf32, #tpu.memory_space<vmem>>, vector<1x16x192xf32>
    %488 = vector.shape_cast %487 : vector<1x16x192xf32> to vector<16x192xf32>
    %489 = vector.extract_strided_slice %488 {offsets = [0, 0], sizes = [16, 64], strides = [1, 1]} : vector<16x192xf32> to vector<16x64xf32>
    %490 = vector.extract_strided_slice %486 {offsets = [0, 0], sizes = [16, 64], strides = [1, 1]} : vector<16x192xf32> to vector<16x64xf32>
    %491 = arith.addf %489, %490 : vector<16x64xf32>
    %cst_152 = arith.constant 5.000000e-01 : f32
    %492 = vector.broadcast %cst_152 : f32 to vector<16x64xf32>
    %493 = arith.mulf %492, %491 : vector<16x64xf32>
    %494 = math.tanh %493 : vector<16x64xf32>
    %cst_153 = arith.constant 1.000000e+00 : f32
    %495 = vector.broadcast %cst_153 : f32 to vector<16x64xf32>
    %496 = arith.addf %495, %494 : vector<16x64xf32>
    %cst_154 = arith.constant 5.000000e-01 : f32
    %497 = vector.broadcast %cst_154 : f32 to vector<16x64xf32>
    %498 = arith.mulf %497, %496 : vector<16x64xf32>
    %499 = vector.extract_strided_slice %488 {offsets = [0, 64], sizes = [16, 64], strides = [1, 1]} : vector<16x192xf32> to vector<16x64xf32>
    %500 = vector.extract_strided_slice %486 {offsets = [0, 64], sizes = [16, 64], strides = [1, 1]} : vector<16x192xf32> to vector<16x64xf32>
    %501 = arith.addf %499, %500 : vector<16x64xf32>
    %cst_155 = arith.constant 5.000000e-01 : f32
    %502 = vector.broadcast %cst_155 : f32 to vector<16x64xf32>
    %503 = arith.mulf %502, %501 : vector<16x64xf32>
    %504 = math.tanh %503 : vector<16x64xf32>
    %cst_156 = arith.constant 1.000000e+00 : f32
    %505 = vector.broadcast %cst_156 : f32 to vector<16x64xf32>
    %506 = arith.addf %505, %504 : vector<16x64xf32>
    %cst_157 = arith.constant 5.000000e-01 : f32
    %507 = vector.broadcast %cst_157 : f32 to vector<16x64xf32>
    %508 = arith.mulf %507, %506 : vector<16x64xf32>
    %509 = vector.extract_strided_slice %488 {offsets = [0, 128], sizes = [16, 64], strides = [1, 1]} : vector<16x192xf32> to vector<16x64xf32>
    %510 = vector.extract_strided_slice %486 {offsets = [0, 128], sizes = [16, 64], strides = [1, 1]} : vector<16x192xf32> to vector<16x64xf32>
    %511 = arith.addf %510, %16 : vector<16x64xf32>
    %512 = arith.mulf %498, %511 : vector<16x64xf32>
    %513 = arith.addf %509, %512 : vector<16x64xf32>
    %514 = math.tanh %513 : vector<16x64xf32>
    %cst_158 = arith.constant 1.000000e+00 : f32
    %515 = vector.broadcast %cst_158 : f32 to vector<16x64xf32>
    %516 = arith.subf %515, %508 : vector<16x64xf32>
    %517 = arith.mulf %516, %514 : vector<16x64xf32>
    %518 = arith.mulf %508, %484 : vector<16x64xf32>
    %519 = arith.addf %517, %518 : vector<16x64xf32>
    %520 = arith.truncf %519 : vector<16x64xf32> to vector<16x64xbf16>
    %521 = tpu.concatenate %485, %520 in 1 : vector<16x64xbf16>, vector<16x64xbf16> -> vector<16x128xbf16>
    %c0_159 = arith.constant 0 : index
    %c768 = arith.constant 768 : index
    %522 = vector.load %arg13[%c0_159, %c768] : memref<16x1536xbf16, #tpu.memory_space<vmem>>, vector<16x128xbf16>
    tpu.vector_store %arg13[%c0_159, %c768], %521 {strides = array<i32>} : memref<16x1536xbf16, #tpu.memory_space<vmem>>, vector<16x128xbf16>,
    %cst_160 = arith.constant dense<0.000000e+00> : vector<16x192xf32>
    %523 = tpu.matmul %520, %13, %cst_160 {dimension_numbers = #tpu.dot_dimension_numbers<[1], [0], [0], [1], [0, 0, 1, 1], [], []>} : vector<16x64xbf16>, vector<64x192xbf16>, vector<16x192xf32> -> vector<16x192xf32>
    %c14 = arith.constant 14 : index
    %c0_161 = arith.constant 0 : index
    %c0_162 = arith.constant 0 : index
    %524 = vector.load %arg12[%c14, %c0_161, %c0_162] : memref<24x16x192xf32, #tpu.memory_space<vmem>>, vector<1x16x192xf32>
    %525 = vector.shape_cast %524 : vector<1x16x192xf32> to vector<16x192xf32>
    %526 = vector.extract_strided_slice %525 {offsets = [0, 0], sizes = [16, 64], strides = [1, 1]} : vector<16x192xf32> to vector<16x64xf32>
    %527 = vector.extract_strided_slice %523 {offsets = [0, 0], sizes = [16, 64], strides = [1, 1]} : vector<16x192xf32> to vector<16x64xf32>
    %528 = arith.addf %526, %527 : vector<16x64xf32>
    %cst_163 = arith.constant 5.000000e-01 : f32
    %529 = vector.broadcast %cst_163 : f32 to vector<16x64xf32>
    %530 = arith.mulf %529, %528 : vector<16x64xf32>
    %531 = math.tanh %530 : vector<16x64xf32>
    %cst_164 = arith.constant 1.000000e+00 : f32
    %532 = vector.broadcast %cst_164 : f32 to vector<16x64xf32>
    %533 = arith.addf %532, %531 : vector<16x64xf32>
    %cst_165 = arith.constant 5.000000e-01 : f32
    %534 = vector.broadcast %cst_165 : f32 to vector<16x64xf32>
    %535 = arith.mulf %534, %533 : vector<16x64xf32>
    %536 = vector.extract_strided_slice %525 {offsets = [0, 64], sizes = [16, 64], strides = [1, 1]} : vector<16x192xf32> to vector<16x64xf32>
    %537 = vector.extract_strided_slice %523 {offsets = [0, 64], sizes = [16, 64], strides = [1, 1]} : vector<16x192xf32> to vector<16x64xf32>
    %538 = arith.addf %536, %537 : vector<16x64xf32>
    %cst_166 = arith.constant 5.000000e-01 : f32
    %539 = vector.broadcast %cst_166 : f32 to vector<16x64xf32>
    %540 = arith.mulf %539, %538 : vector<16x64xf32>
    %541 = math.tanh %540 : vector<16x64xf32>
    %cst_167 = arith.constant 1.000000e+00 : f32
    %542 = vector.broadcast %cst_167 : f32 to vector<16x64xf32>
    %543 = arith.addf %542, %541 : vector<16x64xf32>
    %cst_168 = arith.constant 5.000000e-01 : f32
    %544 = vector.broadcast %cst_168 : f32 to vector<16x64xf32>
    %545 = arith.mulf %544, %543 : vector<16x64xf32>
    %546 = vector.extract_strided_slice %525 {offsets = [0, 128], sizes = [16, 64], strides = [1, 1]} : vector<16x192xf32> to vector<16x64xf32>
    %547 = vector.extract_strided_slice %523 {offsets = [0, 128], sizes = [16, 64], strides = [1, 1]} : vector<16x192xf32> to vector<16x64xf32>
    %548 = arith.addf %547, %16 : vector<16x64xf32>
    %549 = arith.mulf %535, %548 : vector<16x64xf32>
    %550 = arith.addf %546, %549 : vector<16x64xf32>
    %551 = math.tanh %550 : vector<16x64xf32>
    %cst_169 = arith.constant 1.000000e+00 : f32
    %552 = vector.broadcast %cst_169 : f32 to vector<16x64xf32>
    %553 = arith.subf %552, %545 : vector<16x64xf32>
    %554 = arith.mulf %553, %551 : vector<16x64xf32>
    %555 = arith.mulf %545, %519 : vector<16x64xf32>
    %556 = arith.addf %554, %555 : vector<16x64xf32>
    %557 = arith.truncf %556 : vector<16x64xf32> to vector<16x64xbf16>
    %cst_170 = arith.constant dense<0.000000e+00> : vector<16x192xf32>
    %558 = tpu.matmul %557, %13, %cst_170 {dimension_numbers = #tpu.dot_dimension_numbers<[1], [0], [0], [1], [0, 0, 1, 1], [], []>} : vector<16x64xbf16>, vector<64x192xbf16>, vector<16x192xf32> -> vector<16x192xf32>
    %c15 = arith.constant 15 : index
    %c0_171 = arith.constant 0 : index
    %c0_172 = arith.constant 0 : index
    %559 = vector.load %arg12[%c15, %c0_171, %c0_172] : memref<24x16x192xf32, #tpu.memory_space<vmem>>, vector<1x16x192xf32>
    %560 = vector.shape_cast %559 : vector<1x16x192xf32> to vector<16x192xf32>
    %561 = vector.extract_strided_slice %560 {offsets = [0, 0], sizes = [16, 64], strides = [1, 1]} : vector<16x192xf32> to vector<16x64xf32>
    %562 = vector.extract_strided_slice %558 {offsets = [0, 0], sizes = [16, 64], strides = [1, 1]} : vector<16x192xf32> to vector<16x64xf32>
    %563 = arith.addf %561, %562 : vector<16x64xf32>
    %cst_173 = arith.constant 5.000000e-01 : f32
    %564 = vector.broadcast %cst_173 : f32 to vector<16x64xf32>
    %565 = arith.mulf %564, %563 : vector<16x64xf32>
    %566 = math.tanh %565 : vector<16x64xf32>
    %cst_174 = arith.constant 1.000000e+00 : f32
    %567 = vector.broadcast %cst_174 : f32 to vector<16x64xf32>
    %568 = arith.addf %567, %566 : vector<16x64xf32>
    %cst_175 = arith.constant 5.000000e-01 : f32
    %569 = vector.broadcast %cst_175 : f32 to vector<16x64xf32>
    %570 = arith.mulf %569, %568 : vector<16x64xf32>
    %571 = vector.extract_strided_slice %560 {offsets = [0, 64], sizes = [16, 64], strides = [1, 1]} : vector<16x192xf32> to vector<16x64xf32>
    %572 = vector.extract_strided_slice %558 {offsets = [0, 64], sizes = [16, 64], strides = [1, 1]} : vector<16x192xf32> to vector<16x64xf32>
    %573 = arith.addf %571, %572 : vector<16x64xf32>
    %cst_176 = arith.constant 5.000000e-01 : f32
    %574 = vector.broadcast %cst_176 : f32 to vector<16x64xf32>
    %575 = arith.mulf %574, %573 : vector<16x64xf32>
    %576 = math.tanh %575 : vector<16x64xf32>
    %cst_177 = arith.constant 1.000000e+00 : f32
    %577 = vector.broadcast %cst_177 : f32 to vector<16x64xf32>
    %578 = arith.addf %577, %576 : vector<16x64xf32>
    %cst_178 = arith.constant 5.000000e-01 : f32
    %579 = vector.broadcast %cst_178 : f32 to vector<16x64xf32>
    %580 = arith.mulf %579, %578 : vector<16x64xf32>
    %581 = vector.extract_strided_slice %560 {offsets = [0, 128], sizes = [16, 64], strides = [1, 1]} : vector<16x192xf32> to vector<16x64xf32>
    %582 = vector.extract_strided_slice %558 {offsets = [0, 128], sizes = [16, 64], strides = [1, 1]} : vector<16x192xf32> to vector<16x64xf32>
    %583 = arith.addf %582, %16 : vector<16x64xf32>
    %584 = arith.mulf %570, %583 : vector<16x64xf32>
    %585 = arith.addf %581, %584 : vector<16x64xf32>
    %586 = math.tanh %585 : vector<16x64xf32>
    %cst_179 = arith.constant 1.000000e+00 : f32
    %587 = vector.broadcast %cst_179 : f32 to vector<16x64xf32>
    %588 = arith.subf %587, %580 : vector<16x64xf32>
    %589 = arith.mulf %588, %586 : vector<16x64xf32>
    %590 = arith.mulf %580, %556 : vector<16x64xf32>
    %591 = arith.addf %589, %590 : vector<16x64xf32>
    %592 = arith.truncf %591 : vector<16x64xf32> to vector<16x64xbf16>
    %593 = tpu.concatenate %557, %592 in 1 : vector<16x64xbf16>, vector<16x64xbf16> -> vector<16x128xbf16>
    %c0_180 = arith.constant 0 : index
    %c896 = arith.constant 896 : index
    %594 = vector.load %arg13[%c0_180, %c896] : memref<16x1536xbf16, #tpu.memory_space<vmem>>, vector<16x128xbf16>
    tpu.vector_store %arg13[%c0_180, %c896], %593 {strides = array<i32>} : memref<16x1536xbf16, #tpu.memory_space<vmem>>, vector<16x128xbf16>,
    %cst_181 = arith.constant dense<0.000000e+00> : vector<16x192xf32>
    %595 = tpu.matmul %592, %13, %cst_181 {dimension_numbers = #tpu.dot_dimension_numbers<[1], [0], [0], [1], [0, 0, 1, 1], [], []>} : vector<16x64xbf16>, vector<64x192xbf16>, vector<16x192xf32> -> vector<16x192xf32>
    %c16 = arith.constant 16 : index
    %c0_182 = arith.constant 0 : index
    %c0_183 = arith.constant 0 : index
    %596 = vector.load %arg12[%c16, %c0_182, %c0_183] : memref<24x16x192xf32, #tpu.memory_space<vmem>>, vector<1x16x192xf32>
    %597 = vector.shape_cast %596 : vector<1x16x192xf32> to vector<16x192xf32>
    %598 = vector.extract_strided_slice %597 {offsets = [0, 0], sizes = [16, 64], strides = [1, 1]} : vector<16x192xf32> to vector<16x64xf32>
    %599 = vector.extract_strided_slice %595 {offsets = [0, 0], sizes = [16, 64], strides = [1, 1]} : vector<16x192xf32> to vector<16x64xf32>
    %600 = arith.addf %598, %599 : vector<16x64xf32>
    %cst_184 = arith.constant 5.000000e-01 : f32
    %601 = vector.broadcast %cst_184 : f32 to vector<16x64xf32>
    %602 = arith.mulf %601, %600 : vector<16x64xf32>
    %603 = math.tanh %602 : vector<16x64xf32>
    %cst_185 = arith.constant 1.000000e+00 : f32
    %604 = vector.broadcast %cst_185 : f32 to vector<16x64xf32>
    %605 = arith.addf %604, %603 : vector<16x64xf32>
    %cst_186 = arith.constant 5.000000e-01 : f32
    %606 = vector.broadcast %cst_186 : f32 to vector<16x64xf32>
    %607 = arith.mulf %606, %605 : vector<16x64xf32>
    %608 = vector.extract_strided_slice %597 {offsets = [0, 64], sizes = [16, 64], strides = [1, 1]} : vector<16x192xf32> to vector<16x64xf32>
    %609 = vector.extract_strided_slice %595 {offsets = [0, 64], sizes = [16, 64], strides = [1, 1]} : vector<16x192xf32> to vector<16x64xf32>
    %610 = arith.addf %608, %609 : vector<16x64xf32>
    %cst_187 = arith.constant 5.000000e-01 : f32
    %611 = vector.broadcast %cst_187 : f32 to vector<16x64xf32>
    %612 = arith.mulf %611, %610 : vector<16x64xf32>
    %613 = math.tanh %612 : vector<16x64xf32>
    %cst_188 = arith.constant 1.000000e+00 : f32
    %614 = vector.broadcast %cst_188 : f32 to vector<16x64xf32>
    %615 = arith.addf %614, %613 : vector<16x64xf32>
    %cst_189 = arith.constant 5.000000e-01 : f32
    %616 = vector.broadcast %cst_189 : f32 to vector<16x64xf32>
    %617 = arith.mulf %616, %615 : vector<16x64xf32>
    %618 = vector.extract_strided_slice %597 {offsets = [0, 128], sizes = [16, 64], strides = [1, 1]} : vector<16x192xf32> to vector<16x64xf32>
    %619 = vector.extract_strided_slice %595 {offsets = [0, 128], sizes = [16, 64], strides = [1, 1]} : vector<16x192xf32> to vector<16x64xf32>
    %620 = arith.addf %619, %16 : vector<16x64xf32>
    %621 = arith.mulf %607, %620 : vector<16x64xf32>
    %622 = arith.addf %618, %621 : vector<16x64xf32>
    %623 = math.tanh %622 : vector<16x64xf32>
    %cst_190 = arith.constant 1.000000e+00 : f32
    %624 = vector.broadcast %cst_190 : f32 to vector<16x64xf32>
    %625 = arith.subf %624, %617 : vector<16x64xf32>
    %626 = arith.mulf %625, %623 : vector<16x64xf32>
    %627 = arith.mulf %617, %591 : vector<16x64xf32>
    %628 = arith.addf %626, %627 : vector<16x64xf32>
    %629 = arith.truncf %628 : vector<16x64xf32> to vector<16x64xbf16>
    %cst_191 = arith.constant dense<0.000000e+00> : vector<16x192xf32>
    %630 = tpu.matmul %629, %13, %cst_191 {dimension_numbers = #tpu.dot_dimension_numbers<[1], [0], [0], [1], [0, 0, 1, 1], [], []>} : vector<16x64xbf16>, vector<64x192xbf16>, vector<16x192xf32> -> vector<16x192xf32>
    %c17 = arith.constant 17 : index
    %c0_192 = arith.constant 0 : index
    %c0_193 = arith.constant 0 : index
    %631 = vector.load %arg12[%c17, %c0_192, %c0_193] : memref<24x16x192xf32, #tpu.memory_space<vmem>>, vector<1x16x192xf32>
    %632 = vector.shape_cast %631 : vector<1x16x192xf32> to vector<16x192xf32>
    %633 = vector.extract_strided_slice %632 {offsets = [0, 0], sizes = [16, 64], strides = [1, 1]} : vector<16x192xf32> to vector<16x64xf32>
    %634 = vector.extract_strided_slice %630 {offsets = [0, 0], sizes = [16, 64], strides = [1, 1]} : vector<16x192xf32> to vector<16x64xf32>
    %635 = arith.addf %633, %634 : vector<16x64xf32>
    %cst_194 = arith.constant 5.000000e-01 : f32
    %636 = vector.broadcast %cst_194 : f32 to vector<16x64xf32>
    %637 = arith.mulf %636, %635 : vector<16x64xf32>
    %638 = math.tanh %637 : vector<16x64xf32>
    %cst_195 = arith.constant 1.000000e+00 : f32
    %639 = vector.broadcast %cst_195 : f32 to vector<16x64xf32>
    %640 = arith.addf %639, %638 : vector<16x64xf32>
    %cst_196 = arith.constant 5.000000e-01 : f32
    %641 = vector.broadcast %cst_196 : f32 to vector<16x64xf32>
    %642 = arith.mulf %641, %640 : vector<16x64xf32>
    %643 = vector.extract_strided_slice %632 {offsets = [0, 64], sizes = [16, 64], strides = [1, 1]} : vector<16x192xf32> to vector<16x64xf32>
    %644 = vector.extract_strided_slice %630 {offsets = [0, 64], sizes = [16, 64], strides = [1, 1]} : vector<16x192xf32> to vector<16x64xf32>
    %645 = arith.addf %643, %644 : vector<16x64xf32>
    %cst_197 = arith.constant 5.000000e-01 : f32
    %646 = vector.broadcast %cst_197 : f32 to vector<16x64xf32>
    %647 = arith.mulf %646, %645 : vector<16x64xf32>
    %648 = math.tanh %647 : vector<16x64xf32>
    %cst_198 = arith.constant 1.000000e+00 : f32
    %649 = vector.broadcast %cst_198 : f32 to vector<16x64xf32>
    %650 = arith.addf %649, %648 : vector<16x64xf32>
    %cst_199 = arith.constant 5.000000e-01 : f32
    %651 = vector.broadcast %cst_199 : f32 to vector<16x64xf32>
    %652 = arith.mulf %651, %650 : vector<16x64xf32>
    %653 = vector.extract_strided_slice %632 {offsets = [0, 128], sizes = [16, 64], strides = [1, 1]} : vector<16x192xf32> to vector<16x64xf32>
    %654 = vector.extract_strided_slice %630 {offsets = [0, 128], sizes = [16, 64], strides = [1, 1]} : vector<16x192xf32> to vector<16x64xf32>
    %655 = arith.addf %654, %16 : vector<16x64xf32>
    %656 = arith.mulf %642, %655 : vector<16x64xf32>
    %657 = arith.addf %653, %656 : vector<16x64xf32>
    %658 = math.tanh %657 : vector<16x64xf32>
    %cst_200 = arith.constant 1.000000e+00 : f32
    %659 = vector.broadcast %cst_200 : f32 to vector<16x64xf32>
    %660 = arith.subf %659, %652 : vector<16x64xf32>
    %661 = arith.mulf %660, %658 : vector<16x64xf32>
    %662 = arith.mulf %652, %628 : vector<16x64xf32>
    %663 = arith.addf %661, %662 : vector<16x64xf32>
    %664 = arith.truncf %663 : vector<16x64xf32> to vector<16x64xbf16>
    %665 = tpu.concatenate %629, %664 in 1 : vector<16x64xbf16>, vector<16x64xbf16> -> vector<16x128xbf16>
    %c0_201 = arith.constant 0 : index
    %c1024 = arith.constant 1024 : index
    %666 = vector.load %arg13[%c0_201, %c1024] : memref<16x1536xbf16, #tpu.memory_space<vmem>>, vector<16x128xbf16>
    tpu.vector_store %arg13[%c0_201, %c1024], %665 {strides = array<i32>} : memref<16x1536xbf16, #tpu.memory_space<vmem>>, vector<16x128xbf16>,
    %cst_202 = arith.constant dense<0.000000e+00> : vector<16x192xf32>
    %667 = tpu.matmul %664, %13, %cst_202 {dimension_numbers = #tpu.dot_dimension_numbers<[1], [0], [0], [1], [0, 0, 1, 1], [], []>} : vector<16x64xbf16>, vector<64x192xbf16>, vector<16x192xf32> -> vector<16x192xf32>
    %c18 = arith.constant 18 : index
    %c0_203 = arith.constant 0 : index
    %c0_204 = arith.constant 0 : index
    %668 = vector.load %arg12[%c18, %c0_203, %c0_204] : memref<24x16x192xf32, #tpu.memory_space<vmem>>, vector<1x16x192xf32>
    %669 = vector.shape_cast %668 : vector<1x16x192xf32> to vector<16x192xf32>
    %670 = vector.extract_strided_slice %669 {offsets = [0, 0], sizes = [16, 64], strides = [1, 1]} : vector<16x192xf32> to vector<16x64xf32>
    %671 = vector.extract_strided_slice %667 {offsets = [0, 0], sizes = [16, 64], strides = [1, 1]} : vector<16x192xf32> to vector<16x64xf32>
    %672 = arith.addf %670, %671 : vector<16x64xf32>
    %cst_205 = arith.constant 5.000000e-01 : f32
    %673 = vector.broadcast %cst_205 : f32 to vector<16x64xf32>
    %674 = arith.mulf %673, %672 : vector<16x64xf32>
    %675 = math.tanh %674 : vector<16x64xf32>
    %cst_206 = arith.constant 1.000000e+00 : f32
    %676 = vector.broadcast %cst_206 : f32 to vector<16x64xf32>
    %677 = arith.addf %676, %675 : vector<16x64xf32>
    %cst_207 = arith.constant 5.000000e-01 : f32
    %678 = vector.broadcast %cst_207 : f32 to vector<16x64xf32>
    %679 = arith.mulf %678, %677 : vector<16x64xf32>
    %680 = vector.extract_strided_slice %669 {offsets = [0, 64], sizes = [16, 64], strides = [1, 1]} : vector<16x192xf32> to vector<16x64xf32>
    %681 = vector.extract_strided_slice %667 {offsets = [0, 64], sizes = [16, 64], strides = [1, 1]} : vector<16x192xf32> to vector<16x64xf32>
    %682 = arith.addf %680, %681 : vector<16x64xf32>
    %cst_208 = arith.constant 5.000000e-01 : f32
    %683 = vector.broadcast %cst_208 : f32 to vector<16x64xf32>
    %684 = arith.mulf %683, %682 : vector<16x64xf32>
    %685 = math.tanh %684 : vector<16x64xf32>
    %cst_209 = arith.constant 1.000000e+00 : f32
    %686 = vector.broadcast %cst_209 : f32 to vector<16x64xf32>
    %687 = arith.addf %686, %685 : vector<16x64xf32>
    %cst_210 = arith.constant 5.000000e-01 : f32
    %688 = vector.broadcast %cst_210 : f32 to vector<16x64xf32>
    %689 = arith.mulf %688, %687 : vector<16x64xf32>
    %690 = vector.extract_strided_slice %669 {offsets = [0, 128], sizes = [16, 64], strides = [1, 1]} : vector<16x192xf32> to vector<16x64xf32>
    %691 = vector.extract_strided_slice %667 {offsets = [0, 128], sizes = [16, 64], strides = [1, 1]} : vector<16x192xf32> to vector<16x64xf32>
    %692 = arith.addf %691, %16 : vector<16x64xf32>
    %693 = arith.mulf %679, %692 : vector<16x64xf32>
    %694 = arith.addf %690, %693 : vector<16x64xf32>
    %695 = math.tanh %694 : vector<16x64xf32>
    %cst_211 = arith.constant 1.000000e+00 : f32
    %696 = vector.broadcast %cst_211 : f32 to vector<16x64xf32>
    %697 = arith.subf %696, %689 : vector<16x64xf32>
    %698 = arith.mulf %697, %695 : vector<16x64xf32>
    %699 = arith.mulf %689, %663 : vector<16x64xf32>
    %700 = arith.addf %698, %699 : vector<16x64xf32>
    %701 = arith.truncf %700 : vector<16x64xf32> to vector<16x64xbf16>
    %cst_212 = arith.constant dense<0.000000e+00> : vector<16x192xf32>
    %702 = tpu.matmul %701, %13, %cst_212 {dimension_numbers = #tpu.dot_dimension_numbers<[1], [0], [0], [1], [0, 0, 1, 1], [], []>} : vector<16x64xbf16>, vector<64x192xbf16>, vector<16x192xf32> -> vector<16x192xf32>
    %c19 = arith.constant 19 : index
    %c0_213 = arith.constant 0 : index
    %c0_214 = arith.constant 0 : index
    %703 = vector.load %arg12[%c19, %c0_213, %c0_214] : memref<24x16x192xf32, #tpu.memory_space<vmem>>, vector<1x16x192xf32>
    %704 = vector.shape_cast %703 : vector<1x16x192xf32> to vector<16x192xf32>
    %705 = vector.extract_strided_slice %704 {offsets = [0, 0], sizes = [16, 64], strides = [1, 1]} : vector<16x192xf32> to vector<16x64xf32>
    %706 = vector.extract_strided_slice %702 {offsets = [0, 0], sizes = [16, 64], strides = [1, 1]} : vector<16x192xf32> to vector<16x64xf32>
    %707 = arith.addf %705, %706 : vector<16x64xf32>
    %cst_215 = arith.constant 5.000000e-01 : f32
    %708 = vector.broadcast %cst_215 : f32 to vector<16x64xf32>
    %709 = arith.mulf %708, %707 : vector<16x64xf32>
    %710 = math.tanh %709 : vector<16x64xf32>
    %cst_216 = arith.constant 1.000000e+00 : f32
    %711 = vector.broadcast %cst_216 : f32 to vector<16x64xf32>
    %712 = arith.addf %711, %710 : vector<16x64xf32>
    %cst_217 = arith.constant 5.000000e-01 : f32
    %713 = vector.broadcast %cst_217 : f32 to vector<16x64xf32>
    %714 = arith.mulf %713, %712 : vector<16x64xf32>
    %715 = vector.extract_strided_slice %704 {offsets = [0, 64], sizes = [16, 64], strides = [1, 1]} : vector<16x192xf32> to vector<16x64xf32>
    %716 = vector.extract_strided_slice %702 {offsets = [0, 64], sizes = [16, 64], strides = [1, 1]} : vector<16x192xf32> to vector<16x64xf32>
    %717 = arith.addf %715, %716 : vector<16x64xf32>
    %cst_218 = arith.constant 5.000000e-01 : f32
    %718 = vector.broadcast %cst_218 : f32 to vector<16x64xf32>
    %719 = arith.mulf %718, %717 : vector<16x64xf32>
    %720 = math.tanh %719 : vector<16x64xf32>
    %cst_219 = arith.constant 1.000000e+00 : f32
    %721 = vector.broadcast %cst_219 : f32 to vector<16x64xf32>
    %722 = arith.addf %721, %720 : vector<16x64xf32>
    %cst_220 = arith.constant 5.000000e-01 : f32
    %723 = vector.broadcast %cst_220 : f32 to vector<16x64xf32>
    %724 = arith.mulf %723, %722 : vector<16x64xf32>
    %725 = vector.extract_strided_slice %704 {offsets = [0, 128], sizes = [16, 64], strides = [1, 1]} : vector<16x192xf32> to vector<16x64xf32>
    %726 = vector.extract_strided_slice %702 {offsets = [0, 128], sizes = [16, 64], strides = [1, 1]} : vector<16x192xf32> to vector<16x64xf32>
    %727 = arith.addf %726, %16 : vector<16x64xf32>
    %728 = arith.mulf %714, %727 : vector<16x64xf32>
    %729 = arith.addf %725, %728 : vector<16x64xf32>
    %730 = math.tanh %729 : vector<16x64xf32>
    %cst_221 = arith.constant 1.000000e+00 : f32
    %731 = vector.broadcast %cst_221 : f32 to vector<16x64xf32>
    %732 = arith.subf %731, %724 : vector<16x64xf32>
    %733 = arith.mulf %732, %730 : vector<16x64xf32>
    %734 = arith.mulf %724, %700 : vector<16x64xf32>
    %735 = arith.addf %733, %734 : vector<16x64xf32>
    %736 = arith.truncf %735 : vector<16x64xf32> to vector<16x64xbf16>
    %737 = tpu.concatenate %701, %736 in 1 : vector<16x64xbf16>, vector<16x64xbf16> -> vector<16x128xbf16>
    %c0_222 = arith.constant 0 : index
    %c1152 = arith.constant 1152 : index
    %738 = vector.load %arg13[%c0_222, %c1152] : memref<16x1536xbf16, #tpu.memory_space<vmem>>, vector<16x128xbf16>
    tpu.vector_store %arg13[%c0_222, %c1152], %737 {strides = array<i32>} : memref<16x1536xbf16, #tpu.memory_space<vmem>>, vector<16x128xbf16>,
    %cst_223 = arith.constant dense<0.000000e+00> : vector<16x192xf32>
    %739 = tpu.matmul %736, %13, %cst_223 {dimension_numbers = #tpu.dot_dimension_numbers<[1], [0], [0], [1], [0, 0, 1, 1], [], []>} : vector<16x64xbf16>, vector<64x192xbf16>, vector<16x192xf32> -> vector<16x192xf32>
    %c20 = arith.constant 20 : index
    %c0_224 = arith.constant 0 : index
    %c0_225 = arith.constant 0 : index
    %740 = vector.load %arg12[%c20, %c0_224, %c0_225] : memref<24x16x192xf32, #tpu.memory_space<vmem>>, vector<1x16x192xf32>
    %741 = vector.shape_cast %740 : vector<1x16x192xf32> to vector<16x192xf32>
    %742 = vector.extract_strided_slice %741 {offsets = [0, 0], sizes = [16, 64], strides = [1, 1]} : vector<16x192xf32> to vector<16x64xf32>
    %743 = vector.extract_strided_slice %739 {offsets = [0, 0], sizes = [16, 64], strides = [1, 1]} : vector<16x192xf32> to vector<16x64xf32>
    %744 = arith.addf %742, %743 : vector<16x64xf32>
    %cst_226 = arith.constant 5.000000e-01 : f32
    %745 = vector.broadcast %cst_226 : f32 to vector<16x64xf32>
    %746 = arith.mulf %745, %744 : vector<16x64xf32>
    %747 = math.tanh %746 : vector<16x64xf32>
    %cst_227 = arith.constant 1.000000e+00 : f32
    %748 = vector.broadcast %cst_227 : f32 to vector<16x64xf32>
    %749 = arith.addf %748, %747 : vector<16x64xf32>
    %cst_228 = arith.constant 5.000000e-01 : f32
    %750 = vector.broadcast %cst_228 : f32 to vector<16x64xf32>
    %751 = arith.mulf %750, %749 : vector<16x64xf32>
    %752 = vector.extract_strided_slice %741 {offsets = [0, 64], sizes = [16, 64], strides = [1, 1]} : vector<16x192xf32> to vector<16x64xf32>
    %753 = vector.extract_strided_slice %739 {offsets = [0, 64], sizes = [16, 64], strides = [1, 1]} : vector<16x192xf32> to vector<16x64xf32>
    %754 = arith.addf %752, %753 : vector<16x64xf32>
    %cst_229 = arith.constant 5.000000e-01 : f32
    %755 = vector.broadcast %cst_229 : f32 to vector<16x64xf32>
    %756 = arith.mulf %755, %754 : vector<16x64xf32>
    %757 = math.tanh %756 : vector<16x64xf32>
    %cst_230 = arith.constant 1.000000e+00 : f32
    %758 = vector.broadcast %cst_230 : f32 to vector<16x64xf32>
    %759 = arith.addf %758, %757 : vector<16x64xf32>
    %cst_231 = arith.constant 5.000000e-01 : f32
    %760 = vector.broadcast %cst_231 : f32 to vector<16x64xf32>
    %761 = arith.mulf %760, %759 : vector<16x64xf32>
    %762 = vector.extract_strided_slice %741 {offsets = [0, 128], sizes = [16, 64], strides = [1, 1]} : vector<16x192xf32> to vector<16x64xf32>
    %763 = vector.extract_strided_slice %739 {offsets = [0, 128], sizes = [16, 64], strides = [1, 1]} : vector<16x192xf32> to vector<16x64xf32>
    %764 = arith.addf %763, %16 : vector<16x64xf32>
    %765 = arith.mulf %751, %764 : vector<16x64xf32>
    %766 = arith.addf %762, %765 : vector<16x64xf32>
    %767 = math.tanh %766 : vector<16x64xf32>
    %cst_232 = arith.constant 1.000000e+00 : f32
    %768 = vector.broadcast %cst_232 : f32 to vector<16x64xf32>
    %769 = arith.subf %768, %761 : vector<16x64xf32>
    %770 = arith.mulf %769, %767 : vector<16x64xf32>
    %771 = arith.mulf %761, %735 : vector<16x64xf32>
    %772 = arith.addf %770, %771 : vector<16x64xf32>
    %773 = arith.truncf %772 : vector<16x64xf32> to vector<16x64xbf16>
    %cst_233 = arith.constant dense<0.000000e+00> : vector<16x192xf32>
    %774 = tpu.matmul %773, %13, %cst_233 {dimension_numbers = #tpu.dot_dimension_numbers<[1], [0], [0], [1], [0, 0, 1, 1], [], []>} : vector<16x64xbf16>, vector<64x192xbf16>, vector<16x192xf32> -> vector<16x192xf32>
    %c21 = arith.constant 21 : index
    %c0_234 = arith.constant 0 : index
    %c0_235 = arith.constant 0 : index
    %775 = vector.load %arg12[%c21, %c0_234, %c0_235] : memref<24x16x192xf32, #tpu.memory_space<vmem>>, vector<1x16x192xf32>
    %776 = vector.shape_cast %775 : vector<1x16x192xf32> to vector<16x192xf32>
    %777 = vector.extract_strided_slice %776 {offsets = [0, 0], sizes = [16, 64], strides = [1, 1]} : vector<16x192xf32> to vector<16x64xf32>
    %778 = vector.extract_strided_slice %774 {offsets = [0, 0], sizes = [16, 64], strides = [1, 1]} : vector<16x192xf32> to vector<16x64xf32>
    %779 = arith.addf %777, %778 : vector<16x64xf32>
    %cst_236 = arith.constant 5.000000e-01 : f32
    %780 = vector.broadcast %cst_236 : f32 to vector<16x64xf32>
    %781 = arith.mulf %780, %779 : vector<16x64xf32>
    %782 = math.tanh %781 : vector<16x64xf32>
    %cst_237 = arith.constant 1.000000e+00 : f32
    %783 = vector.broadcast %cst_237 : f32 to vector<16x64xf32>
    %784 = arith.addf %783, %782 : vector<16x64xf32>
    %cst_238 = arith.constant 5.000000e-01 : f32
    %785 = vector.broadcast %cst_238 : f32 to vector<16x64xf32>
    %786 = arith.mulf %785, %784 : vector<16x64xf32>
    %787 = vector.extract_strided_slice %776 {offsets = [0, 64], sizes = [16, 64], strides = [1, 1]} : vector<16x192xf32> to vector<16x64xf32>
    %788 = vector.extract_strided_slice %774 {offsets = [0, 64], sizes = [16, 64], strides = [1, 1]} : vector<16x192xf32> to vector<16x64xf32>
    %789 = arith.addf %787, %788 : vector<16x64xf32>
    %cst_239 = arith.constant 5.000000e-01 : f32
    %790 = vector.broadcast %cst_239 : f32 to vector<16x64xf32>
    %791 = arith.mulf %790, %789 : vector<16x64xf32>
    %792 = math.tanh %791 : vector<16x64xf32>
    %cst_240 = arith.constant 1.000000e+00 : f32
    %793 = vector.broadcast %cst_240 : f32 to vector<16x64xf32>
    %794 = arith.addf %793, %792 : vector<16x64xf32>
    %cst_241 = arith.constant 5.000000e-01 : f32
    %795 = vector.broadcast %cst_241 : f32 to vector<16x64xf32>
    %796 = arith.mulf %795, %794 : vector<16x64xf32>
    %797 = vector.extract_strided_slice %776 {offsets = [0, 128], sizes = [16, 64], strides = [1, 1]} : vector<16x192xf32> to vector<16x64xf32>
    %798 = vector.extract_strided_slice %774 {offsets = [0, 128], sizes = [16, 64], strides = [1, 1]} : vector<16x192xf32> to vector<16x64xf32>
    %799 = arith.addf %798, %16 : vector<16x64xf32>
    %800 = arith.mulf %786, %799 : vector<16x64xf32>
    %801 = arith.addf %797, %800 : vector<16x64xf32>
    %802 = math.tanh %801 : vector<16x64xf32>
    %cst_242 = arith.constant 1.000000e+00 : f32
    %803 = vector.broadcast %cst_242 : f32 to vector<16x64xf32>
    %804 = arith.subf %803, %796 : vector<16x64xf32>
    %805 = arith.mulf %804, %802 : vector<16x64xf32>
    %806 = arith.mulf %796, %772 : vector<16x64xf32>
    %807 = arith.addf %805, %806 : vector<16x64xf32>
    %808 = arith.truncf %807 : vector<16x64xf32> to vector<16x64xbf16>
    %809 = tpu.concatenate %773, %808 in 1 : vector<16x64xbf16>, vector<16x64xbf16> -> vector<16x128xbf16>
    %c0_243 = arith.constant 0 : index
    %c1280 = arith.constant 1280 : index
    %810 = vector.load %arg13[%c0_243, %c1280] : memref<16x1536xbf16, #tpu.memory_space<vmem>>, vector<16x128xbf16>
    tpu.vector_store %arg13[%c0_243, %c1280], %809 {strides = array<i32>} : memref<16x1536xbf16, #tpu.memory_space<vmem>>, vector<16x128xbf16>,
    %cst_244 = arith.constant dense<0.000000e+00> : vector<16x192xf32>
    %811 = tpu.matmul %808, %13, %cst_244 {dimension_numbers = #tpu.dot_dimension_numbers<[1], [0], [0], [1], [0, 0, 1, 1], [], []>} : vector<16x64xbf16>, vector<64x192xbf16>, vector<16x192xf32> -> vector<16x192xf32>
    %c22 = arith.constant 22 : index
    %c0_245 = arith.constant 0 : index
    %c0_246 = arith.constant 0 : index
    %812 = vector.load %arg12[%c22, %c0_245, %c0_246] : memref<24x16x192xf32, #tpu.memory_space<vmem>>, vector<1x16x192xf32>
    %813 = vector.shape_cast %812 : vector<1x16x192xf32> to vector<16x192xf32>
    %814 = vector.extract_strided_slice %813 {offsets = [0, 0], sizes = [16, 64], strides = [1, 1]} : vector<16x192xf32> to vector<16x64xf32>
    %815 = vector.extract_strided_slice %811 {offsets = [0, 0], sizes = [16, 64], strides = [1, 1]} : vector<16x192xf32> to vector<16x64xf32>
    %816 = arith.addf %814, %815 : vector<16x64xf32>
    %cst_247 = arith.constant 5.000000e-01 : f32
    %817 = vector.broadcast %cst_247 : f32 to vector<16x64xf32>
    %818 = arith.mulf %817, %816 : vector<16x64xf32>
    %819 = math.tanh %818 : vector<16x64xf32>
    %cst_248 = arith.constant 1.000000e+00 : f32
    %820 = vector.broadcast %cst_248 : f32 to vector<16x64xf32>
    %821 = arith.addf %820, %819 : vector<16x64xf32>
    %cst_249 = arith.constant 5.000000e-01 : f32
    %822 = vector.broadcast %cst_249 : f32 to vector<16x64xf32>
    %823 = arith.mulf %822, %821 : vector<16x64xf32>
    %824 = vector.extract_strided_slice %813 {offsets = [0, 64], sizes = [16, 64], strides = [1, 1]} : vector<16x192xf32> to vector<16x64xf32>
    %825 = vector.extract_strided_slice %811 {offsets = [0, 64], sizes = [16, 64], strides = [1, 1]} : vector<16x192xf32> to vector<16x64xf32>
    %826 = arith.addf %824, %825 : vector<16x64xf32>
    %cst_250 = arith.constant 5.000000e-01 : f32
    %827 = vector.broadcast %cst_250 : f32 to vector<16x64xf32>
    %828 = arith.mulf %827, %826 : vector<16x64xf32>
    %829 = math.tanh %828 : vector<16x64xf32>
    %cst_251 = arith.constant 1.000000e+00 : f32
    %830 = vector.broadcast %cst_251 : f32 to vector<16x64xf32>
    %831 = arith.addf %830, %829 : vector<16x64xf32>
    %cst_252 = arith.constant 5.000000e-01 : f32
    %832 = vector.broadcast %cst_252 : f32 to vector<16x64xf32>
    %833 = arith.mulf %832, %831 : vector<16x64xf32>
    %834 = vector.extract_strided_slice %813 {offsets = [0, 128], sizes = [16, 64], strides = [1, 1]} : vector<16x192xf32> to vector<16x64xf32>
    %835 = vector.extract_strided_slice %811 {offsets = [0, 128], sizes = [16, 64], strides = [1, 1]} : vector<16x192xf32> to vector<16x64xf32>
    %836 = arith.addf %835, %16 : vector<16x64xf32>
    %837 = arith.mulf %823, %836 : vector<16x64xf32>
    %838 = arith.addf %834, %837 : vector<16x64xf32>
    %839 = math.tanh %838 : vector<16x64xf32>
    %cst_253 = arith.constant 1.000000e+00 : f32
    %840 = vector.broadcast %cst_253 : f32 to vector<16x64xf32>
    %841 = arith.subf %840, %833 : vector<16x64xf32>
    %842 = arith.mulf %841, %839 : vector<16x64xf32>
    %843 = arith.mulf %833, %807 : vector<16x64xf32>
    %844 = arith.addf %842, %843 : vector<16x64xf32>
    %845 = arith.truncf %844 : vector<16x64xf32> to vector<16x64xbf16>
    %cst_254 = arith.constant dense<0.000000e+00> : vector<16x192xf32>
    %846 = tpu.matmul %845, %13, %cst_254 {dimension_numbers = #tpu.dot_dimension_numbers<[1], [0], [0], [1], [0, 0, 1, 1], [], []>} : vector<16x64xbf16>, vector<64x192xbf16>, vector<16x192xf32> -> vector<16x192xf32>
    %c23 = arith.constant 23 : index
    %c0_255 = arith.constant 0 : index
    %c0_256 = arith.constant 0 : index
    %847 = vector.load %arg12[%c23, %c0_255, %c0_256] : memref<24x16x192xf32, #tpu.memory_space<vmem>>, vector<1x16x192xf32>
    %848 = vector.shape_cast %847 : vector<1x16x192xf32> to vector<16x192xf32>
    %849 = vector.extract_strided_slice %848 {offsets = [0, 0], sizes = [16, 64], strides = [1, 1]} : vector<16x192xf32> to vector<16x64xf32>
    %850 = vector.extract_strided_slice %846 {offsets = [0, 0], sizes = [16, 64], strides = [1, 1]} : vector<16x192xf32> to vector<16x64xf32>
    %851 = arith.addf %849, %850 : vector<16x64xf32>
    %cst_257 = arith.constant 5.000000e-01 : f32
    %852 = vector.broadcast %cst_257 : f32 to vector<16x64xf32>
    %853 = arith.mulf %852, %851 : vector<16x64xf32>
    %854 = math.tanh %853 : vector<16x64xf32>
    %cst_258 = arith.constant 1.000000e+00 : f32
    %855 = vector.broadcast %cst_258 : f32 to vector<16x64xf32>
    %856 = arith.addf %855, %854 : vector<16x64xf32>
    %cst_259 = arith.constant 5.000000e-01 : f32
    %857 = vector.broadcast %cst_259 : f32 to vector<16x64xf32>
    %858 = arith.mulf %857, %856 : vector<16x64xf32>
    %859 = vector.extract_strided_slice %848 {offsets = [0, 64], sizes = [16, 64], strides = [1, 1]} : vector<16x192xf32> to vector<16x64xf32>
    %860 = vector.extract_strided_slice %846 {offsets = [0, 64], sizes = [16, 64], strides = [1, 1]} : vector<16x192xf32> to vector<16x64xf32>
    %861 = arith.addf %859, %860 : vector<16x64xf32>
    %cst_260 = arith.constant 5.000000e-01 : f32
    %862 = vector.broadcast %cst_260 : f32 to vector<16x64xf32>
    %863 = arith.mulf %862, %861 : vector<16x64xf32>
    %864 = math.tanh %863 : vector<16x64xf32>
    %cst_261 = arith.constant 1.000000e+00 : f32
    %865 = vector.broadcast %cst_261 : f32 to vector<16x64xf32>
    %866 = arith.addf %865, %864 : vector<16x64xf32>
    %cst_262 = arith.constant 5.000000e-01 : f32
    %867 = vector.broadcast %cst_262 : f32 to vector<16x64xf32>
    %868 = arith.mulf %867, %866 : vector<16x64xf32>
    %869 = vector.extract_strided_slice %848 {offsets = [0, 128], sizes = [16, 64], strides = [1, 1]} : vector<16x192xf32> to vector<16x64xf32>
    %870 = vector.extract_strided_slice %846 {offsets = [0, 128], sizes = [16, 64], strides = [1, 1]} : vector<16x192xf32> to vector<16x64xf32>
    %871 = arith.addf %870, %16 : vector<16x64xf32>
    %872 = arith.mulf %858, %871 : vector<16x64xf32>
    %873 = arith.addf %869, %872 : vector<16x64xf32>
    %874 = math.tanh %873 : vector<16x64xf32>
    %cst_263 = arith.constant 1.000000e+00 : f32
    %875 = vector.broadcast %cst_263 : f32 to vector<16x64xf32>
    %876 = arith.subf %875, %868 : vector<16x64xf32>
    %877 = arith.mulf %876, %874 : vector<16x64xf32>
    %878 = arith.mulf %868, %844 : vector<16x64xf32>
    %879 = arith.addf %877, %878 : vector<16x64xf32>
    %880 = arith.truncf %879 : vector<16x64xf32> to vector<16x64xbf16>
    %881 = tpu.concatenate %845, %880 in 1 : vector<16x64xbf16>, vector<16x64xbf16> -> vector<16x128xbf16>
    %c0_264 = arith.constant 0 : index
    %c1408 = arith.constant 1408 : index
    %882 = vector.load %arg13[%c0_264, %c1408] : memref<16x1536xbf16, #tpu.memory_space<vmem>>, vector<16x128xbf16>
    tpu.vector_store %arg13[%c0_264, %c1408], %881 {strides = array<i32>} : memref<16x1536xbf16, #tpu.memory_space<vmem>>, vector<16x128xbf16>,
    %c0_265 = arith.constant 0 : index
    %c0_266 = arith.constant 0 : index
    %883 = vector.load %arg13[%c0_265, %c0_266] : memref<16x1536xbf16, #tpu.memory_space<vmem>>, vector<16x1536xbf16>
    %c0_267 = arith.constant 0 : index
    %c0_268 = arith.constant 0 : index
    %884 = vector.load %arg5[%c0_267, %c0_268] : memref<1536x128xbf16, #tpu.memory_space<vmem>>, vector<1536x128xbf16>
    %cst_269 = arith.constant dense<0.000000e+00> : vector<16x128xf32>
    %885 = tpu.matmul %883, %884, %cst_269 {dimension_numbers = #tpu.dot_dimension_numbers<[1], [0], [0], [1], [0, 0, 1, 1], [], []>} : vector<16x1536xbf16>, vector<1536x128xbf16>, vector<16x128xf32> -> vector<16x128xf32>
    %c0_270 = arith.constant 0 : index
    %c0_271 = arith.constant 0 : index
    %886 = vector.load %arg6[%c0_270, %c0_271] : memref<1x128xf32, #tpu.memory_space<vmem>>, vector<1x128xf32>
    %887 = vector.broadcast %886 : vector<1x128xf32> to vector<16x128xf32>
    %888 = arith.addf %885, %887 : vector<16x128xf32>
    %cst_272 = arith.constant 0.000000e+00 : f32
    %889 = vector.broadcast %cst_272 : f32 to vector<16x128xf32>
    %890 = arith.maximumf %888, %889 : vector<16x128xf32>
    %891 = arith.truncf %890 : vector<16x128xf32> to vector<16x128xbf16>
    %c0_273 = arith.constant 0 : index
    %c0_274 = arith.constant 0 : index
    %892 = vector.load %arg7[%c0_273, %c0_274] : memref<128x64xbf16, #tpu.memory_space<vmem>>, vector<128x64xbf16>
    %cst_275 = arith.constant dense<0.000000e+00> : vector<16x64xf32>
    %893 = tpu.matmul %891, %892, %cst_275 {dimension_numbers = #tpu.dot_dimension_numbers<[1], [0], [0], [1], [0, 0, 1, 1], [], []>} : vector<16x128xbf16>, vector<128x64xbf16>, vector<16x64xf32> -> vector<16x64xf32>
    %c0_276 = arith.constant 0 : index
    %c0_277 = arith.constant 0 : index
    %894 = vector.load %arg8[%c0_276, %c0_277] : memref<1x64xf32, #tpu.memory_space<vmem>>, vector<1x64xf32>
    %895 = vector.broadcast %894 : vector<1x64xf32> to vector<16x64xf32>
    %896 = arith.addf %893, %895 : vector<16x64xf32>
    %cst_278 = arith.constant 0.000000e+00 : f32
    %897 = vector.broadcast %cst_278 : f32 to vector<16x64xf32>
    %898 = arith.maximumf %896, %897 : vector<16x64xf32>
    %899 = arith.truncf %898 : vector<16x64xf32> to vector<16x64xbf16>
    %c0_279 = arith.constant 0 : index
    %c0_280 = arith.constant 0 : index
    %900 = vector.load %arg9[%c0_279, %c0_280] : memref<64x128xbf16, #tpu.memory_space<vmem>>, vector<64x128xbf16>
    %cst_281 = arith.constant dense<0.000000e+00> : vector<16x128xf32>
    %901 = tpu.matmul %899, %900, %cst_281 {dimension_numbers = #tpu.dot_dimension_numbers<[1], [0], [0], [1], [0, 0, 1, 1], [], []>} : vector<16x64xbf16>, vector<64x128xbf16>, vector<16x128xf32> -> vector<16x128xf32>
    %c0_282 = arith.constant 0 : index
    %c0_283 = arith.constant 0 : index
    %902 = vector.load %arg10[%c0_282, %c0_283] : memref<1x128xf32, #tpu.memory_space<vmem>>, vector<1x128xf32>
    %903 = vector.broadcast %902 : vector<1x128xf32> to vector<16x128xf32>
    %904 = arith.addf %901, %903 : vector<16x128xf32>
    %c0_284 = arith.constant 0 : index
    %c0_285 = arith.constant 0 : index
    %905 = vector.load %arg11[%c0_284, %c0_285] : memref<16x128xf32, #tpu.memory_space<vmem>>, vector<16x128xf32>
    tpu.vector_store %arg11[%c0_284, %c0_285], %904 {strides = array<i32>} : memref<16x128xf32, #tpu.memory_space<vmem>>, vector<16x128xf32>,
    return
  }
  func.func @transform_0(%arg0: i32) -> (i32, i32) {
    %c0_i32 = arith.constant 0 : i32
    %c0_i32_0 = arith.constant 0 : i32
    return %c0_i32, %arg0 : i32, i32
  }
  func.func @transform_1(%arg0: i32) -> (i32, i32) {
    %c0_i32 = arith.constant 0 : i32
    %c0_i32_0 = arith.constant 0 : i32
    %c0_i32_1 = arith.constant 0 : i32
    return %c0_i32, %c0_i32_0 : i32, i32
  }
  func.func @transform_2(%arg0: i32) -> (i32, i32) {
    %c0_i32 = arith.constant 0 : i32
    %c0_i32_0 = arith.constant 0 : i32
    %c0_i32_1 = arith.constant 0 : i32
    return %c0_i32, %c0_i32_0 : i32, i32
  }
  func.func @transform_3(%arg0: i32) -> (i32, i32) {
    %c0_i32 = arith.constant 0 : i32
    %c0_i32_0 = arith.constant 0 : i32
    %c0_i32_1 = arith.constant 0 : i32
    return %c0_i32, %c0_i32_0 : i32, i32
  }
  func.func @transform_4(%arg0: i32) -> (i32, i32) {
    %c0_i32 = arith.constant 0 : i32
    %c0_i32_0 = arith.constant 0 : i32
    %c0_i32_1 = arith.constant 0 : i32
    return %c0_i32, %c0_i32_0 : i32, i32
  }
  func.func @transform_5(%arg0: i32) -> (i32, i32) {
    %c0_i32 = arith.constant 0 : i32
    %c0_i32_0 = arith.constant 0 : i32
    %c0_i32_1 = arith.constant 0 : i32
    return %c0_i32, %c0_i32_0 : i32, i32
  }
  func.func @transform_6(%arg0: i32) -> (i32, i32) {
    %c0_i32 = arith.constant 0 : i32
    %c0_i32_0 = arith.constant 0 : i32
    %c0_i32_1 = arith.constant 0 : i32
    return %c0_i32, %c0_i32_0 : i32, i32
  }
  func.func @transform_7(%arg0: i32) -> (i32, i32) {
    %c0_i32 = arith.constant 0 : i32
    %c0_i32_0 = arith.constant 0 : i32
    %c0_i32_1 = arith.constant 0 : i32
    return %c0_i32, %c0_i32_0 : i32, i32
  }
  func.func @transform_8(%arg0: i32) -> (i32, i32) {
    %c0_i32 = arith.constant 0 : i32
    %c0_i32_0 = arith.constant 0 : i32
    %c0_i32_1 = arith.constant 0 : i32
    return %c0_i32, %c0_i32_0 : i32, i32
  }
  func.func @transform_9(%arg0: i32) -> (i32, i32) {
    %c0_i32 = arith.constant 0 : i32
    %c0_i32_0 = arith.constant 0 : i32
    %c0_i32_1 = arith.constant 0 : i32
    return %c0_i32, %c0_i32_0 : i32, i32
  }
  func.func @transform_10(%arg0: i32) -> (i32, i32) {
    %c0_i32 = arith.constant 0 : i32
    %c0_i32_0 = arith.constant 0 : i32
    return %arg0, %c0_i32 : i32, i32
  }
}

</mosaic_0001>

<llo_original>
// kernel: gru_emb_forward.1
$region0: #{gru_emb_forward.1}
  #allocation0 [shape = 'u32[]', space=smem, size = 0x4, offset = 0x4, fixed_abs, tag = 'smem constant byte address 0x4 - core index']
  #allocation1 [shape = 'u32[144,128]{1,0:T(1,128)}', space=vmem, size = 0x12000, scoped, tag = 'internal scratch']
  #allocation2 [shape = 'f32[24,16,192]{2,1,0:T(8,128)}', space=vmem, size = 0x60000, scoped, tag = 'scratch operand']
  #allocation3 [shape = 'bf16[16,1536]{1,0:T(16,128)(2,1)}', space=vmem, size = 0xc000, scoped, tag = 'scratch operand']
  %s0 = inlined_call_operand.vmem [shape: s32[24,16], index: 0, kind: input, shape index: {}]
  %s1 = inlined_call_operand.vmem [shape: bf16[25,192], index: 1, kind: input, shape index: {}]
  %s2 = inlined_call_operand.vmem [shape: bf16[64,192], index: 2, kind: input, shape index: {}]
  %s3 = inlined_call_operand.vmem [shape: f32[1,64], index: 3, kind: input, shape index: {}]
  %s4 = inlined_call_operand.vmem [shape: bf16[1536,128], index: 4, kind: input, shape index: {}]
  %s5 = inlined_call_operand.vmem [shape: f32[1,128], index: 5, kind: input, shape index: {}]
  %s6 = inlined_call_operand.vmem [shape: bf16[128,64], index: 6, kind: input, shape index: {}]
  %s7 = inlined_call_operand.vmem [shape: f32[1,64], index: 7, kind: input, shape index: {}]
  %s8 = inlined_call_operand.vmem [shape: bf16[64,128], index: 8, kind: input, shape index: {}]
  %s9 = inlined_call_operand.vmem [shape: f32[1,128], index: 9, kind: input, shape index: {}]
  %s10 = inlined_call_operand.vmem [shape: f32[16,128], index: 10, kind: output, shape index: {}]
  %s11 = sld [smem:[#allocation0]]
  $region50: #{gru_emb_forward.1} parent=0
    _
  %s13 = ssub.s32 1, %s11
  %s14 = scalar_select 0, %s13, %s11
  // Predicated region
  $region2: #{gru_emb_forward.1} parent=0 // pred_check
    _
  $region3: #{gru_emb_forward.1} parent=0 // pred_check_branch
    %16 = sbr.rel (0) target = $region5
  $region4: #{gru_emb_forward.1} parent=0 // pred_region
    _
  $region5: #{gru_emb_forward.1} parent=0 // pred_fallthru
    _
  // Predicated region
  $region6: #{gru_emb_forward.1} parent=0 // pred_check
    _
  $region7: #{gru_emb_forward.1} parent=0 // pred_check_branch
    %18 = sbr.rel (0) target = $region9
  $region8: #{gru_emb_forward.1} parent=0 // pred_region
    _
  $region9: #{gru_emb_forward.1} parent=0 // pred_fallthru
    _
  // Predicated region
  $region10: #{gru_emb_forward.1} parent=0 // pred_check
    _
  $region11: #{gru_emb_forward.1} parent=0 // pred_check_branch
    %20 = sbr.rel (0) target = $region13
  $region12: #{gru_emb_forward.1} parent=0 // pred_region
    _
  $region13: #{gru_emb_forward.1} parent=0 // pred_fallthru
    _
  // Predicated region
  $region14: #{gru_emb_forward.1} parent=0 // pred_check
    _
  $region15: #{gru_emb_forward.1} parent=0 // pred_check_branch
    %22 = sbr.rel (0) target = $region17
  $region16: #{gru_emb_forward.1} parent=0 // pred_region
    _
  $region17: #{gru_emb_forward.1} parent=0 // pred_fallthru
    _
  // Predicated region
  $region18: #{gru_emb_forward.1} parent=0 // pred_check
    _
  $region19: #{gru_emb_forward.1} parent=0 // pred_check_branch
    %24 = sbr.rel (0) target = $region21
  $region20: #{gru_emb_forward.1} parent=0 // pred_region
    _
  $region21: #{gru_emb_forward.1} parent=0 // pred_fallthru
    _
  // Predicated region
  $region22: #{gru_emb_forward.1} parent=0 // pred_check
    _
  $region23: #{gru_emb_forward.1} parent=0 // pred_check_branch
    %26 = sbr.rel (0) target = $region25
  $region24: #{gru_emb_forward.1} parent=0 // pred_region
    _
  $region25: #{gru_emb_forward.1} parent=0 // pred_fallthru
    _
  // Predicated region
  $region26: #{gru_emb_forward.1} parent=0 // pred_check
    _
  $region27: #{gru_emb_forward.1} parent=0 // pred_check_branch
    %28 = sbr.rel (0) target = $region29
  $region28: #{gru_emb_forward.1} parent=0 // pred_region
    _
  $region29: #{gru_emb_forward.1} parent=0 // pred_fallthru
    _
  // Predicated region
  $region30: #{gru_emb_forward.1} parent=0 // pred_check
    _
  $region31: #{gru_emb_forward.1} parent=0 // pred_check_branch
    %30 = sbr.rel (0) target = $region33
  $region32: #{gru_emb_forward.1} parent=0 // pred_region
    _
  $region33: #{gru_emb_forward.1} parent=0 // pred_fallthru
    _
  // Predicated region
  $region34: #{gru_emb_forward.1} parent=0 // pred_check
    _
  $region35: #{gru_emb_forward.1} parent=0 // pred_check_branch
    %32 = sbr.rel (0) target = $region37
  $region36: #{gru_emb_forward.1} parent=0 // pred_region
    _
  $region37: #{gru_emb_forward.1} parent=0 // pred_fallthru
    _
  // Predicated region
  $region38: #{gru_emb_forward.1} parent=0 // pred_check
    _
  $region39: #{gru_emb_forward.1} parent=0 // pred_check_branch
    %34 = sbr.rel (0) target = $region41
  $region40: #{gru_emb_forward.1} parent=0 // pred_region
    _
  $region41: #{gru_emb_forward.1} parent=0 // pred_fallthru
    _
  %v36 = vld [vmem:[%s0] sm:$0xff]
  %v37 = vld [vmem:[%s0 + $0x8] sm:$0xff]
  %v38 = vld [vmem:[%s0 + $0x10] sm:$0xff]
  %v39 = vlaneseq
  %v40 = vand.u32 %v39, 127
  %v41 = vlaneseq
  %v42 = vshrl.u32 %v41, 7
  %v43 = vsub.s32 0, %v42
  %v44 = vrot.slane %v36, %v43
  %46 = vbcast.lane.b32.xlu0 %v44, 256
  %v47 = vpop.permute.xlu0 %46
  %s49 = sor.u32 256, 8
  %50 = vbcast.lane.b32.xlu0 %v44, %s49
  %v51 = vpop.permute.xlu0 %50
  %v52 = vlaneseq
  %v53 = vshrl.u32 %v52, 7
  %v54 = vsub.s32 1, %v53
  %v55 = vrot.slane %v36, %v54
  %57 = vbcast.lane.b32.xlu0 %v55, 256
  %v58 = vpop.permute.xlu0 %57
  %s60 = sor.u32 256, 8
  %61 = vbcast.lane.b32.xlu0 %v55, %s60
  %v62 = vpop.permute.xlu0 %61
  %v63 = vlaneseq
  %v64 = vshrl.u32 %v63, 7
  %v65 = vsub.s32 2, %v64
  %v66 = vrot.slane %v36, %v65
  %68 = vbcast.lane.b32.xlu0 %v66, 256
  %v69 = vpop.permute.xlu0 %68
  %s71 = sor.u32 256, 8
  %72 = vbcast.lane.b32.xlu0 %v66, %s71
  %v73 = vpop.permute.xlu0 %72
  %v74 = vlaneseq
  %v75 = vshrl.u32 %v74, 7
  %v76 = vsub.s32 3, %v75
  %v77 = vrot.slane %v36, %v76
  %79 = vbcast.lane.b32.xlu0 %v77, 256
  %v80 = vpop.permute.xlu0 %79
  %s82 = sor.u32 256, 8
  %83 = vbcast.lane.b32.xlu0 %v77, %s82
  %v84 = vpop.permute.xlu0 %83
  %v85 = vlaneseq
  %v86 = vshrl.u32 %v85, 7
  %v87 = vsub.s32 4, %v86
  %v88 = vrot.slane %v36, %v87
  %90 = vbcast.lane.b32.xlu0 %v88, 256
  %v91 = vpop.permute.xlu0 %90
  %s93 = sor.u32 256, 8
  %94 = vbcast.lane.b32.xlu0 %v88, %s93
  %v95 = vpop.permute.xlu0 %94
  %v96 = vlaneseq
  %v97 = vshrl.u32 %v96, 7
  %v98 = vsub.s32 5, %v97
  %v99 = vrot.slane %v36, %v98
  %101 = vbcast.lane.b32.xlu0 %v99, 256
  %v102 = vpop.permute.xlu0 %101
  %s104 = sor.u32 256, 8
  %105 = vbcast.lane.b32.xlu0 %v99, %s104
  %v106 = vpop.permute.xlu0 %105
  %v107 = vlaneseq
  %v108 = vshrl.u32 %v107, 7
  %v109 = vsub.s32 6, %v108
  %v110 = vrot.slane %v36, %v109
  %112 = vbcast.lane.b32.xlu0 %v110, 256
  %v113 = vpop.permute.xlu0 %112
  %s115 = sor.u32 256, 8
  %116 = vbcast.lane.b32.xlu0 %v110, %s115
  %v117 = vpop.permute.xlu0 %116
  %v118 = vlaneseq
  %v119 = vshrl.u32 %v118, 7
  %v120 = vsub.s32 7, %v119
  %v121 = vrot.slane %v36, %v120
  %123 = vbcast.lane.b32.xlu0 %v121, 256
  %v124 = vpop.permute.xlu0 %123
  %s126 = sor.u32 256, 8
  %127 = vbcast.lane.b32.xlu0 %v121, %s126
  %v128 = vpop.permute.xlu0 %127
  %v129 = vlaneseq
  %v130 = vshrl.u32 %v129, 7
  %v131 = vsub.s32 0, %v130
  %v132 = vrot.slane %v37, %v131
  %134 = vbcast.lane.b32.xlu0 %v132, 256
  %v135 = vpop.permute.xlu0 %134
  %s137 = sor.u32 256, 8
  %138 = vbcast.lane.b32.xlu0 %v132, %s137
  %v139 = vpop.permute.xlu0 %138
  %v140 = vlaneseq
  %v141 = vshrl.u32 %v140, 7
  %v142 = vsub.s32 1, %v141
  %v143 = vrot.slane %v37, %v142
  %145 = vbcast.lane.b32.xlu0 %v143, 256
  %v146 = vpop.permute.xlu0 %145
  %s148 = sor.u32 256, 8
  %149 = vbcast.lane.b32.xlu0 %v143, %s148
  %v150 = vpop.permute.xlu0 %149
  %v151 = vlaneseq
  %v152 = vshrl.u32 %v151, 7
  %v153 = vsub.s32 2, %v152
  %v154 = vrot.slane %v37, %v153
  %156 = vbcast.lane.b32.xlu0 %v154, 256
  %v157 = vpop.permute.xlu0 %156
  %s159 = sor.u32 256, 8
  %160 = vbcast.lane.b32.xlu0 %v154, %s159
  %v161 = vpop.permute.xlu0 %160
  %v162 = vlaneseq
  %v163 = vshrl.u32 %v162, 7
  %v164 = vsub.s32 3, %v163
  %v165 = vrot.slane %v37, %v164
  %167 = vbcast.lane.b32.xlu0 %v165, 256
  %v168 = vpop.permute.xlu0 %167
  %s170 = sor.u32 256, 8
  %171 = vbcast.lane.b32.xlu0 %v165, %s170
  %v172 = vpop.permute.xlu0 %171
  %v173 = vlaneseq
  %v174 = vshrl.u32 %v173, 7
  %v175 = vsub.s32 4, %v174
  %v176 = vrot.slane %v37, %v175
  %178 = vbcast.lane.b32.xlu0 %v176, 256
  %v179 = vpop.permute.xlu0 %178
  %s181 = sor.u32 256, 8
  %182 = vbcast.lane.b32.xlu0 %v176, %s181
  %v183 = vpop.permute.xlu0 %182
  %v184 = vlaneseq
  %v185 = vshrl.u32 %v184, 7
  %v186 = vsub.s32 5, %v185
  %v187 = vrot.slane %v37, %v186
  %189 = vbcast.lane.b32.xlu0 %v187, 256
  %v190 = vpop.permute.xlu0 %189
  %s192 = sor.u32 256, 8
  %193 = vbcast.lane.b32.xlu0 %v187, %s192
  %v194 = vpop.permute.xlu0 %193
  %v195 = vlaneseq
  %v196 = vshrl.u32 %v195, 7
  %v197 = vsub.s32 6, %v196
  %v198 = vrot.slane %v37, %v197
  %200 = vbcast.lane.b32.xlu0 %v198, 256
  %v201 = vpop.permute.xlu0 %200
  %s203 = sor.u32 256, 8
  %204 = vbcast.lane.b32.xlu0 %v198, %s203
  %v205 = vpop.permute.xlu0 %204
  %v206 = vlaneseq
  %v207 = vshrl.u32 %v206, 7
  %v208 = vsub.s32 7, %v207
  %v209 = vrot.slane %v37, %v208
  %211 = vbcast.lane.b32.xlu0 %v209, 256
  %v212 = vpop.permute.xlu0 %211
  %s214 = sor.u32 256, 8
  %215 = vbcast.lane.b32.xlu0 %v209, %s214
  %v216 = vpop.permute.xlu0 %215
  %v217 = vlaneseq
  %v218 = vshrl.u32 %v217, 7
  %v219 = vsub.s32 0, %v218
  %v220 = vrot.slane %v38, %v219
  %222 = vbcast.lane.b32.xlu0 %v220, 256
  %v223 = vpop.permute.xlu0 %222
  %s225 = sor.u32 256, 8
  %226 = vbcast.lane.b32.xlu0 %v220, %s225
  %v227 = vpop.permute.xlu0 %226
  %v228 = vlaneseq
  %v229 = vshrl.u32 %v228, 7
  %v230 = vsub.s32 1, %v229
  %v231 = vrot.slane %v38, %v230
  %233 = vbcast.lane.b32.xlu0 %v231, 256
  %v234 = vpop.permute.xlu0 %233
  %s236 = sor.u32 256, 8
  %237 = vbcast.lane.b32.xlu0 %v231, %s236
  %v238 = vpop.permute.xlu0 %237
  %v239 = vlaneseq
  %v240 = vshrl.u32 %v239, 7
  %v241 = vsub.s32 2, %v240
  %v242 = vrot.slane %v38, %v241
  %244 = vbcast.lane.b32.xlu0 %v242, 256
  %v245 = vpop.permute.xlu0 %244
  %s247 = sor.u32 256, 8
  %248 = vbcast.lane.b32.xlu0 %v242, %s247
  %v249 = vpop.permute.xlu0 %248
  %v250 = vlaneseq
  %v251 = vshrl.u32 %v250, 7
  %v252 = vsub.s32 3, %v251
  %v253 = vrot.slane %v38, %v252
  %255 = vbcast.lane.b32.xlu0 %v253, 256
  %v256 = vpop.permute.xlu0 %255
  %s258 = sor.u32 256, 8
  %259 = vbcast.lane.b32.xlu0 %v253, %s258
  %v260 = vpop.permute.xlu0 %259
  %v261 = vlaneseq
  %v262 = vshrl.u32 %v261, 7
  %v263 = vsub.s32 4, %v262
  %v264 = vrot.slane %v38, %v263
  %266 = vbcast.lane.b32.xlu0 %v264, 256
  %v267 = vpop.permute.xlu0 %266
  %s269 = sor.u32 256, 8
  %270 = vbcast.lane.b32.xlu0 %v264, %s269
  %v271 = vpop.permute.xlu0 %270
  %v272 = vlaneseq
  %v273 = vshrl.u32 %v272, 7
  %v274 = vsub.s32 5, %v273
  %v275 = vrot.slane %v38, %v274
  %277 = vbcast.lane.b32.xlu0 %v275, 256
  %v278 = vpop.permute.xlu0 %277
  %s280 = sor.u32 256, 8
  %281 = vbcast.lane.b32.xlu0 %v275, %s280
  %v282 = vpop.permute.xlu0 %281
  %v283 = vlaneseq
  %v284 = vshrl.u32 %v283, 7
  %v285 = vsub.s32 6, %v284
  %v286 = vrot.slane %v38, %v285
  %288 = vbcast.lane.b32.xlu0 %v286, 256
  %v289 = vpop.permute.xlu0 %288
  %s291 = sor.u32 256, 8
  %292 = vbcast.lane.b32.xlu0 %v286, %s291
  %v293 = vpop.permute.xlu0 %292
  %v294 = vlaneseq
  %v295 = vshrl.u32 %v294, 7
  %v296 = vsub.s32 7, %v295
  %v297 = vrot.slane %v38, %v296
  %299 = vbcast.lane.b32.xlu0 %v297, 256
  %v300 = vpop.permute.xlu0 %299
  %s302 = sor.u32 256, 8
  %303 = vbcast.lane.b32.xlu0 %v297, %s302
  %v304 = vpop.permute.xlu0 %303
  %vm305 = vcmp.eq.s32.totalorder %v47, %v40
  %vm306 = vcmp.eq.s32.totalorder %v51, %v40
  %vm307 = vcmp.eq.s32.totalorder %v58, %v40
  %vm308 = vcmp.eq.s32.totalorder %v62, %v40
  %vm309 = vcmp.eq.s32.totalorder %v69, %v40
  %vm310 = vcmp.eq.s32.totalorder %v73, %v40
  %vm311 = vcmp.eq.s32.totalorder %v80, %v40
  %vm312 = vcmp.eq.s32.totalorder %v84, %v40
  %vm313 = vcmp.eq.s32.totalorder %v91, %v40
  %vm314 = vcmp.eq.s32.totalorder %v95, %v40
  %vm315 = vcmp.eq.s32.totalorder %v102, %v40
  %vm316 = vcmp.eq.s32.totalorder %v106, %v40
  %vm317 = vcmp.eq.s32.totalorder %v113, %v40
  %vm318 = vcmp.eq.s32.totalorder %v117, %v40
  %vm319 = vcmp.eq.s32.totalorder %v124, %v40
  %vm320 = vcmp.eq.s32.totalorder %v128, %v40
  %vm321 = vcmp.eq.s32.totalorder %v135, %v40
  %vm322 = vcmp.eq.s32.totalorder %v139, %v40
  %vm323 = vcmp.eq.s32.totalorder %v146, %v40
  %vm324 = vcmp.eq.s32.totalorder %v150, %v40
  %vm325 = vcmp.eq.s32.totalorder %v157, %v40
  %vm326 = vcmp.eq.s32.totalorder %v161, %v40
  %vm327 = vcmp.eq.s32.totalorder %v168, %v40
  %vm328 = vcmp.eq.s32.totalorder %v172, %v40
  %vm329 = vcmp.eq.s32.totalorder %v179, %v40
  %vm330 = vcmp.eq.s32.totalorder %v183, %v40
  %vm331 = vcmp.eq.s32.totalorder %v190, %v40
  %vm332 = vcmp.eq.s32.totalorder %v194, %v40
  %vm333 = vcmp.eq.s32.totalorder %v201, %v40
  %vm334 = vcmp.eq.s32.totalorder %v205, %v40
  %vm335 = vcmp.eq.s32.totalorder %v212, %v40
  %vm336 = vcmp.eq.s32.totalorder %v216, %v40
  %vm337 = vcmp.eq.s32.totalorder %v223, %v40
  %vm338 = vcmp.eq.s32.totalorder %v227, %v40
  %vm339 = vcmp.eq.s32.totalorder %v234, %v40
  %vm340 = vcmp.eq.s32.totalorder %v238, %v40
  %vm341 = vcmp.eq.s32.totalorder %v245, %v40
  %vm342 = vcmp.eq.s32.totalorder %v249, %v40
  %vm343 = vcmp.eq.s32.totalorder %v256, %v40
  %vm344 = vcmp.eq.s32.totalorder %v260, %v40
  %vm345 = vcmp.eq.s32.totalorder %v267, %v40
  %vm346 = vcmp.eq.s32.totalorder %v271, %v40
  %vm347 = vcmp.eq.s32.totalorder %v278, %v40
  %vm348 = vcmp.eq.s32.totalorder %v282, %v40
  %vm349 = vcmp.eq.s32.totalorder %v289, %v40
  %vm350 = vcmp.eq.s32.totalorder %v293, %v40
  %vm351 = vcmp.eq.s32.totalorder %v300, %v40
  %vm352 = vcmp.eq.s32.totalorder %v304, %v40
  %v353 = vsel %vm305, 1, 0
  %v354 = vsel %vm306, 1, 0
  %v355 = vsel %vm307, 1, 0
  %v356 = vsel %vm308, 1, 0
  %v357 = vsel %vm309, 1, 0
  %v358 = vsel %vm310, 1, 0
  %v359 = vsel %vm311, 1, 0
  %v360 = vsel %vm312, 1, 0
  %v361 = vsel %vm313, 1, 0
  %v362 = vsel %vm314, 1, 0
  %v363 = vsel %vm315, 1, 0
  %v364 = vsel %vm316, 1, 0
  %v365 = vsel %vm317, 1, 0
  %v366 = vsel %vm318, 1, 0
  %v367 = vsel %vm319, 1, 0
  %v368 = vsel %vm320, 1, 0
  %v369 = vsel %vm321, 1, 0
  %v370 = vsel %vm322, 1, 0
  %v371 = vsel %vm323, 1, 0
  %v372 = vsel %vm324, 1, 0
  %v373 = vsel %vm325, 1, 0
  %v374 = vsel %vm326, 1, 0
  %v375 = vsel %vm327, 1, 0
  %v376 = vsel %vm328, 1, 0
  %v377 = vsel %vm329, 1, 0
  %v378 = vsel %vm330, 1, 0
  %v379 = vsel %vm331, 1, 0
  %v380 = vsel %vm332, 1, 0
  %v381 = vsel %vm333, 1, 0
  %v382 = vsel %vm334, 1, 0
  %v383 = vsel %vm335, 1, 0
  %v384 = vsel %vm336, 1, 0
  %v385 = vsel %vm337, 1, 0
  %v386 = vsel %vm338, 1, 0
  %v387 = vsel %vm339, 1, 0
  %v388 = vsel %vm340, 1, 0
  %v389 = vsel %vm341, 1, 0
  %v390 = vsel %vm342, 1, 0
  %v391 = vsel %vm343, 1, 0
  %v392 = vsel %vm344, 1, 0
  %v393 = vsel %vm345, 1, 0
  %v394 = vsel %vm346, 1, 0
  %v395 = vsel %vm347, 1, 0
  %v396 = vsel %vm348, 1, 0
  %v397 = vsel %vm349, 1, 0
  %v398 = vsel %vm350, 1, 0
  %v399 = vsel %vm351, 1, 0
  %v400 = vsel %vm352, 1, 0
  %v401 = vcvt.s32.f32 %v353
  %v402 = vcvt.s32.f32 %v354
  %v403 = vcvt.s32.f32 %v355
  %v404 = vcvt.s32.f32 %v356
  %v405 = vcvt.s32.f32 %v357
  %v406 = vcvt.s32.f32 %v358
  %v407 = vcvt.s32.f32 %v359
  %v408 = vcvt.s32.f32 %v360
  %v409 = vcvt.s32.f32 %v361
  %v410 = vcvt.s32.f32 %v362
  %v411 = vcvt.s32.f32 %v363
  %v412 = vcvt.s32.f32 %v364
  %v413 = vcvt.s32.f32 %v365
  %v414 = vcvt.s32.f32 %v366
  %v415 = vcvt.s32.f32 %v367
  %v416 = vcvt.s32.f32 %v368
  %v417 = vcvt.s32.f32 %v369
  %v418 = vcvt.s32.f32 %v370
  %v419 = vcvt.s32.f32 %v371
  %v420 = vcvt.s32.f32 %v372
  %v421 = vcvt.s32.f32 %v373
  %v422 = vcvt.s32.f32 %v374
  %v423 = vcvt.s32.f32 %v375
  %v424 = vcvt.s32.f32 %v376
  %v425 = vcvt.s32.f32 %v377
  %v426 = vcvt.s32.f32 %v378
  %v427 = vcvt.s32.f32 %v379
  %v428 = vcvt.s32.f32 %v380
  %v429 = vcvt.s32.f32 %v381
  %v430 = vcvt.s32.f32 %v382
  %v431 = vcvt.s32.f32 %v383
  %v432 = vcvt.s32.f32 %v384
  %v433 = vcvt.s32.f32 %v385
  %v434 = vcvt.s32.f32 %v386
  %v435 = vcvt.s32.f32 %v387
  %v436 = vcvt.s32.f32 %v388
  %v437 = vcvt.s32.f32 %v389
  %v438 = vcvt.s32.f32 %v390
  %v439 = vcvt.s32.f32 %v391
  %v440 = vcvt.s32.f32 %v392
  %v441 = vcvt.s32.f32 %v393
  %v442 = vcvt.s32.f32 %v394
  %v443 = vcvt.s32.f32 %v395
  %v444 = vcvt.s32.f32 %v396
  %v445 = vcvt.s32.f32 %v397
  %v446 = vcvt.s32.f32 %v398
  %v447 = vcvt.s32.f32 %v399
  %v448 = vcvt.s32.f32 %v400
  %v449 = vpack.c.bf16 %v402, %v401
  %v450 = vpack.c.bf16 %v404, %v403
  %v451 = vpack.c.bf16 %v406, %v405
  %v452 = vpack.c.bf16 %v408, %v407
  %v453 = vpack.c.bf16 %v410, %v409
  %v454 = vpack.c.bf16 %v412, %v411
  %v455 = vpack.c.bf16 %v414, %v413
  %v456 = vpack.c.bf16 %v416, %v415
  %v457 = vpack.c.bf16 %v418, %v417
  %v458 = vpack.c.bf16 %v420, %v419
  %v459 = vpack.c.bf16 %v422, %v421
  %v460 = vpack.c.bf16 %v424, %v423
  %v461 = vpack.c.bf16 %v426, %v425
  %v462 = vpack.c.bf16 %v428, %v427
  %v463 = vpack.c.bf16 %v430, %v429
  %v464 = vpack.c.bf16 %v432, %v431
  %v465 = vpack.c.bf16 %v434, %v433
  %v466 = vpack.c.bf16 %v436, %v435
  %v467 = vpack.c.bf16 %v438, %v437
  %v468 = vpack.c.bf16 %v440, %v439
  %v469 = vpack.c.bf16 %v442, %v441
  %v470 = vpack.c.bf16 %v444, %v443
  %v471 = vpack.c.bf16 %v446, %v445
  %v472 = vpack.c.bf16 %v448, %v447
  %v473 = vld [vmem:[%s1] sm:$0xff]
  %v474 = vld [vmem:[%s1 + $0x8] sm:$0xff]
  %v475 = vld [vmem:[%s1 + $0x10] sm:$0xff]
  %v476 = vld [vmem:[%s1 + $0x18] sm:$0x11]
  %v481 = vunpack.c.l.b16 %v473
  %v482 = vunpack.c.h.b16 %v473
  %v483 = vunpack.c.l.b16 %v474
  %v484 = vunpack.c.h.b16 %v474
  %v485 = vunpack.c.l.b16 %v475
  %v486 = vunpack.c.h.b16 %v475
  %v487 = vunpack.c.l.b16 %v476
  %v488 = vunpack.c.h.b16 %v476
  %v489 = vpack.c.b16 %v483, %v481
  %v490 = vpack.c.b16 %v484, %v482
  %v491 = vpack.c.b16 %v487, %v485
  %v492 = vpack.c.b16 %v488, %v486
  %vm495 = vcmask 203776
  %v497 = vsel %vm495, %v449, 0
  %v500 = vsel %vm495, %v450, 0
  %v503 = vsel %vm495, %v451, 0
  %v506 = vsel %vm495, %v452, 0
  %v509 = vsel %vm495, %v453, 0
  %v512 = vsel %vm495, %v454, 0
  %v515 = vsel %vm495, %v455, 0
  %v518 = vsel %vm495, %v456, 0
  %v521 = vsel %vm495, %v457, 0
  %v524 = vsel %vm495, %v458, 0
  %v527 = vsel %vm495, %v459, 0
  %v530 = vsel %vm495, %v460, 0
  %v533 = vsel %vm495, %v461, 0
  %v536 = vsel %vm495, %v462, 0
  %v539 = vsel %vm495, %v463, 0
  %v542 = vsel %vm495, %v464, 0
  %v545 = vsel %vm495, %v465, 0
  %v548 = vsel %vm495, %v466, 0
  %v551 = vsel %vm495, %v467, 0
  %v554 = vsel %vm495, %v468, 0
  %v557 = vsel %vm495, %v469, 0
  %v560 = vsel %vm495, %v470, 0
  %v563 = vsel %vm495, %v471, 0
  %v566 = vsel %vm495, %v472, 0
  %vm568 = vcmask 1043456
  %vm569 = vcmask 1044480
  %v570 = vsel %vm568, 4294967295, 65535
  %v571 = vsel %vm569, %v570, 0
  %v573 = vand.u32 %v491, %v571
  %v576 = vand.u32 %v492, %v571
  %578 = vmatprep.subr.bf16.mxu0 %v490
  %579 = vmatpush1.bf16.msra.mxu0 %v489
  %580 = vmatprep.subr.bf16.mxu0 %v576
  %581 = vmatpush1.bf16.msra.mxu0 %v573
  %582 = vmatprep.subr.bf16.mxu0 0
  %583 = vmatpush1.bf16.msra.mxu0 0
  %584 = vmatprep.subr.bf16.mxu0 0
  %585 = vmatpush1.bf16.msra.mxu0 0
  %586 = vmatprep.subr.bf16.mxu0 0
  %587 = vmatpush1.bf16.msra.mxu0 0
  %588 = vmatprep.subr.bf16.mxu0 0
  %589 = vmatpush1.bf16.msra.mxu0 0
  %590 = vmatprep.subr.bf16.mxu0 0
  %591 = vmatpush1.bf16.msra.mxu0 0
  %592 = vmatprep.subr.bf16.mxu0 0
  %593 = vmatpush1.bf16.msra.mxu0 0
  %594 = vmatprep.subr.bf16.mxu0 0
  %595 = vmatpush1.bf16.msra.mxu0 0
  %596 = vmatprep.subr.bf16.mxu0 0
  %597 = vmatpush1.bf16.msra.mxu0 0
  %598 = vmatprep.subr.bf16.mxu0 0
  %599 = vmatpush1.bf16.msra.mxu0 0
  %600 = vmatprep.subr.bf16.mxu0 0
  %601 = vmatpush1.bf16.msra.mxu0 0
  %602 = vmatprep.subr.bf16.mxu0 0
  %603 = vmatpush1.bf16.msra.mxu0 0
  %604 = vmatprep.subr.bf16.mxu0 0
  %605 = vmatpush1.bf16.msra.mxu0 0
  %606 = vmatprep.subr.bf16.mxu0 0
  %607 = vmatpush1.bf16.msra.mxu0 0
  %608 = vmatprep.subr.bf16.mxu0 0
  %609 = vmatpush1.bf16.msra.mxu0 0
  %610 = vmatprep.mubr.bf16.mxu0 0
  %611 = vmatmul.mubr.bf16.gmra.mrb[0].mxu0 %v497
  %v612 = vpop.f32.mrb[0].mxu0
  %v613 = vadd.f32 0.0, %v612
  %v614 = vpop.f32.mrb[0].mxu0
  %v615 = vadd.f32 0.0, %v614
  %v616 = vpop.f32.mrb[0].mxu0
  %v617 = vadd.f32 0.0, %v616
  %v618 = vpop.f32.mrb[0].mxu0
  %v619 = vadd.f32 0.0, %v618
  %620 = vmatprep.mubr.bf16.mxu0 0
  %621 = vmatmul.mubr.bf16.gmra.mrb[0].mxu0 %v500
  %v622 = vpop.f32.mrb[0].mxu0
  %v623 = vadd.f32 0.0, %v622
  %v624 = vpop.f32.mrb[0].mxu0
  %v625 = vadd.f32 0.0, %v624
  %v626 = vpop.f32.mrb[0].mxu0
  %v627 = vadd.f32 0.0, %v626
  %v628 = vpop.f32.mrb[0].mxu0
  %v629 = vadd.f32 0.0, %v628
  %630 = vmatprep.mubr.bf16.mxu0 0
  %631 = vmatmul.mubr.bf16.gmra.mrb[0].mxu0 %v503
  %v632 = vpop.f32.mrb[0].mxu0
  %v633 = vadd.f32 0.0, %v632
  %v634 = vpop.f32.mrb[0].mxu0
  %v635 = vadd.f32 0.0, %v634
  %v636 = vpop.f32.mrb[0].mxu0
  %v637 = vadd.f32 0.0, %v636
  %v638 = vpop.f32.mrb[0].mxu0
  %v639 = vadd.f32 0.0, %v638
  %640 = vmatprep.mubr.bf16.mxu0 0
  %641 = vmatmul.mubr.bf16.gmra.mrb[0].mxu0 %v506
  %v642 = vpop.f32.mrb[0].mxu0
  %v643 = vadd.f32 0.0, %v642
  %v644 = vpop.f32.mrb[0].mxu0
  %v645 = vadd.f32 0.0, %v644
  %v646 = vpop.f32.mrb[0].mxu0
  %v647 = vadd.f32 0.0, %v646
  %v648 = vpop.f32.mrb[0].mxu0
  %v649 = vadd.f32 0.0, %v648
  %650 = vmatprep.mubr.bf16.mxu0 0
  %651 = vmatmul.mubr.bf16.gmra.mrb[0].mxu0 %v509
  %v652 = vpop.f32.mrb[0].mxu0
  %v653 = vadd.f32 0.0, %v652
  %v654 = vpop.f32.mrb[0].mxu0
  %v655 = vadd.f32 0.0, %v654
  %v656 = vpop.f32.mrb[0].mxu0
  %v657 = vadd.f32 0.0, %v656
  %v658 = vpop.f32.mrb[0].mxu0
  %v659 = vadd.f32 0.0, %v658
  %660 = vmatprep.mubr.bf16.mxu0 0
  %661 = vmatmul.mubr.bf16.gmra.mrb[0].mxu0 %v512
  %v662 = vpop.f32.mrb[0].mxu0
  %v663 = vadd.f32 0.0, %v662
  %v664 = vpop.f32.mrb[0].mxu0
  %v665 = vadd.f32 0.0, %v664
  %v666 = vpop.f32.mrb[0].mxu0
  %v667 = vadd.f32 0.0, %v666
  %v668 = vpop.f32.mrb[0].mxu0
  %v669 = vadd.f32 0.0, %v668
  %670 = vmatprep.mubr.bf16.mxu0 0
  %671 = vmatmul.mubr.bf16.gmra.mrb[0].mxu0 %v515
  %v672 = vpop.f32.mrb[0].mxu0
  %v673 = vadd.f32 0.0, %v672
  %v674 = vpop.f32.mrb[0].mxu0
  %v675 = vadd.f32 0.0, %v674
  %v676 = vpop.f32.mrb[0].mxu0
  %v677 = vadd.f32 0.0, %v676
  %v678 = vpop.f32.mrb[0].mxu0
  %v679 = vadd.f32 0.0, %v678
  %680 = vmatprep.mubr.bf16.mxu0 0
  %681 = vmatmul.mubr.bf16.gmra.mrb[0].mxu0 %v518
  %v682 = vpop.f32.mrb[0].mxu0
  %v683 = vadd.f32 0.0, %v682
  %v684 = vpop.f32.mrb[0].mxu0
  %v685 = vadd.f32 0.0, %v684
  %v686 = vpop.f32.mrb[0].mxu0
  %v687 = vadd.f32 0.0, %v686
  %v688 = vpop.f32.mrb[0].mxu0
  %v689 = vadd.f32 0.0, %v688
  %690 = vmatprep.mubr.bf16.mxu0 0
  %691 = vmatmul.mubr.bf16.gmra.mrb[0].mxu0 %v521
  %v692 = vpop.f32.mrb[0].mxu0
  %v693 = vadd.f32 0.0, %v692
  %v694 = vpop.f32.mrb[0].mxu0
  %v695 = vadd.f32 0.0, %v694
  %v696 = vpop.f32.mrb[0].mxu0
  %v697 = vadd.f32 0.0, %v696
  %v698 = vpop.f32.mrb[0].mxu0
  %v699 = vadd.f32 0.0, %v698
  %700 = vmatprep.mubr.bf16.mxu0 0
  %701 = vmatmul.mubr.bf16.gmra.mrb[0].mxu0 %v524
  %v702 = vpop.f32.mrb[0].mxu0
  %v703 = vadd.f32 0.0, %v702
  %v704 = vpop.f32.mrb[0].mxu0
  %v705 = vadd.f32 0.0, %v704
  %v706 = vpop.f32.mrb[0].mxu0
  %v707 = vadd.f32 0.0, %v706
  %v708 = vpop.f32.mrb[0].mxu0
  %v709 = vadd.f32 0.0, %v708
  %710 = vmatprep.mubr.bf16.mxu0 0
  %711 = vmatmul.mubr.bf16.gmra.mrb[0].mxu0 %v527
  %v712 = vpop.f32.mrb[0].mxu0
  %v713 = vadd.f32 0.0, %v712
  %v714 = vpop.f32.mrb[0].mxu0
  %v715 = vadd.f32 0.0, %v714
  %v716 = vpop.f32.mrb[0].mxu0
  %v717 = vadd.f32 0.0, %v716
  %v718 = vpop.f32.mrb[0].mxu0
  %v719 = vadd.f32 0.0, %v718
  %720 = vmatprep.mubr.bf16.mxu0 0
  %721 = vmatmul.mubr.bf16.gmra.mrb[0].mxu0 %v530
  %v722 = vpop.f32.mrb[0].mxu0
  %v723 = vadd.f32 0.0, %v722
  %v724 = vpop.f32.mrb[0].mxu0
  %v725 = vadd.f32 0.0, %v724
  %v726 = vpop.f32.mrb[0].mxu0
  %v727 = vadd.f32 0.0, %v726
  %v728 = vpop.f32.mrb[0].mxu0
  %v729 = vadd.f32 0.0, %v728
  %730 = vmatprep.mubr.bf16.mxu0 0
  %731 = vmatmul.mubr.bf16.gmra.mrb[0].mxu0 %v533
  %v732 = vpop.f32.mrb[0].mxu0
  %v733 = vadd.f32 0.0, %v732
  %v734 = vpop.f32.mrb[0].mxu0
  %v735 = vadd.f32 0.0, %v734
  %v736 = vpop.f32.mrb[0].mxu0
  %v737 = vadd.f32 0.0, %v736
  %v738 = vpop.f32.mrb[0].mxu0
  %v739 = vadd.f32 0.0, %v738
  %740 = vmatprep.mubr.bf16.mxu0 0
  %741 = vmatmul.mubr.bf16.gmra.mrb[0].mxu0 %v536
  %v742 = vpop.f32.mrb[0].mxu0
  %v743 = vadd.f32 0.0, %v742
  %v744 = vpop.f32.mrb[0].mxu0
  %v745 = vadd.f32 0.0, %v744
  %v746 = vpop.f32.mrb[0].mxu0
  %v747 = vadd.f32 0.0, %v746
  %v748 = vpop.f32.mrb[0].mxu0
  %v749 = vadd.f32 0.0, %v748
  %750 = vmatprep.mubr.bf16.mxu0 0
  %751 = vmatmul.mubr.bf16.gmra.mrb[0].mxu0 %v539
  %v752 = vpop.f32.mrb[0].mxu0
  %v753 = vadd.f32 0.0, %v752
  %v754 = vpop.f32.mrb[0].mxu0
  %v755 = vadd.f32 0.0, %v754
  %v756 = vpop.f32.mrb[0].mxu0
  %v757 = vadd.f32 0.0, %v756
  %v758 = vpop.f32.mrb[0].mxu0
  %v759 = vadd.f32 0.0, %v758
  %760 = vmatprep.mubr.bf16.mxu0 0
  %761 = vmatmul.mubr.bf16.gmra.mrb[0].mxu0 %v542
  %v762 = vpop.f32.mrb[0].mxu0
  %v763 = vadd.f32 0.0, %v762
  %v764 = vpop.f32.mrb[0].mxu0
  %v765 = vadd.f32 0.0, %v764
  %v766 = vpop.f32.mrb[0].mxu0
  %v767 = vadd.f32 0.0, %v766
  %v768 = vpop.f32.mrb[0].mxu0
  %v769 = vadd.f32 0.0, %v768
  %770 = vmatprep.mubr.bf16.mxu0 0
  %771 = vmatmul.mubr.bf16.gmra.mrb[0].mxu0 %v545
  %v772 = vpop.f32.mrb[0].mxu0
  %v773 = vadd.f32 0.0, %v772
  %v774 = vpop.f32.mrb[0].mxu0
  %v775 = vadd.f32 0.0, %v774
  %v776 = vpop.f32.mrb[0].mxu0
  %v777 = vadd.f32 0.0, %v776
  %v778 = vpop.f32.mrb[0].mxu0
  %v779 = vadd.f32 0.0, %v778
  %780 = vmatprep.mubr.bf16.mxu0 0
  %781 = vmatmul.mubr.bf16.gmra.mrb[0].mxu0 %v548
  %v782 = vpop.f32.mrb[0].mxu0
  %v783 = vadd.f32 0.0, %v782
  %v784 = vpop.f32.mrb[0].mxu0
  %v785 = vadd.f32 0.0, %v784
  %v786 = vpop.f32.mrb[0].mxu0
  %v787 = vadd.f32 0.0, %v786
  %v788 = vpop.f32.mrb[0].mxu0
  %v789 = vadd.f32 0.0, %v788
  %790 = vmatprep.mubr.bf16.mxu0 0
  %791 = vmatmul.mubr.bf16.gmra.mrb[0].mxu0 %v551
  %v792 = vpop.f32.mrb[0].mxu0
  %v793 = vadd.f32 0.0, %v792
  %v794 = vpop.f32.mrb[0].mxu0
  %v795 = vadd.f32 0.0, %v794
  %v796 = vpop.f32.mrb[0].mxu0
  %v797 = vadd.f32 0.0, %v796
  %v798 = vpop.f32.mrb[0].mxu0
  %v799 = vadd.f32 0.0, %v798
  %800 = vmatprep.mubr.bf16.mxu0 0
  %801 = vmatmul.mubr.bf16.gmra.mrb[0].mxu0 %v554
  %v802 = vpop.f32.mrb[0].mxu0
  %v803 = vadd.f32 0.0, %v802
  %v804 = vpop.f32.mrb[0].mxu0
  %v805 = vadd.f32 0.0, %v804
  %v806 = vpop.f32.mrb[0].mxu0
  %v807 = vadd.f32 0.0, %v806
  %v808 = vpop.f32.mrb[0].mxu0
  %v809 = vadd.f32 0.0, %v808
  %810 = vmatprep.mubr.bf16.mxu0 0
  %811 = vmatmul.mubr.bf16.gmra.mrb[0].mxu0 %v557
  %v812 = vpop.f32.mrb[0].mxu0
  %v813 = vadd.f32 0.0, %v812
  %v814 = vpop.f32.mrb[0].mxu0
  %v815 = vadd.f32 0.0, %v814
  %v816 = vpop.f32.mrb[0].mxu0
  %v817 = vadd.f32 0.0, %v816
  %v818 = vpop.f32.mrb[0].mxu0
  %v819 = vadd.f32 0.0, %v818
  %820 = vmatprep.mubr.bf16.mxu0 0
  %821 = vmatmul.mubr.bf16.gmra.mrb[0].mxu0 %v560
  %v822 = vpop.f32.mrb[0].mxu0
  %v823 = vadd.f32 0.0, %v822
  %v824 = vpop.f32.mrb[0].mxu0
  %v825 = vadd.f32 0.0, %v824
  %v826 = vpop.f32.mrb[0].mxu0
  %v827 = vadd.f32 0.0, %v826
  %v828 = vpop.f32.mrb[0].mxu0
  %v829 = vadd.f32 0.0, %v828
  %830 = vmatprep.mubr.bf16.mxu0 0
  %831 = vmatmul.mubr.bf16.gmra.mrb[0].mxu0 %v563
  %v832 = vpop.f32.mrb[0].mxu0
  %v833 = vadd.f32 0.0, %v832
  %v834 = vpop.f32.mrb[0].mxu0
  %v835 = vadd.f32 0.0, %v834
  %v836 = vpop.f32.mrb[0].mxu0
  %v837 = vadd.f32 0.0, %v836
  %v838 = vpop.f32.mrb[0].mxu0
  %v839 = vadd.f32 0.0, %v838
  %840 = vmatprep.mubr.bf16.mxu0 0
  %841 = vmatmul.mubr.bf16.gmra.mrb[0].mxu0 %v566
  %v842 = vpop.f32.mrb[0].mxu0
  %v843 = vadd.f32 0.0, %v842
  %v844 = vpop.f32.mrb[0].mxu0
  %v845 = vadd.f32 0.0, %v844
  %v846 = vpop.f32.mrb[0].mxu0
  %v847 = vadd.f32 0.0, %v846
  %v848 = vpop.f32.mrb[0].mxu0
  %v849 = vadd.f32 0.0, %v848
  %850 = vdwg.mxu0
  %851 = vst [vmem:[#allocation2] sm:$0xff] %v613
  %vm852 = vcmask 523264
  %853 = vst.msk [vmem:[#allocation2 + $0x8] sm:$0xff] %vm852, %v615
  %854 = vst [vmem:[#allocation2 + $0x10] sm:$0xff] %v617
  %855 = vst.msk [vmem:[#allocation2 + $0x18] sm:$0xff] %vm852, %v619
  %856 = vst [vmem:[#allocation2 + $0x20] sm:$0xff] %v623
  %857 = vst.msk [vmem:[#allocation2 + $0x28] sm:$0xff] %vm852, %v625
  %858 = vst [vmem:[#allocation2 + $0x30] sm:$0xff] %v627
  %859 = vst.msk [vmem:[#allocation2 + $0x38] sm:$0xff] %vm852, %v629
  %860 = vst [vmem:[#allocation2 + $0x40] sm:$0xff] %v633
  %861 = vst.msk [vmem:[#allocation2 + $0x48] sm:$0xff] %vm852, %v635
  %862 = vst [vmem:[#allocation2 + $0x50] sm:$0xff] %v637
  %863 = vst.msk [vmem:[#allocation2 + $0x58] sm:$0xff] %vm852, %v639
  %864 = vst [vmem:[#allocation2 + $0x60] sm:$0xff] %v643
  %865 = vst.msk [vmem:[#allocation2 + $0x68] sm:$0xff] %vm852, %v645
  %866 = vst [vmem:[#allocation2 + $0x70] sm:$0xff] %v647
  %867 = vst.msk [vmem:[#allocation2 + $0x78] sm:$0xff] %vm852, %v649
  %868 = vst [vmem:[#allocation2 + $0x80] sm:$0xff] %v653
  %869 = vst.msk [vmem:[#allocation2 + $0x88] sm:$0xff] %vm852, %v655
  %870 = vst [vmem:[#allocation2 + $0x90] sm:$0xff] %v657
  %871 = vst.msk [vmem:[#allocation2 + $0x98] sm:$0xff] %vm852, %v659
  %872 = vst [vmem:[#allocation2 + $0xa0] sm:$0xff] %v663
  %873 = vst.msk [vmem:[#allocation2 + $0xa8] sm:$0xff] %vm852, %v665
  %874 = vst [vmem:[#allocation2 + $0xb0] sm:$0xff] %v667
  %875 = vst.msk [vmem:[#allocation2 + $0xb8] sm:$0xff] %vm852, %v669
  %876 = vst [vmem:[#allocation2 + $0xc0] sm:$0xff] %v673
  %877 = vst.msk [vmem:[#allocation2 + $0xc8] sm:$0xff] %vm852, %v675
  %878 = vst [vmem:[#allocation2 + $0xd0] sm:$0xff] %v677
  %879 = vst.msk [vmem:[#allocation2 + $0xd8] sm:$0xff] %vm852, %v679
  %880 = vst [vmem:[#allocation2 + $0xe0] sm:$0xff] %v683
  %881 = vst.msk [vmem:[#allocation2 + $0xe8] sm:$0xff] %vm852, %v685
  %882 = vst [vmem:[#allocation2 + $0xf0] sm:$0xff] %v687
  %883 = vst.msk [vmem:[#allocation2 + $0xf8] sm:$0xff] %vm852, %v689
  %884 = vst [vmem:[#allocation2 + $0x100] sm:$0xff] %v693
  %885 = vst.msk [vmem:[#allocation2 + $0x108] sm:$0xff] %vm852, %v695
  %886 = vst [vmem:[#allocation2 + $0x110] sm:$0xff] %v697
  %887 = vst.msk [vmem:[#allocation2 + $0x118] sm:$0xff] %vm852, %v699
  %888 = vst [vmem:[#allocation2 + $0x120] sm:$0xff] %v703
  %889 = vst.msk [vmem:[#allocation2 + $0x128] sm:$0xff] %vm852, %v705
  %890 = vst [vmem:[#allocation2 + $0x130] sm:$0xff] %v707
  %891 = vst.msk [vmem:[#allocation2 + $0x138] sm:$0xff] %vm852, %v709
  %892 = vst [vmem:[#allocation2 + $0x140] sm:$0xff] %v713
  %893 = vst.msk [vmem:[#allocation2 + $0x148] sm:$0xff] %vm852, %v715
  %894 = vst [vmem:[#allocation2 + $0x150] sm:$0xff] %v717
  %895 = vst.msk [vmem:[#allocation2 + $0x158] sm:$0xff] %vm852, %v719
  %896 = vst [vmem:[#allocation2 + $0x160] sm:$0xff] %v723
  %897 = vst.msk [vmem:[#allocation2 + $0x168] sm:$0xff] %vm852, %v725
  %898 = vst [vmem:[#allocation2 + $0x170] sm:$0xff] %v727
  %899 = vst.msk [vmem:[#allocation2 + $0x178] sm:$0xff] %vm852, %v729
  %900 = vst [vmem:[#allocation2 + $0x180] sm:$0xff] %v733
  %901 = vst.msk [vmem:[#allocation2 + $0x188] sm:$0xff] %vm852, %v735
  %902 = vst [vmem:[#allocation2 + $0x190] sm:$0xff] %v737
  %903 = vst.msk [vmem:[#allocation2 + $0x198] sm:$0xff] %vm852, %v739
  %904 = vst [vmem:[#allocation2 + $0x1a0] sm:$0xff] %v743
  %905 = vst.msk [vmem:[#allocation2 + $0x1a8] sm:$0xff] %vm852, %v745
  %906 = vst [vmem:[#allocation2 + $0x1b0] sm:$0xff] %v747
  %907 = vst.msk [vmem:[#allocation2 + $0x1b8] sm:$0xff] %vm852, %v749
  %908 = vst [vmem:[#allocation2 + $0x1c0] sm:$0xff] %v753
  %909 = vst.msk [vmem:[#allocation2 + $0x1c8] sm:$0xff] %vm852, %v755
  %910 = vst [vmem:[#allocation2 + $0x1d0] sm:$0xff] %v757
  %911 = vst.msk [vmem:[#allocation2 + $0x1d8] sm:$0xff] %vm852, %v759
  %912 = vst [vmem:[#allocation2 + $0x1e0] sm:$0xff] %v763
  %913 = vst.msk [vmem:[#allocation2 + $0x1e8] sm:$0xff] %vm852, %v765
  %914 = vst [vmem:[#allocation2 + $0x1f0] sm:$0xff] %v767
  %915 = vst.msk [vmem:[#allocation2 + $0x1f8] sm:$0xff] %vm852, %v769
  %916 = vst [vmem:[#allocation2 + $0x200] sm:$0xff] %v773
  %917 = vst.msk [vmem:[#allocation2 + $0x208] sm:$0xff] %vm852, %v775
  %918 = vst [vmem:[#allocation2 + $0x210] sm:$0xff] %v777
  %919 = vst.msk [vmem:[#allocation2 + $0x218] sm:$0xff] %vm852, %v779
  %920 = vst [vmem:[#allocation2 + $0x220] sm:$0xff] %v783
  %921 = vst.msk [vmem:[#allocation2 + $0x228] sm:$0xff] %vm852, %v785
  %922 = vst [vmem:[#allocation2 + $0x230] sm:$0xff] %v787
  %923 = vst.msk [vmem:[#allocation2 + $0x238] sm:$0xff] %vm852, %v789
  %924 = vst [vmem:[#allocation2 + $0x240] sm:$0xff] %v793
  %925 = vst.msk [vmem:[#allocation2 + $0x248] sm:$0xff] %vm852, %v795
  %926 = vst [vmem:[#allocation2 + $0x250] sm:$0xff] %v797
  %927 = vst.msk [vmem:[#allocation2 + $0x258] sm:$0xff] %vm852, %v799
  %928 = vst [vmem:[#allocation2 + $0x260] sm:$0xff] %v803
  %929 = vst.msk [vmem:[#allocation2 + $0x268] sm:$0xff] %vm852, %v805
  %930 = vst [vmem:[#allocation2 + $0x270] sm:$0xff] %v807
  %931 = vst.msk [vmem:[#allocation2 + $0x278] sm:$0xff] %vm852, %v809
  %932 = vst [vmem:[#allocation2 + $0x280] sm:$0xff] %v813
  %933 = vst.msk [vmem:[#allocation2 + $0x288] sm:$0xff] %vm852, %v815
  %934 = vst [vmem:[#allocation2 + $0x290] sm:$0xff] %v817
  %935 = vst.msk [vmem:[#allocation2 + $0x298] sm:$0xff] %vm852, %v819
  %936 = vst [vmem:[#allocation2 + $0x2a0] sm:$0xff] %v823
  %937 = vst.msk [vmem:[#allocation2 + $0x2a8] sm:$0xff] %vm852, %v825
  %938 = vst [vmem:[#allocation2 + $0x2b0] sm:$0xff] %v827
  %939 = vst.msk [vmem:[#allocation2 + $0x2b8] sm:$0xff] %vm852, %v829
  %940 = vst [vmem:[#allocation2 + $0x2c0] sm:$0xff] %v833
  %941 = vst.msk [vmem:[#allocation2 + $0x2c8] sm:$0xff] %vm852, %v835
  %942 = vst [vmem:[#allocation2 + $0x2d0] sm:$0xff] %v837
  %943 = vst.msk [vmem:[#allocation2 + $0x2d8] sm:$0xff] %vm852, %v839
  %944 = vst [vmem:[#allocation2 + $0x2e0] sm:$0xff] %v843
  %945 = vst.msk [vmem:[#allocation2 + $0x2e8] sm:$0xff] %vm852, %v845
  %946 = vst [vmem:[#allocation2 + $0x2f0] sm:$0xff] %v847
  %947 = vst.msk [vmem:[#allocation2 + $0x2f8] sm:$0xff] %vm852, %v849
  %v948 = vld [vmem:[%s2] sm:$0xff]
  %v949 = vld [vmem:[%s2 + $0x8] sm:$0xff]
  %v950 = vld [vmem:[%s2 + $0x10] sm:$0xff]
  %v951 = vld [vmem:[%s2 + $0x18] sm:$0xff]
  %v952 = vld [vmem:[%s2 + $0x20] sm:$0xff]
  %v953 = vld [vmem:[%s2 + $0x28] sm:$0xff]
  %v954 = vld [vmem:[%s2 + $0x30] sm:$0xff]
  %v955 = vld [vmem:[%s2 + $0x38] sm:$0xff]
  %v956 = vld [vmem:[%s3] sm:$0x1]
  %v958 = vlaneseq
  %v959 = vshrl.u32 %v958, 7
  %v960 = vsub.s32 0, %v959
  %v961 = vrot.slane %v956, %v960
  %v971 = vunpack.c.l.b16 %v948
  %v972 = vunpack.c.h.b16 %v948
  %v973 = vunpack.c.l.b16 %v949
  %v974 = vunpack.c.h.b16 %v949
  %v975 = vunpack.c.l.b16 %v950
  %v976 = vunpack.c.h.b16 %v950
  %v977 = vunpack.c.l.b16 %v951
  %v978 = vunpack.c.h.b16 %v951
  %v979 = vunpack.c.l.b16 %v952
  %v980 = vunpack.c.h.b16 %v952
  %v981 = vunpack.c.l.b16 %v953
  %v982 = vunpack.c.h.b16 %v953
  %v983 = vunpack.c.l.b16 %v954
  %v984 = vunpack.c.h.b16 %v954
  %v985 = vunpack.c.l.b16 %v955
  %v986 = vunpack.c.h.b16 %v955
  %v987 = vpack.c.b16 %v973, %v971
  %v988 = vpack.c.b16 %v974, %v972
  %v989 = vpack.c.b16 %v977, %v975
  %v990 = vpack.c.b16 %v978, %v976
  %v991 = vpack.c.b16 %v981, %v979
  %v992 = vpack.c.b16 %v982, %v980
  %v993 = vpack.c.b16 %v985, %v983
  %v994 = vpack.c.b16 %v986, %v984
  %v1004 = vsel %vm852, 0, 0
  %1006 = vmatprep.subr.bf16.mxu0 %v988
  %1007 = vmatpush1.bf16.msra.mxu0 %v987
  %1008 = vmatprep.subr.bf16.mxu0 %v990
  %1009 = vmatpush1.bf16.msra.mxu0 %v989
  %1010 = vmatprep.subr.bf16.mxu0 %v992
  %1011 = vmatpush1.bf16.msra.mxu0 %v991
  %1012 = vmatprep.subr.bf16.mxu0 %v994
  %1013 = vmatpush1.bf16.msra.mxu0 %v993
  %1014 = vmatprep.subr.bf16.mxu0 0
  %1015 = vmatpush1.bf16.msra.mxu0 0
  %1016 = vmatprep.subr.bf16.mxu0 0
  %1017 = vmatpush1.bf16.msra.mxu0 0
  %1018 = vmatprep.subr.bf16.mxu0 0
  %1019 = vmatpush1.bf16.msra.mxu0 0
  %1020 = vmatprep.subr.bf16.mxu0 0
  %1021 = vmatpush1.bf16.msra.mxu0 0
  %1022 = vmatprep.subr.bf16.mxu0 0
  %1023 = vmatpush1.bf16.msra.mxu0 0
  %1024 = vmatprep.subr.bf16.mxu0 0
  %1025 = vmatpush1.bf16.msra.mxu0 0
  %1026 = vmatprep.subr.bf16.mxu0 0
  %1027 = vmatpush1.bf16.msra.mxu0 0
  %1028 = vmatprep.subr.bf16.mxu0 0
  %1029 = vmatpush1.bf16.msra.mxu0 0
  %1030 = vmatprep.subr.bf16.mxu0 0
  %1031 = vmatpush1.bf16.msra.mxu0 0
  %1032 = vmatprep.subr.bf16.mxu0 0
  %1033 = vmatpush1.bf16.msra.mxu0 0
  %1034 = vmatprep.subr.bf16.mxu0 0
  %1035 = vmatpush1.bf16.msra.mxu0 0
  %1036 = vmatprep.subr.bf16.mxu0 0
  %1037 = vmatpush1.bf16.msra.mxu0 0
  %1038 = vmatprep.mubr.bf16.mxu0 0
  %1039 = vmatmul.mubr.bf16.gmra.mrb[0].mxu0 %v1004
  %v1040 = vpop.f32.mrb[0].mxu0
  %v1041 = vadd.f32 0.0, %v1040
  %v1042 = vpop.f32.mrb[0].mxu0
  %v1043 = vadd.f32 0.0, %v1042
  %v1044 = vpop.f32.mrb[0].mxu0
  %v1045 = vadd.f32 0.0, %v1044
  %v1046 = vpop.f32.mrb[0].mxu0
  %v1047 = vadd.f32 0.0, %v1046
  %1048 = vdwg.mxu0
  %v1049 = vld [vmem:[#allocation2] sm:$0xff]
  %v1050 = vld [vmem:[#allocation2 + $0x8] sm:$0xff]
  %v1051 = vld [vmem:[#allocation2 + $0x10] sm:$0xff]
  %v1052 = vld [vmem:[#allocation2 + $0x18] sm:$0xff]
  %v1053 = vadd.f32 %v1049, %v1041
  %v1054 = vadd.f32 %v1051, %v1045
  %v1055 = vmul.f32 %v1053, 0.5
  %v1056 = vmul.f32 %v1054, 0.5
  %v1057 = vtanh.pop %v1055
  %v1058 = vtanh.pop %v1056
  %v1059 = vadd.f32 %v1057, 1.0
  %v1060 = vadd.f32 %v1058, 1.0
  %v1061 = vmul.f32 %v1059, 0.5
  %v1062 = vmul.f32 %v1060, 0.5
  %v1063 = vadd.f32 %v1043, %v961
  %v1064 = vadd.f32 %v1047, %v961
  %v1065 = vmul.f32 %v1061, %v1063
  %v1066 = vmul.f32 %v1062, %v1064
  %v1067 = vadd.f32 %v1050, %v1065
  %v1068 = vadd.f32 %v1052, %v1066
  %v1069 = vtanh.pop %v1067
  %v1070 = vtanh.pop %v1068
  %v1071 = vsub.f32 1.0, %v1061
  %v1072 = vsub.f32 1.0, %v1062
  %1075 = vrot.lane.b32.xlu0 %v1069, 64
  %v1076 = vpop.permute.xlu0 %1075
  %1077 = vrot.lane.b32.xlu0 %v1070, 64
  %v1078 = vpop.permute.xlu0 %1077
  %v1081 = vmul.f32 %v1071, %v1076
  %v1082 = vmul.f32 %v1072, %v1078
  %v1083 = vmul.f32 %v1061, 0.0
  %v1084 = vmul.f32 %v1062, 0.0
  %v1085 = vadd.f32 %v1081, %v1083
  %v1086 = vadd.f32 %v1082, %v1084
  %v1087 = vpack.c.bf16 %v1086, %v1085
  %1089 = vrot.lane.b32.xlu0 %v1087, 64
  %v1090 = vpop.permute.xlu0 %1089
  %v1092 = vsel %vm852, %v1090, 0
  %1094 = vmatprep.subr.bf16.mxu0 %v988
  %1095 = vmatpush1.bf16.msra.mxu0 %v987
  %1096 = vmatprep.subr.bf16.mxu0 %v990
  %1097 = vmatpush1.bf16.msra.mxu0 %v989
  %1098 = vmatprep.subr.bf16.mxu0 %v992
  %1099 = vmatpush1.bf16.msra.mxu0 %v991
  %1100 = vmatprep.subr.bf16.mxu0 %v994
  %1101 = vmatpush1.bf16.msra.mxu0 %v993
  %1102 = vmatprep.subr.bf16.mxu0 0
  %1103 = vmatpush1.bf16.msra.mxu0 0
  %1104 = vmatprep.subr.bf16.mxu0 0
  %1105 = vmatpush1.bf16.msra.mxu0 0
  %1106 = vmatprep.subr.bf16.mxu0 0
  %1107 = vmatpush1.bf16.msra.mxu0 0
  %1108 = vmatprep.subr.bf16.mxu0 0
  %1109 = vmatpush1.bf16.msra.mxu0 0
  %1110 = vmatprep.subr.bf16.mxu0 0
  %1111 = vmatpush1.bf16.msra.mxu0 0
  %1112 = vmatprep.subr.bf16.mxu0 0
  %1113 = vmatpush1.bf16.msra.mxu0 0
  %1114 = vmatprep.subr.bf16.mxu0 0
  %1115 = vmatpush1.bf16.msra.mxu0 0
  %1116 = vmatprep.subr.bf16.mxu0 0
  %1117 = vmatpush1.bf16.msra.mxu0 0
  %1118 = vmatprep.subr.bf16.mxu0 0
  %1119 = vmatpush1.bf16.msra.mxu0 0
  %1120 = vmatprep.subr.bf16.mxu0 0
  %1121 = vmatpush1.bf16.msra.mxu0 0
  %1122 = vmatprep.subr.bf16.mxu0 0
  %1123 = vmatpush1.bf16.msra.mxu0 0
  %1124 = vmatprep.subr.bf16.mxu0 0
  %1125 = vmatpush1.bf16.msra.mxu0 0
  %1126 = vmatprep.mubr.bf16.mxu0 0
  %1127 = vmatmul.mubr.bf16.gmra.mrb[0].mxu0 %v1092
  %v1128 = vpop.f32.mrb[0].mxu0
  %v1129 = vadd.f32 0.0, %v1128
  %v1130 = vpop.f32.mrb[0].mxu0
  %v1131 = vadd.f32 0.0, %v1130
  %v1132 = vpop.f32.mrb[0].mxu0
  %v1133 = vadd.f32 0.0, %v1132
  %v1134 = vpop.f32.mrb[0].mxu0
  %v1135 = vadd.f32 0.0, %v1134
  %1136 = vdwg.mxu0
  %s1137 = scalar_lea.vmem [#allocation2], 32
  %v1138 = vld [vmem:[%s1137] sm:$0xff]
  %v1139 = vld [vmem:[%s1137 + $0x8] sm:$0xff]
  %v1140 = vld [vmem:[%s1137 + $0x10] sm:$0xff]
  %v1141 = vld [vmem:[%s1137 + $0x18] sm:$0xff]
  %v1142 = vadd.f32 %v1138, %v1129
  %v1143 = vadd.f32 %v1140, %v1133
  %v1144 = vmul.f32 %v1142, 0.5
  %v1145 = vmul.f32 %v1143, 0.5
  %v1146 = vtanh.pop %v1144
  %v1147 = vtanh.pop %v1145
  %v1148 = vadd.f32 %v1146, 1.0
  %v1149 = vadd.f32 %v1147, 1.0
  %v1150 = vmul.f32 %v1148, 0.5
  %v1151 = vmul.f32 %v1149, 0.5
  %v1152 = vadd.f32 %v1131, %v961
  %v1153 = vadd.f32 %v1135, %v961
  %v1154 = vmul.f32 %v1150, %v1152
  %v1155 = vmul.f32 %v1151, %v1153
  %v1156 = vadd.f32 %v1139, %v1154
  %v1157 = vadd.f32 %v1141, %v1155
  %v1158 = vtanh.pop %v1156
  %v1159 = vtanh.pop %v1157
  %v1160 = vsub.f32 1.0, %v1150
  %v1161 = vsub.f32 1.0, %v1151
  %1164 = vrot.lane.b32.xlu0 %v1158, 64
  %v1165 = vpop.permute.xlu0 %1164
  %1166 = vrot.lane.b32.xlu0 %v1159, 64
  %v1167 = vpop.permute.xlu0 %1166
  %v1170 = vmul.f32 %v1160, %v1165
  %v1171 = vmul.f32 %v1161, %v1167
  %v1172 = vmul.f32 %v1150, %v1085
  %v1173 = vmul.f32 %v1151, %v1086
  %v1174 = vadd.f32 %v1170, %v1172
  %v1175 = vadd.f32 %v1171, %v1173
  %v1176 = vpack.c.bf16 %v1175, %v1174
  %v1178 = vsel %vm852, %v1090, %v1176
  %1180 = vst [vmem:[#allocation3] sm:$0xff] %v1178
  %1182 = vrot.lane.b32.xlu0 %v1176, 64
  %v1183 = vpop.permute.xlu0 %1182
  %v1185 = vsel %vm852, %v1183, 0
  %1187 = vmatprep.subr.bf16.mxu0 %v988
  %1188 = vmatpush1.bf16.msra.mxu0 %v987
  %1189 = vmatprep.subr.bf16.mxu0 %v990
  %1190 = vmatpush1.bf16.msra.mxu0 %v989
  %1191 = vmatprep.subr.bf16.mxu0 %v992
  %1192 = vmatpush1.bf16.msra.mxu0 %v991
  %1193 = vmatprep.subr.bf16.mxu0 %v994
  %1194 = vmatpush1.bf16.msra.mxu0 %v993
  %1195 = vmatprep.subr.bf16.mxu0 0
  %1196 = vmatpush1.bf16.msra.mxu0 0
  %1197 = vmatprep.subr.bf16.mxu0 0
  %1198 = vmatpush1.bf16.msra.mxu0 0
  %1199 = vmatprep.subr.bf16.mxu0 0
  %1200 = vmatpush1.bf16.msra.mxu0 0
  %1201 = vmatprep.subr.bf16.mxu0 0
  %1202 = vmatpush1.bf16.msra.mxu0 0
  %1203 = vmatprep.subr.bf16.mxu0 0
  %1204 = vmatpush1.bf16.msra.mxu0 0
  %1205 = vmatprep.subr.bf16.mxu0 0
  %1206 = vmatpush1.bf16.msra.mxu0 0
  %1207 = vmatprep.subr.bf16.mxu0 0
  %1208 = vmatpush1.bf16.msra.mxu0 0
  %1209 = vmatprep.subr.bf16.mxu0 0
  %1210 = vmatpush1.bf16.msra.mxu0 0
  %1211 = vmatprep.subr.bf16.mxu0 0
  %1212 = vmatpush1.bf16.msra.mxu0 0
  %1213 = vmatprep.subr.bf16.mxu0 0
  %1214 = vmatpush1.bf16.msra.mxu0 0
  %1215 = vmatprep.subr.bf16.mxu0 0
  %1216 = vmatpush1.bf16.msra.mxu0 0
  %1217 = vmatprep.subr.bf16.mxu0 0
  %1218 = vmatpush1.bf16.msra.mxu0 0
  %1219 = vmatprep.mubr.bf16.mxu0 0
  %1220 = vmatmul.mubr.bf16.gmra.mrb[0].mxu0 %v1185
  %v1221 = vpop.f32.mrb[0].mxu0
  %v1222 = vadd.f32 0.0, %v1221
  %v1223 = vpop.f32.mrb[0].mxu0
  %v1224 = vadd.f32 0.0, %v1223
  %v1225 = vpop.f32.mrb[0].mxu0
  %v1226 = vadd.f32 0.0, %v1225
  %v1227 = vpop.f32.mrb[0].mxu0
  %v1228 = vadd.f32 0.0, %v1227
  %1229 = vdwg.mxu0
  %s1230 = scalar_lea.vmem [#allocation2], 64
  %v1231 = vld [vmem:[%s1230] sm:$0xff]
  %v1232 = vld [vmem:[%s1230 + $0x8] sm:$0xff]
  %v1233 = vld [vmem:[%s1230 + $0x10] sm:$0xff]
  %v1234 = vld [vmem:[%s1230 + $0x18] sm:$0xff]
  %v1235 = vadd.f32 %v1231, %v1222
  %v1236 = vadd.f32 %v1233, %v1226
  %v1237 = vmul.f32 %v1235, 0.5
  %v1238 = vmul.f32 %v1236, 0.5
  %v1239 = vtanh.pop %v1237
  %v1240 = vtanh.pop %v1238
  %v1241 = vadd.f32 %v1239, 1.0
  %v1242 = vadd.f32 %v1240, 1.0
  %v1243 = vmul.f32 %v1241, 0.5
  %v1244 = vmul.f32 %v1242, 0.5
  %v1245 = vadd.f32 %v1224, %v961
  %v1246 = vadd.f32 %v1228, %v961
  %v1247 = vmul.f32 %v1243, %v1245
  %v1248 = vmul.f32 %v1244, %v1246
  %v1249 = vadd.f32 %v1232, %v1247
  %v1250 = vadd.f32 %v1234, %v1248
  %v1251 = vtanh.pop %v1249
  %v1252 = vtanh.pop %v1250
  %v1253 = vsub.f32 1.0, %v1243
  %v1254 = vsub.f32 1.0, %v1244
  %1257 = vrot.lane.b32.xlu0 %v1251, 64
  %v1258 = vpop.permute.xlu0 %1257
  %1259 = vrot.lane.b32.xlu0 %v1252, 64
  %v1260 = vpop.permute.xlu0 %1259
  %v1263 = vmul.f32 %v1253, %v1258
  %v1264 = vmul.f32 %v1254, %v1260
  %v1265 = vmul.f32 %v1243, %v1174
  %v1266 = vmul.f32 %v1244, %v1175
  %v1267 = vadd.f32 %v1263, %v1265
  %v1268 = vadd.f32 %v1264, %v1266
  %v1269 = vpack.c.bf16 %v1268, %v1267
  %1271 = vrot.lane.b32.xlu0 %v1269, 64
  %v1272 = vpop.permute.xlu0 %1271
  %v1274 = vsel %vm852, %v1272, 0
  %1276 = vmatprep.subr.bf16.mxu0 %v988
  %1277 = vmatpush1.bf16.msra.mxu0 %v987
  %1278 = vmatprep.subr.bf16.mxu0 %v990
  %1279 = vmatpush1.bf16.msra.mxu0 %v989
  %1280 = vmatprep.subr.bf16.mxu0 %v992
  %1281 = vmatpush1.bf16.msra.mxu0 %v991
  %1282 = vmatprep.subr.bf16.mxu0 %v994
  %1283 = vmatpush1.bf16.msra.mxu0 %v993
  %1284 = vmatprep.subr.bf16.mxu0 0
  %1285 = vmatpush1.bf16.msra.mxu0 0
  %1286 = vmatprep.subr.bf16.mxu0 0
  %1287 = vmatpush1.bf16.msra.mxu0 0
  %1288 = vmatprep.subr.bf16.mxu0 0
  %1289 = vmatpush1.bf16.msra.mxu0 0
  %1290 = vmatprep.subr.bf16.mxu0 0
  %1291 = vmatpush1.bf16.msra.mxu0 0
  %1292 = vmatprep.subr.bf16.mxu0 0
  %1293 = vmatpush1.bf16.msra.mxu0 0
  %1294 = vmatprep.subr.bf16.mxu0 0
  %1295 = vmatpush1.bf16.msra.mxu0 0
  %1296 = vmatprep.subr.bf16.mxu0 0
  %1297 = vmatpush1.bf16.msra.mxu0 0
  %1298 = vmatprep.subr.bf16.mxu0 0
  %1299 = vmatpush1.bf16.msra.mxu0 0
  %1300 = vmatprep.subr.bf16.mxu0 0
  %1301 = vmatpush1.bf16.msra.mxu0 0
  %1302 = vmatprep.subr.bf16.mxu0 0
  %1303 = vmatpush1.bf16.msra.mxu0 0
  %1304 = vmatprep.subr.bf16.mxu0 0
  %1305 = vmatpush1.bf16.msra.mxu0 0
  %1306 = vmatprep.subr.bf16.mxu0 0
  %1307 = vmatpush1.bf16.msra.mxu0 0
  %1308 = vmatprep.mubr.bf16.mxu0 0
  %1309 = vmatmul.mubr.bf16.gmra.mrb[0].mxu0 %v1274
  %v1310 = vpop.f32.mrb[0].mxu0
  %v1311 = vadd.f32 0.0, %v1310
  %v1312 = vpop.f32.mrb[0].mxu0
  %v1313 = vadd.f32 0.0, %v1312
  %v1314 = vpop.f32.mrb[0].mxu0
  %v1315 = vadd.f32 0.0, %v1314
  %v1316 = vpop.f32.mrb[0].mxu0
  %v1317 = vadd.f32 0.0, %v1316
  %1318 = vdwg.mxu0
  %s1319 = scalar_lea.vmem [#allocation2], 96
  %v1320 = vld [vmem:[%s1319] sm:$0xff]
  %v1321 = vld [vmem:[%s1319 + $0x8] sm:$0xff]
  %v1322 = vld [vmem:[%s1319 + $0x10] sm:$0xff]
  %v1323 = vld [vmem:[%s1319 + $0x18] sm:$0xff]
  %v1324 = vadd.f32 %v1320, %v1311
  %v1325 = vadd.f32 %v1322, %v1315
  %v1326 = vmul.f32 %v1324, 0.5
  %v1327 = vmul.f32 %v1325, 0.5
  %v1328 = vtanh.pop %v1326
  %v1329 = vtanh.pop %v1327
  %v1330 = vadd.f32 %v1328, 1.0
  %v1331 = vadd.f32 %v1329, 1.0
  %v1332 = vmul.f32 %v1330, 0.5
  %v1333 = vmul.f32 %v1331, 0.5
  %v1334 = vadd.f32 %v1313, %v961
  %v1335 = vadd.f32 %v1317, %v961
  %v1336 = vmul.f32 %v1332, %v1334
  %v1337 = vmul.f32 %v1333, %v1335
  %v1338 = vadd.f32 %v1321, %v1336
  %v1339 = vadd.f32 %v1323, %v1337
  %v1340 = vtanh.pop %v1338
  %v1341 = vtanh.pop %v1339
  %v1342 = vsub.f32 1.0, %v1332
  %v1343 = vsub.f32 1.0, %v1333
  %1346 = vrot.lane.b32.xlu0 %v1340, 64
  %v1347 = vpop.permute.xlu0 %1346
  %1348 = vrot.lane.b32.xlu0 %v1341, 64
  %v1349 = vpop.permute.xlu0 %1348
  %v1352 = vmul.f32 %v1342, %v1347
  %v1353 = vmul.f32 %v1343, %v1349
  %v1354 = vmul.f32 %v1332, %v1267
  %v1355 = vmul.f32 %v1333, %v1268
  %v1356 = vadd.f32 %v1352, %v1354
  %v1357 = vadd.f32 %v1353, %v1355
  %v1358 = vpack.c.bf16 %v1357, %v1356
  %v1360 = vsel %vm852, %v1272, %v1358
  %1362 = vst [vmem:[#allocation3 + $0x8] sm:$0xff] %v1360
  %1364 = vrot.lane.b32.xlu0 %v1358, 64
  %v1365 = vpop.permute.xlu0 %1364
  %v1367 = vsel %vm852, %v1365, 0
  %1369 = vmatprep.subr.bf16.mxu0 %v988
  %1370 = vmatpush1.bf16.msra.mxu0 %v987
  %1371 = vmatprep.subr.bf16.mxu0 %v990
  %1372 = vmatpush1.bf16.msra.mxu0 %v989
  %1373 = vmatprep.subr.bf16.mxu0 %v992
  %1374 = vmatpush1.bf16.msra.mxu0 %v991
  %1375 = vmatprep.subr.bf16.mxu0 %v994
  %1376 = vmatpush1.bf16.msra.mxu0 %v993
  %1377 = vmatprep.subr.bf16.mxu0 0
  %1378 = vmatpush1.bf16.msra.mxu0 0
  %1379 = vmatprep.subr.bf16.mxu0 0
  %1380 = vmatpush1.bf16.msra.mxu0 0
  %1381 = vmatprep.subr.bf16.mxu0 0
  %1382 = vmatpush1.bf16.msra.mxu0 0
  %1383 = vmatprep.subr.bf16.mxu0 0
  %1384 = vmatpush1.bf16.msra.mxu0 0
  %1385 = vmatprep.subr.bf16.mxu0 0
  %1386 = vmatpush1.bf16.msra.mxu0 0
  %1387 = vmatprep.subr.bf16.mxu0 0
  %1388 = vmatpush1.bf16.msra.mxu0 0
  %1389 = vmatprep.subr.bf16.mxu0 0
  %1390 = vmatpush1.bf16.msra.mxu0 0
  %1391 = vmatprep.subr.bf16.mxu0 0
  %1392 = vmatpush1.bf16.msra.mxu0 0
  %1393 = vmatprep.subr.bf16.mxu0 0
  %1394 = vmatpush1.bf16.msra.mxu0 0
  %1395 = vmatprep.subr.bf16.mxu0 0
  %1396 = vmatpush1.bf16.msra.mxu0 0
  %1397 = vmatprep.subr.bf16.mxu0 0
  %1398 = vmatpush1.bf16.msra.mxu0 0
  %1399 = vmatprep.subr.bf16.mxu0 0
  %1400 = vmatpush1.bf16.msra.mxu0 0
  %1401 = vmatprep.mubr.bf16.mxu0 0
  %1402 = vmatmul.mubr.bf16.gmra.mrb[0].mxu0 %v1367
  %v1403 = vpop.f32.mrb[0].mxu0
  %v1404 = vadd.f32 0.0, %v1403
  %v1405 = vpop.f32.mrb[0].mxu0
  %v1406 = vadd.f32 0.0, %v1405
  %v1407 = vpop.f32.mrb[0].mxu0
  %v1408 = vadd.f32 0.0, %v1407
  %v1409 = vpop.f32.mrb[0].mxu0
  %v1410 = vadd.f32 0.0, %v1409
  %1411 = vdwg.mxu0
  %s1412 = scalar_lea.vmem [#allocation2], 128
  %v1413 = vld [vmem:[%s1412] sm:$0xff]
  %v1414 = vld [vmem:[%s1412 + $0x8] sm:$0xff]
  %v1415 = vld [vmem:[%s1412 + $0x10] sm:$0xff]
  %v1416 = vld [vmem:[%s1412 + $0x18] sm:$0xff]
  %v1417 = vadd.f32 %v1413, %v1404
  %v1418 = vadd.f32 %v1415, %v1408
  %v1419 = vmul.f32 %v1417, 0.5
  %v1420 = vmul.f32 %v1418, 0.5
  %v1421 = vtanh.pop %v1419
  %v1422 = vtanh.pop %v1420
  %v1423 = vadd.f32 %v1421, 1.0
  %v1424 = vadd.f32 %v1422, 1.0
  %v1425 = vmul.f32 %v1423, 0.5
  %v1426 = vmul.f32 %v1424, 0.5
  %v1427 = vadd.f32 %v1406, %v961
  %v1428 = vadd.f32 %v1410, %v961
  %v1429 = vmul.f32 %v1425, %v1427
  %v1430 = vmul.f32 %v1426, %v1428
  %v1431 = vadd.f32 %v1414, %v1429
  %v1432 = vadd.f32 %v1416, %v1430
  %v1433 = vtanh.pop %v1431
  %v1434 = vtanh.pop %v1432
  %v1435 = vsub.f32 1.0, %v1425
  %v1436 = vsub.f32 1.0, %v1426
  %1439 = vrot.lane.b32.xlu0 %v1433, 64
  %v1440 = vpop.permute.xlu0 %1439
  %1441 = vrot.lane.b32.xlu0 %v1434, 64
  %v1442 = vpop.permute.xlu0 %1441
  %v1445 = vmul.f32 %v1435, %v1440
  %v1446 = vmul.f32 %v1436, %v1442
  %v1447 = vmul.f32 %v1425, %v1356
  %v1448 = vmul.f32 %v1426, %v1357
  %v1449 = vadd.f32 %v1445, %v1447
  %v1450 = vadd.f32 %v1446, %v1448
  %v1451 = vpack.c.bf16 %v1450, %v1449
  %1453 = vrot.lane.b32.xlu0 %v1451, 64
  %v1454 = vpop.permute.xlu0 %1453
  %v1456 = vsel %vm852, %v1454, 0
  %1458 = vmatprep.subr.bf16.mxu0 %v988
  %1459 = vmatpush1.bf16.msra.mxu0 %v987
  %1460 = vmatprep.subr.bf16.mxu0 %v990
  %1461 = vmatpush1.bf16.msra.mxu0 %v989
  %1462 = vmatprep.subr.bf16.mxu0 %v992
  %1463 = vmatpush1.bf16.msra.mxu0 %v991
  %1464 = vmatprep.subr.bf16.mxu0 %v994
  %1465 = vmatpush1.bf16.msra.mxu0 %v993
  %1466 = vmatprep.subr.bf16.mxu0 0
  %1467 = vmatpush1.bf16.msra.mxu0 0
  %1468 = vmatprep.subr.bf16.mxu0 0
  %1469 = vmatpush1.bf16.msra.mxu0 0
  %1470 = vmatprep.subr.bf16.mxu0 0
  %1471 = vmatpush1.bf16.msra.mxu0 0
  %1472 = vmatprep.subr.bf16.mxu0 0
  %1473 = vmatpush1.bf16.msra.mxu0 0
  %1474 = vmatprep.subr.bf16.mxu0 0
  %1475 = vmatpush1.bf16.msra.mxu0 0
  %1476 = vmatprep.subr.bf16.mxu0 0
  %1477 = vmatpush1.bf16.msra.mxu0 0
  %1478 = vmatprep.subr.bf16.mxu0 0
  %1479 = vmatpush1.bf16.msra.mxu0 0
  %1480 = vmatprep.subr.bf16.mxu0 0
  %1481 = vmatpush1.bf16.msra.mxu0 0
  %1482 = vmatprep.subr.bf16.mxu0 0
  %1483 = vmatpush1.bf16.msra.mxu0 0
  %1484 = vmatprep.subr.bf16.mxu0 0
  %1485 = vmatpush1.bf16.msra.mxu0 0
  %1486 = vmatprep.subr.bf16.mxu0 0
  %1487 = vmatpush1.bf16.msra.mxu0 0
  %1488 = vmatprep.subr.bf16.mxu0 0
  %1489 = vmatpush1.bf16.msra.mxu0 0
  %1490 = vmatprep.mubr.bf16.mxu0 0
  %1491 = vmatmul.mubr.bf16.gmra.mrb[0].mxu0 %v1456
  %v1492 = vpop.f32.mrb[0].mxu0
  %v1493 = vadd.f32 0.0, %v1492
  %v1494 = vpop.f32.mrb[0].mxu0
  %v1495 = vadd.f32 0.0, %v1494
  %v1496 = vpop.f32.mrb[0].mxu0
  %v1497 = vadd.f32 0.0, %v1496
  %v1498 = vpop.f32.mrb[0].mxu0
  %v1499 = vadd.f32 0.0, %v1498
  %1500 = vdwg.mxu0
  %s1501 = scalar_lea.vmem [#allocation2], 160
  %v1502 = vld [vmem:[%s1501] sm:$0xff]
  %v1503 = vld [vmem:[%s1501 + $0x8] sm:$0xff]
  %v1504 = vld [vmem:[%s1501 + $0x10] sm:$0xff]
  %v1505 = vld [vmem:[%s1501 + $0x18] sm:$0xff]
  %v1506 = vadd.f32 %v1502, %v1493
  %v1507 = vadd.f32 %v1504, %v1497
  %v1508 = vmul.f32 %v1506, 0.5
  %v1509 = vmul.f32 %v1507, 0.5
  %v1510 = vtanh.pop %v1508
  %v1511 = vtanh.pop %v1509
  %v1512 = vadd.f32 %v1510, 1.0
  %v1513 = vadd.f32 %v1511, 1.0
  %v1514 = vmul.f32 %v1512, 0.5
  %v1515 = vmul.f32 %v1513, 0.5
  %v1516 = vadd.f32 %v1495, %v961
  %v1517 = vadd.f32 %v1499, %v961
  %v1518 = vmul.f32 %v1514, %v1516
  %v1519 = vmul.f32 %v1515, %v1517
  %v1520 = vadd.f32 %v1503, %v1518
  %v1521 = vadd.f32 %v1505, %v1519
  %v1522 = vtanh.pop %v1520
  %v1523 = vtanh.pop %v1521
  %v1524 = vsub.f32 1.0, %v1514
  %v1525 = vsub.f32 1.0, %v1515
  %1528 = vrot.lane.b32.xlu0 %v1522, 64
  %v1529 = vpop.permute.xlu0 %1528
  %1530 = vrot.lane.b32.xlu0 %v1523, 64
  %v1531 = vpop.permute.xlu0 %1530
  %v1534 = vmul.f32 %v1524, %v1529
  %v1535 = vmul.f32 %v1525, %v1531
  %v1536 = vmul.f32 %v1514, %v1449
  %v1537 = vmul.f32 %v1515, %v1450
  %v1538 = vadd.f32 %v1534, %v1536
  %v1539 = vadd.f32 %v1535, %v1537
  %v1540 = vpack.c.bf16 %v1539, %v1538
  %v1542 = vsel %vm852, %v1454, %v1540
  %1544 = vst [vmem:[#allocation3 + $0x10] sm:$0xff] %v1542
  %1546 = vrot.lane.b32.xlu0 %v1540, 64
  %v1547 = vpop.permute.xlu0 %1546
  %v1549 = vsel %vm852, %v1547, 0
  %1551 = vmatprep.subr.bf16.mxu0 %v988
  %1552 = vmatpush1.bf16.msra.mxu0 %v987
  %1553 = vmatprep.subr.bf16.mxu0 %v990
  %1554 = vmatpush1.bf16.msra.mxu0 %v989
  %1555 = vmatprep.subr.bf16.mxu0 %v992
  %1556 = vmatpush1.bf16.msra.mxu0 %v991
  %1557 = vmatprep.subr.bf16.mxu0 %v994
  %1558 = vmatpush1.bf16.msra.mxu0 %v993
  %1559 = vmatprep.subr.bf16.mxu0 0
  %1560 = vmatpush1.bf16.msra.mxu0 0
  %1561 = vmatprep.subr.bf16.mxu0 0
  %1562 = vmatpush1.bf16.msra.mxu0 0
  %1563 = vmatprep.subr.bf16.mxu0 0
  %1564 = vmatpush1.bf16.msra.mxu0 0
  %1565 = vmatprep.subr.bf16.mxu0 0
  %1566 = vmatpush1.bf16.msra.mxu0 0
  %1567 = vmatprep.subr.bf16.mxu0 0
  %1568 = vmatpush1.bf16.msra.mxu0 0
  %1569 = vmatprep.subr.bf16.mxu0 0
  %1570 = vmatpush1.bf16.msra.mxu0 0
  %1571 = vmatprep.subr.bf16.mxu0 0
  %1572 = vmatpush1.bf16.msra.mxu0 0
  %1573 = vmatprep.subr.bf16.mxu0 0
  %1574 = vmatpush1.bf16.msra.mxu0 0
  %1575 = vmatprep.subr.bf16.mxu0 0
  %1576 = vmatpush1.bf16.msra.mxu0 0
  %1577 = vmatprep.subr.bf16.mxu0 0
  %1578 = vmatpush1.bf16.msra.mxu0 0
  %1579 = vmatprep.subr.bf16.mxu0 0
  %1580 = vmatpush1.bf16.msra.mxu0 0
  %1581 = vmatprep.subr.bf16.mxu0 0
  %1582 = vmatpush1.bf16.msra.mxu0 0
  %1583 = vmatprep.mubr.bf16.mxu0 0
  %1584 = vmatmul.mubr.bf16.gmra.mrb[0].mxu0 %v1549
  %v1585 = vpop.f32.mrb[0].mxu0
  %v1586 = vadd.f32 0.0, %v1585
  %v1587 = vpop.f32.mrb[0].mxu0
  %v1588 = vadd.f32 0.0, %v1587
  %v1589 = vpop.f32.mrb[0].mxu0
  %v1590 = vadd.f32 0.0, %v1589
  %v1591 = vpop.f32.mrb[0].mxu0
  %v1592 = vadd.f32 0.0, %v1591
  %1593 = vdwg.mxu0
  %s1594 = scalar_lea.vmem [#allocation2], 192
  %v1595 = vld [vmem:[%s1594] sm:$0xff]
  %v1596 = vld [vmem:[%s1594 + $0x8] sm:$0xff]
  %v1597 = vld [vmem:[%s1594 + $0x10] sm:$0xff]
  %v1598 = vld [vmem:[%s1594 + $0x18] sm:$0xff]
  %v1599 = vadd.f32 %v1595, %v1586
  %v1600 = vadd.f32 %v1597, %v1590
  %v1601 = vmul.f32 %v1599, 0.5
  %v1602 = vmul.f32 %v1600, 0.5
  %v1603 = vtanh.pop %v1601
  %v1604 = vtanh.pop %v1602
  %v1605 = vadd.f32 %v1603, 1.0
  %v1606 = vadd.f32 %v1604, 1.0
  %v1607 = vmul.f32 %v1605, 0.5
  %v1608 = vmul.f32 %v1606, 0.5
  %v1609 = vadd.f32 %v1588, %v961
  %v1610 = vadd.f32 %v1592, %v961
  %v1611 = vmul.f32 %v1607, %v1609
  %v1612 = vmul.f32 %v1608, %v1610
  %v1613 = vadd.f32 %v1596, %v1611
  %v1614 = vadd.f32 %v1598, %v1612
  %v1615 = vtanh.pop %v1613
  %v1616 = vtanh.pop %v1614
  %v1617 = vsub.f32 1.0, %v1607
  %v1618 = vsub.f32 1.0, %v1608
  %1621 = vrot.lane.b32.xlu0 %v1615, 64
  %v1622 = vpop.permute.xlu0 %1621
  %1623 = vrot.lane.b32.xlu0 %v1616, 64
  %v1624 = vpop.permute.xlu0 %1623
  %v1627 = vmul.f32 %v1617, %v1622
  %v1628 = vmul.f32 %v1618, %v1624
  %v1629 = vmul.f32 %v1607, %v1538
  %v1630 = vmul.f32 %v1608, %v1539
  %v1631 = vadd.f32 %v1627, %v1629
  %v1632 = vadd.f32 %v1628, %v1630
  %v1633 = vpack.c.bf16 %v1632, %v1631
  %1635 = vrot.lane.b32.xlu0 %v1633, 64
  %v1636 = vpop.permute.xlu0 %1635
  %v1638 = vsel %vm852, %v1636, 0
  %1640 = vmatprep.subr.bf16.mxu0 %v988
  %1641 = vmatpush1.bf16.msra.mxu0 %v987
  %1642 = vmatprep.subr.bf16.mxu0 %v990
  %1643 = vmatpush1.bf16.msra.mxu0 %v989
  %1644 = vmatprep.subr.bf16.mxu0 %v992
  %1645 = vmatpush1.bf16.msra.mxu0 %v991
  %1646 = vmatprep.subr.bf16.mxu0 %v994
  %1647 = vmatpush1.bf16.msra.mxu0 %v993
  %1648 = vmatprep.subr.bf16.mxu0 0
  %1649 = vmatpush1.bf16.msra.mxu0 0
  %1650 = vmatprep.subr.bf16.mxu0 0
  %1651 = vmatpush1.bf16.msra.mxu0 0
  %1652 = vmatprep.subr.bf16.mxu0 0
  %1653 = vmatpush1.bf16.msra.mxu0 0
  %1654 = vmatprep.subr.bf16.mxu0 0
  %1655 = vmatpush1.bf16.msra.mxu0 0
  %1656 = vmatprep.subr.bf16.mxu0 0
  %1657 = vmatpush1.bf16.msra.mxu0 0
  %1658 = vmatprep.subr.bf16.mxu0 0
  %1659 = vmatpush1.bf16.msra.mxu0 0
  %1660 = vmatprep.subr.bf16.mxu0 0
  %1661 = vmatpush1.bf16.msra.mxu0 0
  %1662 = vmatprep.subr.bf16.mxu0 0
  %1663 = vmatpush1.bf16.msra.mxu0 0
  %1664 = vmatprep.subr.bf16.mxu0 0
  %1665 = vmatpush1.bf16.msra.mxu0 0
  %1666 = vmatprep.subr.bf16.mxu0 0
  %1667 = vmatpush1.bf16.msra.mxu0 0
  %1668 = vmatprep.subr.bf16.mxu0 0
  %1669 = vmatpush1.bf16.msra.mxu0 0
  %1670 = vmatprep.subr.bf16.mxu0 0
  %1671 = vmatpush1.bf16.msra.mxu0 0
  %1672 = vmatprep.mubr.bf16.mxu0 0
  %1673 = vmatmul.mubr.bf16.gmra.mrb[0].mxu0 %v1638
  %v1674 = vpop.f32.mrb[0].mxu0
  %v1675 = vadd.f32 0.0, %v1674
  %v1676 = vpop.f32.mrb[0].mxu0
  %v1677 = vadd.f32 0.0, %v1676
  %v1678 = vpop.f32.mrb[0].mxu0
  %v1679 = vadd.f32 0.0, %v1678
  %v1680 = vpop.f32.mrb[0].mxu0
  %v1681 = vadd.f32 0.0, %v1680
  %1682 = vdwg.mxu0
  %s1683 = scalar_lea.vmem [#allocation2], 224
  %v1684 = vld [vmem:[%s1683] sm:$0xff]
  %v1685 = vld [vmem:[%s1683 + $0x8] sm:$0xff]
  %v1686 = vld [vmem:[%s1683 + $0x10] sm:$0xff]
  %v1687 = vld [vmem:[%s1683 + $0x18] sm:$0xff]
  %v1688 = vadd.f32 %v1684, %v1675
  %v1689 = vadd.f32 %v1686, %v1679
  %v1690 = vmul.f32 %v1688, 0.5
  %v1691 = vmul.f32 %v1689, 0.5
  %v1692 = vtanh.pop %v1690
  %v1693 = vtanh.pop %v1691
  %v1694 = vadd.f32 %v1692, 1.0
  %v1695 = vadd.f32 %v1693, 1.0
  %v1696 = vmul.f32 %v1694, 0.5
  %v1697 = vmul.f32 %v1695, 0.5
  %v1698 = vadd.f32 %v1677, %v961
  %v1699 = vadd.f32 %v1681, %v961
  %v1700 = vmul.f32 %v1696, %v1698
  %v1701 = vmul.f32 %v1697, %v1699
  %v1702 = vadd.f32 %v1685, %v1700
  %v1703 = vadd.f32 %v1687, %v1701
  %v1704 = vtanh.pop %v1702
  %v1705 = vtanh.pop %v1703
  %v1706 = vsub.f32 1.0, %v1696
  %v1707 = vsub.f32 1.0, %v1697
  %1710 = vrot.lane.b32.xlu0 %v1704, 64
  %v1711 = vpop.permute.xlu0 %1710
  %1712 = vrot.lane.b32.xlu0 %v1705, 64
  %v1713 = vpop.permute.xlu0 %1712
  %v1716 = vmul.f32 %v1706, %v1711
  %v1717 = vmul.f32 %v1707, %v1713
  %v1718 = vmul.f32 %v1696, %v1631
  %v1719 = vmul.f32 %v1697, %v1632
  %v1720 = vadd.f32 %v1716, %v1718
  %v1721 = vadd.f32 %v1717, %v1719
  %v1722 = vpack.c.bf16 %v1721, %v1720
  %v1724 = vsel %vm852, %v1636, %v1722
  %1726 = vst [vmem:[#allocation3 + $0x18] sm:$0xff] %v1724
  %1728 = vrot.lane.b32.xlu0 %v1722, 64
  %v1729 = vpop.permute.xlu0 %1728
  %v1731 = vsel %vm852, %v1729, 0
  %1733 = vmatprep.subr.bf16.mxu0 %v988
  %1734 = vmatpush1.bf16.msra.mxu0 %v987
  %1735 = vmatprep.subr.bf16.mxu0 %v990
  %1736 = vmatpush1.bf16.msra.mxu0 %v989
  %1737 = vmatprep.subr.bf16.mxu0 %v992
  %1738 = vmatpush1.bf16.msra.mxu0 %v991
  %1739 = vmatprep.subr.bf16.mxu0 %v994
  %1740 = vmatpush1.bf16.msra.mxu0 %v993
  %1741 = vmatprep.subr.bf16.mxu0 0
  %1742 = vmatpush1.bf16.msra.mxu0 0
  %1743 = vmatprep.subr.bf16.mxu0 0
  %1744 = vmatpush1.bf16.msra.mxu0 0
  %1745 = vmatprep.subr.bf16.mxu0 0
  %1746 = vmatpush1.bf16.msra.mxu0 0
  %1747 = vmatprep.subr.bf16.mxu0 0
  %1748 = vmatpush1.bf16.msra.mxu0 0
  %1749 = vmatprep.subr.bf16.mxu0 0
  %1750 = vmatpush1.bf16.msra.mxu0 0
  %1751 = vmatprep.subr.bf16.mxu0 0
  %1752 = vmatpush1.bf16.msra.mxu0 0
  %1753 = vmatprep.subr.bf16.mxu0 0
  %1754 = vmatpush1.bf16.msra.mxu0 0
  %1755 = vmatprep.subr.bf16.mxu0 0
  %1756 = vmatpush1.bf16.msra.mxu0 0
  %1757 = vmatprep.subr.bf16.mxu0 0
  %1758 = vmatpush1.bf16.msra.mxu0 0
  %1759 = vmatprep.subr.bf16.mxu0 0
  %1760 = vmatpush1.bf16.msra.mxu0 0
  %1761 = vmatprep.subr.bf16.mxu0 0
  %1762 = vmatpush1.bf16.msra.mxu0 0
  %1763 = vmatprep.subr.bf16.mxu0 0
  %1764 = vmatpush1.bf16.msra.mxu0 0
  %1765 = vmatprep.mubr.bf16.mxu0 0
  %1766 = vmatmul.mubr.bf16.gmra.mrb[0].mxu0 %v1731
  %v1767 = vpop.f32.mrb[0].mxu0
  %v1768 = vadd.f32 0.0, %v1767
  %v1769 = vpop.f32.mrb[0].mxu0
  %v1770 = vadd.f32 0.0, %v1769
  %v1771 = vpop.f32.mrb[0].mxu0
  %v1772 = vadd.f32 0.0, %v1771
  %v1773 = vpop.f32.mrb[0].mxu0
  %v1774 = vadd.f32 0.0, %v1773
  %1775 = vdwg.mxu0
  %s1776 = scalar_lea.vmem [#allocation2], 256
  %v1777 = vld [vmem:[%s1776] sm:$0xff]
  %v1778 = vld [vmem:[%s1776 + $0x8] sm:$0xff]
  %v1779 = vld [vmem:[%s1776 + $0x10] sm:$0xff]
  %v1780 = vld [vmem:[%s1776 + $0x18] sm:$0xff]
  %v1781 = vadd.f32 %v1777, %v1768
  %v1782 = vadd.f32 %v1779, %v1772
  %v1783 = vmul.f32 %v1781, 0.5
  %v1784 = vmul.f32 %v1782, 0.5
  %v1785 = vtanh.pop %v1783
  %v1786 = vtanh.pop %v1784
  %v1787 = vadd.f32 %v1785, 1.0
  %v1788 = vadd.f32 %v1786, 1.0
  %v1789 = vmul.f32 %v1787, 0.5
  %v1790 = vmul.f32 %v1788, 0.5
  %v1791 = vadd.f32 %v1770, %v961
  %v1792 = vadd.f32 %v1774, %v961
  %v1793 = vmul.f32 %v1789, %v1791
  %v1794 = vmul.f32 %v1790, %v1792
  %v1795 = vadd.f32 %v1778, %v1793
  %v1796 = vadd.f32 %v1780, %v1794
  %v1797 = vtanh.pop %v1795
  %v1798 = vtanh.pop %v1796
  %v1799 = vsub.f32 1.0, %v1789
  %v1800 = vsub.f32 1.0, %v1790
  %1803 = vrot.lane.b32.xlu0 %v1797, 64
  %v1804 = vpop.permute.xlu0 %1803
  %1805 = vrot.lane.b32.xlu0 %v1798, 64
  %v1806 = vpop.permute.xlu0 %1805
  %v1809 = vmul.f32 %v1799, %v1804
  %v1810 = vmul.f32 %v1800, %v1806
  %v1811 = vmul.f32 %v1789, %v1720
  %v1812 = vmul.f32 %v1790, %v1721
  %v1813 = vadd.f32 %v1809, %v1811
  %v1814 = vadd.f32 %v1810, %v1812
  %v1815 = vpack.c.bf16 %v1814, %v1813
  %1817 = vrot.lane.b32.xlu0 %v1815, 64
  %v1818 = vpop.permute.xlu0 %1817
  %v1820 = vsel %vm852, %v1818, 0
  %1822 = vmatprep.subr.bf16.mxu0 %v988
  %1823 = vmatpush1.bf16.msra.mxu0 %v987
  %1824 = vmatprep.subr.bf16.mxu0 %v990
  %1825 = vmatpush1.bf16.msra.mxu0 %v989
  %1826 = vmatprep.subr.bf16.mxu0 %v992
  %1827 = vmatpush1.bf16.msra.mxu0 %v991
  %1828 = vmatprep.subr.bf16.mxu0 %v994
  %1829 = vmatpush1.bf16.msra.mxu0 %v993
  %1830 = vmatprep.subr.bf16.mxu0 0
  %1831 = vmatpush1.bf16.msra.mxu0 0
  %1832 = vmatprep.subr.bf16.mxu0 0
  %1833 = vmatpush1.bf16.msra.mxu0 0
  %1834 = vmatprep.subr.bf16.mxu0 0
  %1835 = vmatpush1.bf16.msra.mxu0 0
  %1836 = vmatprep.subr.bf16.mxu0 0
  %1837 = vmatpush1.bf16.msra.mxu0 0
  %1838 = vmatprep.subr.bf16.mxu0 0
  %1839 = vmatpush1.bf16.msra.mxu0 0
  %1840 = vmatprep.subr.bf16.mxu0 0
  %1841 = vmatpush1.bf16.msra.mxu0 0
  %1842 = vmatprep.subr.bf16.mxu0 0
  %1843 = vmatpush1.bf16.msra.mxu0 0
  %1844 = vmatprep.subr.bf16.mxu0 0
  %1845 = vmatpush1.bf16.msra.mxu0 0
  %1846 = vmatprep.subr.bf16.mxu0 0
  %1847 = vmatpush1.bf16.msra.mxu0 0
  %1848 = vmatprep.subr.bf16.mxu0 0
  %1849 = vmatpush1.bf16.msra.mxu0 0
  %1850 = vmatprep.subr.bf16.mxu0 0
  %1851 = vmatpush1.bf16.msra.mxu0 0
  %1852 = vmatprep.subr.bf16.mxu0 0
  %1853 = vmatpush1.bf16.msra.mxu0 0
  %1854 = vmatprep.mubr.bf16.mxu0 0
  %1855 = vmatmul.mubr.bf16.gmra.mrb[0].mxu0 %v1820
  %v1856 = vpop.f32.mrb[0].mxu0
  %v1857 = vadd.f32 0.0, %v1856
  %v1858 = vpop.f32.mrb[0].mxu0
  %v1859 = vadd.f32 0.0, %v1858
  %v1860 = vpop.f32.mrb[0].mxu0
  %v1861 = vadd.f32 0.0, %v1860
  %v1862 = vpop.f32.mrb[0].mxu0
  %v1863 = vadd.f32 0.0, %v1862
  %1864 = vdwg.mxu0
  %s1865 = scalar_lea.vmem [#allocation2], 288
  %v1866 = vld [vmem:[%s1865] sm:$0xff]
  %v1867 = vld [vmem:[%s1865 + $0x8] sm:$0xff]
  %v1868 = vld [vmem:[%s1865 + $0x10] sm:$0xff]
  %v1869 = vld [vmem:[%s1865 + $0x18] sm:$0xff]
  %v1870 = vadd.f32 %v1866, %v1857
  %v1871 = vadd.f32 %v1868, %v1861
  %v1872 = vmul.f32 %v1870, 0.5
  %v1873 = vmul.f32 %v1871, 0.5
  %v1874 = vtanh.pop %v1872
  %v1875 = vtanh.pop %v1873
  %v1876 = vadd.f32 %v1874, 1.0
  %v1877 = vadd.f32 %v1875, 1.0
  %v1878 = vmul.f32 %v1876, 0.5
  %v1879 = vmul.f32 %v1877, 0.5
  %v1880 = vadd.f32 %v1859, %v961
  %v1881 = vadd.f32 %v1863, %v961
  %v1882 = vmul.f32 %v1878, %v1880
  %v1883 = vmul.f32 %v1879, %v1881
  %v1884 = vadd.f32 %v1867, %v1882
  %v1885 = vadd.f32 %v1869, %v1883
  %v1886 = vtanh.pop %v1884
  %v1887 = vtanh.pop %v1885
  %v1888 = vsub.f32 1.0, %v1878
  %v1889 = vsub.f32 1.0, %v1879
  %1892 = vrot.lane.b32.xlu0 %v1886, 64
  %v1893 = vpop.permute.xlu0 %1892
  %1894 = vrot.lane.b32.xlu0 %v1887, 64
  %v1895 = vpop.permute.xlu0 %1894
  %v1898 = vmul.f32 %v1888, %v1893
  %v1899 = vmul.f32 %v1889, %v1895
  %v1900 = vmul.f32 %v1878, %v1813
  %v1901 = vmul.f32 %v1879, %v1814
  %v1902 = vadd.f32 %v1898, %v1900
  %v1903 = vadd.f32 %v1899, %v1901
  %v1904 = vpack.c.bf16 %v1903, %v1902
  %v1906 = vsel %vm852, %v1818, %v1904
  %1908 = vst [vmem:[#allocation3 + $0x20] sm:$0xff] %v1906
  %1910 = vrot.lane.b32.xlu0 %v1904, 64
  %v1911 = vpop.permute.xlu0 %1910
  %v1913 = vsel %vm852, %v1911, 0
  %1915 = vmatprep.subr.bf16.mxu0 %v988
  %1916 = vmatpush1.bf16.msra.mxu0 %v987
  %1917 = vmatprep.subr.bf16.mxu0 %v990
  %1918 = vmatpush1.bf16.msra.mxu0 %v989
  %1919 = vmatprep.subr.bf16.mxu0 %v992
  %1920 = vmatpush1.bf16.msra.mxu0 %v991
  %1921 = vmatprep.subr.bf16.mxu0 %v994
  %1922 = vmatpush1.bf16.msra.mxu0 %v993
  %1923 = vmatprep.subr.bf16.mxu0 0
  %1924 = vmatpush1.bf16.msra.mxu0 0
  %1925 = vmatprep.subr.bf16.mxu0 0
  %1926 = vmatpush1.bf16.msra.mxu0 0
  %1927 = vmatprep.subr.bf16.mxu0 0
  %1928 = vmatpush1.bf16.msra.mxu0 0
  %1929 = vmatprep.subr.bf16.mxu0 0
  %1930 = vmatpush1.bf16.msra.mxu0 0
  %1931 = vmatprep.subr.bf16.mxu0 0
  %1932 = vmatpush1.bf16.msra.mxu0 0
  %1933 = vmatprep.subr.bf16.mxu0 0
  %1934 = vmatpush1.bf16.msra.mxu0 0
  %1935 = vmatprep.subr.bf16.mxu0 0
  %1936 = vmatpush1.bf16.msra.mxu0 0
  %1937 = vmatprep.subr.bf16.mxu0 0
  %1938 = vmatpush1.bf16.msra.mxu0 0
  %1939 = vmatprep.subr.bf16.mxu0 0
  %1940 = vmatpush1.bf16.msra.mxu0 0
  %1941 = vmatprep.subr.bf16.mxu0 0
  %1942 = vmatpush1.bf16.msra.mxu0 0
  %1943 = vmatprep.subr.bf16.mxu0 0
  %1944 = vmatpush1.bf16.msra.mxu0 0
  %1945 = vmatprep.subr.bf16.mxu0 0
  %1946 = vmatpush1.bf16.msra.mxu0 0
  %1947 = vmatprep.mubr.bf16.mxu0 0
  %1948 = vmatmul.mubr.bf16.gmra.mrb[0].mxu0 %v1913
  %v1949 = vpop.f32.mrb[0].mxu0
  %v1950 = vadd.f32 0.0, %v1949
  %v1951 = vpop.f32.mrb[0].mxu0
  %v1952 = vadd.f32 0.0, %v1951
  %v1953 = vpop.f32.mrb[0].mxu0
  %v1954 = vadd.f32 0.0, %v1953
  %v1955 = vpop.f32.mrb[0].mxu0
  %v1956 = vadd.f32 0.0, %v1955
  %1957 = vdwg.mxu0
  %s1958 = scalar_lea.vmem [#allocation2], 320
  %v1959 = vld [vmem:[%s1958] sm:$0xff]
  %v1960 = vld [vmem:[%s1958 + $0x8] sm:$0xff]
  %v1961 = vld [vmem:[%s1958 + $0x10] sm:$0xff]
  %v1962 = vld [vmem:[%s1958 + $0x18] sm:$0xff]
  %v1963 = vadd.f32 %v1959, %v1950
  %v1964 = vadd.f32 %v1961, %v1954
  %v1965 = vmul.f32 %v1963, 0.5
  %v1966 = vmul.f32 %v1964, 0.5
  %v1967 = vtanh.pop %v1965
  %v1968 = vtanh.pop %v1966
  %v1969 = vadd.f32 %v1967, 1.0
  %v1970 = vadd.f32 %v1968, 1.0
  %v1971 = vmul.f32 %v1969, 0.5
  %v1972 = vmul.f32 %v1970, 0.5
  %v1973 = vadd.f32 %v1952, %v961
  %v1974 = vadd.f32 %v1956, %v961
  %v1975 = vmul.f32 %v1971, %v1973
  %v1976 = vmul.f32 %v1972, %v1974
  %v1977 = vadd.f32 %v1960, %v1975
  %v1978 = vadd.f32 %v1962, %v1976
  %v1979 = vtanh.pop %v1977
  %v1980 = vtanh.pop %v1978
  %v1981 = vsub.f32 1.0, %v1971
  %v1982 = vsub.f32 1.0, %v1972
  %1985 = vrot.lane.b32.xlu0 %v1979, 64
  %v1986 = vpop.permute.xlu0 %1985
  %1987 = vrot.lane.b32.xlu0 %v1980, 64
  %v1988 = vpop.permute.xlu0 %1987
  %v1991 = vmul.f32 %v1981, %v1986
  %v1992 = vmul.f32 %v1982, %v1988
  %v1993 = vmul.f32 %v1971, %v1902
  %v1994 = vmul.f32 %v1972, %v1903
  %v1995 = vadd.f32 %v1991, %v1993
  %v1996 = vadd.f32 %v1992, %v1994
  %v1997 = vpack.c.bf16 %v1996, %v1995
  %1999 = vrot.lane.b32.xlu0 %v1997, 64
  %v2000 = vpop.permute.xlu0 %1999
  %v2002 = vsel %vm852, %v2000, 0
  %2004 = vmatprep.subr.bf16.mxu0 %v988
  %2005 = vmatpush1.bf16.msra.mxu0 %v987
  %2006 = vmatprep.subr.bf16.mxu0 %v990
  %2007 = vmatpush1.bf16.msra.mxu0 %v989
  %2008 = vmatprep.subr.bf16.mxu0 %v992
  %2009 = vmatpush1.bf16.msra.mxu0 %v991
  %2010 = vmatprep.subr.bf16.mxu0 %v994
  %2011 = vmatpush1.bf16.msra.mxu0 %v993
  %2012 = vmatprep.subr.bf16.mxu0 0
  %2013 = vmatpush1.bf16.msra.mxu0 0
  %2014 = vmatprep.subr.bf16.mxu0 0
  %2015 = vmatpush1.bf16.msra.mxu0 0
  %2016 = vmatprep.subr.bf16.mxu0 0
  %2017 = vmatpush1.bf16.msra.mxu0 0
  %2018 = vmatprep.subr.bf16.mxu0 0
  %2019 = vmatpush1.bf16.msra.mxu0 0
  %2020 = vmatprep.subr.bf16.mxu0 0
  %2021 = vmatpush1.bf16.msra.mxu0 0
  %2022 = vmatprep.subr.bf16.mxu0 0
  %2023 = vmatpush1.bf16.msra.mxu0 0
  %2024 = vmatprep.subr.bf16.mxu0 0
  %2025 = vmatpush1.bf16.msra.mxu0 0
  %2026 = vmatprep.subr.bf16.mxu0 0
  %2027 = vmatpush1.bf16.msra.mxu0 0
  %2028 = vmatprep.subr.bf16.mxu0 0
  %2029 = vmatpush1.bf16.msra.mxu0 0
  %2030 = vmatprep.subr.bf16.mxu0 0
  %2031 = vmatpush1.bf16.msra.mxu0 0
  %2032 = vmatprep.subr.bf16.mxu0 0
  %2033 = vmatpush1.bf16.msra.mxu0 0
  %2034 = vmatprep.subr.bf16.mxu0 0
  %2035 = vmatpush1.bf16.msra.mxu0 0
  %2036 = vmatprep.mubr.bf16.mxu0 0
  %2037 = vmatmul.mubr.bf16.gmra.mrb[0].mxu0 %v2002
  %v2038 = vpop.f32.mrb[0].mxu0
  %v2039 = vadd.f32 0.0, %v2038
  %v2040 = vpop.f32.mrb[0].mxu0
  %v2041 = vadd.f32 0.0, %v2040
  %v2042 = vpop.f32.mrb[0].mxu0
  %v2043 = vadd.f32 0.0, %v2042
  %v2044 = vpop.f32.mrb[0].mxu0
  %v2045 = vadd.f32 0.0, %v2044
  %2046 = vdwg.mxu0
  %s2047 = scalar_lea.vmem [#allocation2], 352
  %v2048 = vld [vmem:[%s2047] sm:$0xff]
  %v2049 = vld [vmem:[%s2047 + $0x8] sm:$0xff]
  %v2050 = vld [vmem:[%s2047 + $0x10] sm:$0xff]
  %v2051 = vld [vmem:[%s2047 + $0x18] sm:$0xff]
  %v2052 = vadd.f32 %v2048, %v2039
  %v2053 = vadd.f32 %v2050, %v2043
  %v2054 = vmul.f32 %v2052, 0.5
  %v2055 = vmul.f32 %v2053, 0.5
  %v2056 = vtanh.pop %v2054
  %v2057 = vtanh.pop %v2055
  %v2058 = vadd.f32 %v2056, 1.0
  %v2059 = vadd.f32 %v2057, 1.0
  %v2060 = vmul.f32 %v2058, 0.5
  %v2061 = vmul.f32 %v2059, 0.5
  %v2062 = vadd.f32 %v2041, %v961
  %v2063 = vadd.f32 %v2045, %v961
  %v2064 = vmul.f32 %v2060, %v2062
  %v2065 = vmul.f32 %v2061, %v2063
  %v2066 = vadd.f32 %v2049, %v2064
  %v2067 = vadd.f32 %v2051, %v2065
  %v2068 = vtanh.pop %v2066
  %v2069 = vtanh.pop %v2067
  %v2070 = vsub.f32 1.0, %v2060
  %v2071 = vsub.f32 1.0, %v2061
  %2074 = vrot.lane.b32.xlu0 %v2068, 64
  %v2075 = vpop.permute.xlu0 %2074
  %2076 = vrot.lane.b32.xlu0 %v2069, 64
  %v2077 = vpop.permute.xlu0 %2076
  %v2080 = vmul.f32 %v2070, %v2075
  %v2081 = vmul.f32 %v2071, %v2077
  %v2082 = vmul.f32 %v2060, %v1995
  %v2083 = vmul.f32 %v2061, %v1996
  %v2084 = vadd.f32 %v2080, %v2082
  %v2085 = vadd.f32 %v2081, %v2083
  %v2086 = vpack.c.bf16 %v2085, %v2084
  %v2088 = vsel %vm852, %v2000, %v2086
  %2090 = vst [vmem:[#allocation3 + $0x28] sm:$0xff] %v2088
  %2092 = vrot.lane.b32.xlu0 %v2086, 64
  %v2093 = vpop.permute.xlu0 %2092
  %v2095 = vsel %vm852, %v2093, 0
  %2097 = vmatprep.subr.bf16.mxu0 %v988
  %2098 = vmatpush1.bf16.msra.mxu0 %v987
  %2099 = vmatprep.subr.bf16.mxu0 %v990
  %2100 = vmatpush1.bf16.msra.mxu0 %v989
  %2101 = vmatprep.subr.bf16.mxu0 %v992
  %2102 = vmatpush1.bf16.msra.mxu0 %v991
  %2103 = vmatprep.subr.bf16.mxu0 %v994
  %2104 = vmatpush1.bf16.msra.mxu0 %v993
  %2105 = vmatprep.subr.bf16.mxu0 0
  %2106 = vmatpush1.bf16.msra.mxu0 0
  %2107 = vmatprep.subr.bf16.mxu0 0
  %2108 = vmatpush1.bf16.msra.mxu0 0
  %2109 = vmatprep.subr.bf16.mxu0 0
  %2110 = vmatpush1.bf16.msra.mxu0 0
  %2111 = vmatprep.subr.bf16.mxu0 0
  %2112 = vmatpush1.bf16.msra.mxu0 0
  %2113 = vmatprep.subr.bf16.mxu0 0
  %2114 = vmatpush1.bf16.msra.mxu0 0
  %2115 = vmatprep.subr.bf16.mxu0 0
  %2116 = vmatpush1.bf16.msra.mxu0 0
  %2117 = vmatprep.subr.bf16.mxu0 0
  %2118 = vmatpush1.bf16.msra.mxu0 0
  %2119 = vmatprep.subr.bf16.mxu0 0
  %2120 = vmatpush1.bf16.msra.mxu0 0
  %2121 = vmatprep.subr.bf16.mxu0 0
  %2122 = vmatpush1.bf16.msra.mxu0 0
  %2123 = vmatprep.subr.bf16.mxu0 0
  %2124 = vmatpush1.bf16.msra.mxu0 0
  %2125 = vmatprep.subr.bf16.mxu0 0
  %2126 = vmatpush1.bf16.msra.mxu0 0
  %2127 = vmatprep.subr.bf16.mxu0 0
  %2128 = vmatpush1.bf16.msra.mxu0 0
  %2129 = vmatprep.mubr.bf16.mxu0 0
  %2130 = vmatmul.mubr.bf16.gmra.mrb[0].mxu0 %v2095
  %v2131 = vpop.f32.mrb[0].mxu0
  %v2132 = vadd.f32 0.0, %v2131
  %v2133 = vpop.f32.mrb[0].mxu0
  %v2134 = vadd.f32 0.0, %v2133
  %v2135 = vpop.f32.mrb[0].mxu0
  %v2136 = vadd.f32 0.0, %v2135
  %v2137 = vpop.f32.mrb[0].mxu0
  %v2138 = vadd.f32 0.0, %v2137
  %2139 = vdwg.mxu0
  %s2140 = scalar_lea.vmem [#allocation2], 384
  %v2141 = vld [vmem:[%s2140] sm:$0xff]
  %v2142 = vld [vmem:[%s2140 + $0x8] sm:$0xff]
  %v2143 = vld [vmem:[%s2140 + $0x10] sm:$0xff]
  %v2144 = vld [vmem:[%s2140 + $0x18] sm:$0xff]
  %v2145 = vadd.f32 %v2141, %v2132
  %v2146 = vadd.f32 %v2143, %v2136
  %v2147 = vmul.f32 %v2145, 0.5
  %v2148 = vmul.f32 %v2146, 0.5
  %v2149 = vtanh.pop %v2147
  %v2150 = vtanh.pop %v2148
  %v2151 = vadd.f32 %v2149, 1.0
  %v2152 = vadd.f32 %v2150, 1.0
  %v2153 = vmul.f32 %v2151, 0.5
  %v2154 = vmul.f32 %v2152, 0.5
  %v2155 = vadd.f32 %v2134, %v961
  %v2156 = vadd.f32 %v2138, %v961
  %v2157 = vmul.f32 %v2153, %v2155
  %v2158 = vmul.f32 %v2154, %v2156
  %v2159 = vadd.f32 %v2142, %v2157
  %v2160 = vadd.f32 %v2144, %v2158
  %v2161 = vtanh.pop %v2159
  %v2162 = vtanh.pop %v2160
  %v2163 = vsub.f32 1.0, %v2153
  %v2164 = vsub.f32 1.0, %v2154
  %2167 = vrot.lane.b32.xlu0 %v2161, 64
  %v2168 = vpop.permute.xlu0 %2167
  %2169 = vrot.lane.b32.xlu0 %v2162, 64
  %v2170 = vpop.permute.xlu0 %2169
  %v2173 = vmul.f32 %v2163, %v2168
  %v2174 = vmul.f32 %v2164, %v2170
  %v2175 = vmul.f32 %v2153, %v2084
  %v2176 = vmul.f32 %v2154, %v2085
  %v2177 = vadd.f32 %v2173, %v2175
  %v2178 = vadd.f32 %v2174, %v2176
  %v2179 = vpack.c.bf16 %v2178, %v2177
  %2181 = vrot.lane.b32.xlu0 %v2179, 64
  %v2182 = vpop.permute.xlu0 %2181
  %v2184 = vsel %vm852, %v2182, 0
  %2186 = vmatprep.subr.bf16.mxu0 %v988
  %2187 = vmatpush1.bf16.msra.mxu0 %v987
  %2188 = vmatprep.subr.bf16.mxu0 %v990
  %2189 = vmatpush1.bf16.msra.mxu0 %v989
  %2190 = vmatprep.subr.bf16.mxu0 %v992
  %2191 = vmatpush1.bf16.msra.mxu0 %v991
  %2192 = vmatprep.subr.bf16.mxu0 %v994
  %2193 = vmatpush1.bf16.msra.mxu0 %v993
  %2194 = vmatprep.subr.bf16.mxu0 0
  %2195 = vmatpush1.bf16.msra.mxu0 0
  %2196 = vmatprep.subr.bf16.mxu0 0
  %2197 = vmatpush1.bf16.msra.mxu0 0
  %2198 = vmatprep.subr.bf16.mxu0 0
  %2199 = vmatpush1.bf16.msra.mxu0 0
  %2200 = vmatprep.subr.bf16.mxu0 0
  %2201 = vmatpush1.bf16.msra.mxu0 0
  %2202 = vmatprep.subr.bf16.mxu0 0
  %2203 = vmatpush1.bf16.msra.mxu0 0
  %2204 = vmatprep.subr.bf16.mxu0 0
  %2205 = vmatpush1.bf16.msra.mxu0 0
  %2206 = vmatprep.subr.bf16.mxu0 0
  %2207 = vmatpush1.bf16.msra.mxu0 0
  %2208 = vmatprep.subr.bf16.mxu0 0
  %2209 = vmatpush1.bf16.msra.mxu0 0
  %2210 = vmatprep.subr.bf16.mxu0 0
  %2211 = vmatpush1.bf16.msra.mxu0 0
  %2212 = vmatprep.subr.bf16.mxu0 0
  %2213 = vmatpush1.bf16.msra.mxu0 0
  %2214 = vmatprep.subr.bf16.mxu0 0
  %2215 = vmatpush1.bf16.msra.mxu0 0
  %2216 = vmatprep.subr.bf16.mxu0 0
  %2217 = vmatpush1.bf16.msra.mxu0 0
  %2218 = vmatprep.mubr.bf16.mxu0 0
  %2219 = vmatmul.mubr.bf16.gmra.mrb[0].mxu0 %v2184
  %v2220 = vpop.f32.mrb[0].mxu0
  %v2221 = vadd.f32 0.0, %v2220
  %v2222 = vpop.f32.mrb[0].mxu0
  %v2223 = vadd.f32 0.0, %v2222
  %v2224 = vpop.f32.mrb[0].mxu0
  %v2225 = vadd.f32 0.0, %v2224
  %v2226 = vpop.f32.mrb[0].mxu0
  %v2227 = vadd.f32 0.0, %v2226
  %2228 = vdwg.mxu0
  %s2229 = scalar_lea.vmem [#allocation2], 416
  %v2230 = vld [vmem:[%s2229] sm:$0xff]
  %v2231 = vld [vmem:[%s2229 + $0x8] sm:$0xff]
  %v2232 = vld [vmem:[%s2229 + $0x10] sm:$0xff]
  %v2233 = vld [vmem:[%s2229 + $0x18] sm:$0xff]
  %v2234 = vadd.f32 %v2230, %v2221
  %v2235 = vadd.f32 %v2232, %v2225
  %v2236 = vmul.f32 %v2234, 0.5
  %v2237 = vmul.f32 %v2235, 0.5
  %v2238 = vtanh.pop %v2236
  %v2239 = vtanh.pop %v2237
  %v2240 = vadd.f32 %v2238, 1.0
  %v2241 = vadd.f32 %v2239, 1.0
  %v2242 = vmul.f32 %v2240, 0.5
  %v2243 = vmul.f32 %v2241, 0.5
  %v2244 = vadd.f32 %v2223, %v961
  %v2245 = vadd.f32 %v2227, %v961
  %v2246 = vmul.f32 %v2242, %v2244
  %v2247 = vmul.f32 %v2243, %v2245
  %v2248 = vadd.f32 %v2231, %v2246
  %v2249 = vadd.f32 %v2233, %v2247
  %v2250 = vtanh.pop %v2248
  %v2251 = vtanh.pop %v2249
  %v2252 = vsub.f32 1.0, %v2242
  %v2253 = vsub.f32 1.0, %v2243
  %2256 = vrot.lane.b32.xlu0 %v2250, 64
  %v2257 = vpop.permute.xlu0 %2256
  %2258 = vrot.lane.b32.xlu0 %v2251, 64
  %v2259 = vpop.permute.xlu0 %2258
  %v2262 = vmul.f32 %v2252, %v2257
  %v2263 = vmul.f32 %v2253, %v2259
  %v2264 = vmul.f32 %v2242, %v2177
  %v2265 = vmul.f32 %v2243, %v2178
  %v2266 = vadd.f32 %v2262, %v2264
  %v2267 = vadd.f32 %v2263, %v2265
  %v2268 = vpack.c.bf16 %v2267, %v2266
  %v2270 = vsel %vm852, %v2182, %v2268
  %2272 = vst [vmem:[#allocation3 + $0x30] sm:$0xff] %v2270
  %2274 = vrot.lane.b32.xlu0 %v2268, 64
  %v2275 = vpop.permute.xlu0 %2274
  %v2277 = vsel %vm852, %v2275, 0
  %2279 = vmatprep.subr.bf16.mxu0 %v988
  %2280 = vmatpush1.bf16.msra.mxu0 %v987
  %2281 = vmatprep.subr.bf16.mxu0 %v990
  %2282 = vmatpush1.bf16.msra.mxu0 %v989
  %2283 = vmatprep.subr.bf16.mxu0 %v992
  %2284 = vmatpush1.bf16.msra.mxu0 %v991
  %2285 = vmatprep.subr.bf16.mxu0 %v994
  %2286 = vmatpush1.bf16.msra.mxu0 %v993
  %2287 = vmatprep.subr.bf16.mxu0 0
  %2288 = vmatpush1.bf16.msra.mxu0 0
  %2289 = vmatprep.subr.bf16.mxu0 0
  %2290 = vmatpush1.bf16.msra.mxu0 0
  %2291 = vmatprep.subr.bf16.mxu0 0
  %2292 = vmatpush1.bf16.msra.mxu0 0
  %2293 = vmatprep.subr.bf16.mxu0 0
  %2294 = vmatpush1.bf16.msra.mxu0 0
  %2295 = vmatprep.subr.bf16.mxu0 0
  %2296 = vmatpush1.bf16.msra.mxu0 0
  %2297 = vmatprep.subr.bf16.mxu0 0
  %2298 = vmatpush1.bf16.msra.mxu0 0
  %2299 = vmatprep.subr.bf16.mxu0 0
  %2300 = vmatpush1.bf16.msra.mxu0 0
  %2301 = vmatprep.subr.bf16.mxu0 0
  %2302 = vmatpush1.bf16.msra.mxu0 0
  %2303 = vmatprep.subr.bf16.mxu0 0
  %2304 = vmatpush1.bf16.msra.mxu0 0
  %2305 = vmatprep.subr.bf16.mxu0 0
  %2306 = vmatpush1.bf16.msra.mxu0 0
  %2307 = vmatprep.subr.bf16.mxu0 0
  %2308 = vmatpush1.bf16.msra.mxu0 0
  %2309 = vmatprep.subr.bf16.mxu0 0
  %2310 = vmatpush1.bf16.msra.mxu0 0
  %2311 = vmatprep.mubr.bf16.mxu0 0
  %2312 = vmatmul.mubr.bf16.gmra.mrb[0].mxu0 %v2277
  %v2313 = vpop.f32.mrb[0].mxu0
  %v2314 = vadd.f32 0.0, %v2313
  %v2315 = vpop.f32.mrb[0].mxu0
  %v2316 = vadd.f32 0.0, %v2315
  %v2317 = vpop.f32.mrb[0].mxu0
  %v2318 = vadd.f32 0.0, %v2317
  %v2319 = vpop.f32.mrb[0].mxu0
  %v2320 = vadd.f32 0.0, %v2319
  %2321 = vdwg.mxu0
  %s2322 = scalar_lea.vmem [#allocation2], 448
  %v2323 = vld [vmem:[%s2322] sm:$0xff]
  %v2324 = vld [vmem:[%s2322 + $0x8] sm:$0xff]
  %v2325 = vld [vmem:[%s2322 + $0x10] sm:$0xff]
  %v2326 = vld [vmem:[%s2322 + $0x18] sm:$0xff]
  %v2327 = vadd.f32 %v2323, %v2314
  %v2328 = vadd.f32 %v2325, %v2318
  %v2329 = vmul.f32 %v2327, 0.5
  %v2330 = vmul.f32 %v2328, 0.5
  %v2331 = vtanh.pop %v2329
  %v2332 = vtanh.pop %v2330
  %v2333 = vadd.f32 %v2331, 1.0
  %v2334 = vadd.f32 %v2332, 1.0
  %v2335 = vmul.f32 %v2333, 0.5
  %v2336 = vmul.f32 %v2334, 0.5
  %v2337 = vadd.f32 %v2316, %v961
  %v2338 = vadd.f32 %v2320, %v961
  %v2339 = vmul.f32 %v2335, %v2337
  %v2340 = vmul.f32 %v2336, %v2338
  %v2341 = vadd.f32 %v2324, %v2339
  %v2342 = vadd.f32 %v2326, %v2340
  %v2343 = vtanh.pop %v2341
  %v2344 = vtanh.pop %v2342
  %v2345 = vsub.f32 1.0, %v2335
  %v2346 = vsub.f32 1.0, %v2336
  %2349 = vrot.lane.b32.xlu0 %v2343, 64
  %v2350 = vpop.permute.xlu0 %2349
  %2351 = vrot.lane.b32.xlu0 %v2344, 64
  %v2352 = vpop.permute.xlu0 %2351
  %v2355 = vmul.f32 %v2345, %v2350
  %v2356 = vmul.f32 %v2346, %v2352
  %v2357 = vmul.f32 %v2335, %v2266
  %v2358 = vmul.f32 %v2336, %v2267
  %v2359 = vadd.f32 %v2355, %v2357
  %v2360 = vadd.f32 %v2356, %v2358
  %v2361 = vpack.c.bf16 %v2360, %v2359
  %2363 = vrot.lane.b32.xlu0 %v2361, 64
  %v2364 = vpop.permute.xlu0 %2363
  %v2366 = vsel %vm852, %v2364, 0
  %2368 = vmatprep.subr.bf16.mxu0 %v988
  %2369 = vmatpush1.bf16.msra.mxu0 %v987
  %2370 = vmatprep.subr.bf16.mxu0 %v990
  %2371 = vmatpush1.bf16.msra.mxu0 %v989
  %2372 = vmatprep.subr.bf16.mxu0 %v992
  %2373 = vmatpush1.bf16.msra.mxu0 %v991
  %2374 = vmatprep.subr.bf16.mxu0 %v994
  %2375 = vmatpush1.bf16.msra.mxu0 %v993
  %2376 = vmatprep.subr.bf16.mxu0 0
  %2377 = vmatpush1.bf16.msra.mxu0 0
  %2378 = vmatprep.subr.bf16.mxu0 0
  %2379 = vmatpush1.bf16.msra.mxu0 0
  %2380 = vmatprep.subr.bf16.mxu0 0
  %2381 = vmatpush1.bf16.msra.mxu0 0
  %2382 = vmatprep.subr.bf16.mxu0 0
  %2383 = vmatpush1.bf16.msra.mxu0 0
  %2384 = vmatprep.subr.bf16.mxu0 0
  %2385 = vmatpush1.bf16.msra.mxu0 0
  %2386 = vmatprep.subr.bf16.mxu0 0
  %2387 = vmatpush1.bf16.msra.mxu0 0
  %2388 = vmatprep.subr.bf16.mxu0 0
  %2389 = vmatpush1.bf16.msra.mxu0 0
  %2390 = vmatprep.subr.bf16.mxu0 0
  %2391 = vmatpush1.bf16.msra.mxu0 0
  %2392 = vmatprep.subr.bf16.mxu0 0
  %2393 = vmatpush1.bf16.msra.mxu0 0
  %2394 = vmatprep.subr.bf16.mxu0 0
  %2395 = vmatpush1.bf16.msra.mxu0 0
  %2396 = vmatprep.subr.bf16.mxu0 0
  %2397 = vmatpush1.bf16.msra.mxu0 0
  %2398 = vmatprep.subr.bf16.mxu0 0
  %2399 = vmatpush1.bf16.msra.mxu0 0
  %2400 = vmatprep.mubr.bf16.mxu0 0
  %2401 = vmatmul.mubr.bf16.gmra.mrb[0].mxu0 %v2366
  %v2402 = vpop.f32.mrb[0].mxu0
  %v2403 = vadd.f32 0.0, %v2402
  %v2404 = vpop.f32.mrb[0].mxu0
  %v2405 = vadd.f32 0.0, %v2404
  %v2406 = vpop.f32.mrb[0].mxu0
  %v2407 = vadd.f32 0.0, %v2406
  %v2408 = vpop.f32.mrb[0].mxu0
  %v2409 = vadd.f32 0.0, %v2408
  %2410 = vdwg.mxu0
  %s2411 = scalar_lea.vmem [#allocation2], 480
  %v2412 = vld [vmem:[%s2411] sm:$0xff]
  %v2413 = vld [vmem:[%s2411 + $0x8] sm:$0xff]
  %v2414 = vld [vmem:[%s2411 + $0x10] sm:$0xff]
  %v2415 = vld [vmem:[%s2411 + $0x18] sm:$0xff]
  %v2416 = vadd.f32 %v2412, %v2403
  %v2417 = vadd.f32 %v2414, %v2407
  %v2418 = vmul.f32 %v2416, 0.5
  %v2419 = vmul.f32 %v2417, 0.5
  %v2420 = vtanh.pop %v2418
  %v2421 = vtanh.pop %v2419
  %v2422 = vadd.f32 %v2420, 1.0
  %v2423 = vadd.f32 %v2421, 1.0
  %v2424 = vmul.f32 %v2422, 0.5
  %v2425 = vmul.f32 %v2423, 0.5
  %v2426 = vadd.f32 %v2405, %v961
  %v2427 = vadd.f32 %v2409, %v961
  %v2428 = vmul.f32 %v2424, %v2426
  %v2429 = vmul.f32 %v2425, %v2427
  %v2430 = vadd.f32 %v2413, %v2428
  %v2431 = vadd.f32 %v2415, %v2429
  %v2432 = vtanh.pop %v2430
  %v2433 = vtanh.pop %v2431
  %v2434 = vsub.f32 1.0, %v2424
  %v2435 = vsub.f32 1.0, %v2425
  %2438 = vrot.lane.b32.xlu0 %v2432, 64
  %v2439 = vpop.permute.xlu0 %2438
  %2440 = vrot.lane.b32.xlu0 %v2433, 64
  %v2441 = vpop.permute.xlu0 %2440
  %v2444 = vmul.f32 %v2434, %v2439
  %v2445 = vmul.f32 %v2435, %v2441
  %v2446 = vmul.f32 %v2424, %v2359
  %v2447 = vmul.f32 %v2425, %v2360
  %v2448 = vadd.f32 %v2444, %v2446
  %v2449 = vadd.f32 %v2445, %v2447
  %v2450 = vpack.c.bf16 %v2449, %v2448
  %v2452 = vsel %vm852, %v2364, %v2450
  %2454 = vst [vmem:[#allocation3 + $0x38] sm:$0xff] %v2452
  %2456 = vrot.lane.b32.xlu0 %v2450, 64
  %v2457 = vpop.permute.xlu0 %2456
  %v2459 = vsel %vm852, %v2457, 0
  %2461 = vmatprep.subr.bf16.mxu0 %v988
  %2462 = vmatpush1.bf16.msra.mxu0 %v987
  %2463 = vmatprep.subr.bf16.mxu0 %v990
  %2464 = vmatpush1.bf16.msra.mxu0 %v989
  %2465 = vmatprep.subr.bf16.mxu0 %v992
  %2466 = vmatpush1.bf16.msra.mxu0 %v991
  %2467 = vmatprep.subr.bf16.mxu0 %v994
  %2468 = vmatpush1.bf16.msra.mxu0 %v993
  %2469 = vmatprep.subr.bf16.mxu0 0
  %2470 = vmatpush1.bf16.msra.mxu0 0
  %2471 = vmatprep.subr.bf16.mxu0 0
  %2472 = vmatpush1.bf16.msra.mxu0 0
  %2473 = vmatprep.subr.bf16.mxu0 0
  %2474 = vmatpush1.bf16.msra.mxu0 0
  %2475 = vmatprep.subr.bf16.mxu0 0
  %2476 = vmatpush1.bf16.msra.mxu0 0
  %2477 = vmatprep.subr.bf16.mxu0 0
  %2478 = vmatpush1.bf16.msra.mxu0 0
  %2479 = vmatprep.subr.bf16.mxu0 0
  %2480 = vmatpush1.bf16.msra.mxu0 0
  %2481 = vmatprep.subr.bf16.mxu0 0
  %2482 = vmatpush1.bf16.msra.mxu0 0
  %2483 = vmatprep.subr.bf16.mxu0 0
  %2484 = vmatpush1.bf16.msra.mxu0 0
  %2485 = vmatprep.subr.bf16.mxu0 0
  %2486 = vmatpush1.bf16.msra.mxu0 0
  %2487 = vmatprep.subr.bf16.mxu0 0
  %2488 = vmatpush1.bf16.msra.mxu0 0
  %2489 = vmatprep.subr.bf16.mxu0 0
  %2490 = vmatpush1.bf16.msra.mxu0 0
  %2491 = vmatprep.subr.bf16.mxu0 0
  %2492 = vmatpush1.bf16.msra.mxu0 0
  %2493 = vmatprep.mubr.bf16.mxu0 0
  %2494 = vmatmul.mubr.bf16.gmra.mrb[0].mxu0 %v2459
  %v2495 = vpop.f32.mrb[0].mxu0
  %v2496 = vadd.f32 0.0, %v2495
  %v2497 = vpop.f32.mrb[0].mxu0
  %v2498 = vadd.f32 0.0, %v2497
  %v2499 = vpop.f32.mrb[0].mxu0
  %v2500 = vadd.f32 0.0, %v2499
  %v2501 = vpop.f32.mrb[0].mxu0
  %v2502 = vadd.f32 0.0, %v2501
  %2503 = vdwg.mxu0
  %s2504 = scalar_lea.vmem [#allocation2], 512
  %v2505 = vld [vmem:[%s2504] sm:$0xff]
  %v2506 = vld [vmem:[%s2504 + $0x8] sm:$0xff]
  %v2507 = vld [vmem:[%s2504 + $0x10] sm:$0xff]
  %v2508 = vld [vmem:[%s2504 + $0x18] sm:$0xff]
  %v2509 = vadd.f32 %v2505, %v2496
  %v2510 = vadd.f32 %v2507, %v2500
  %v2511 = vmul.f32 %v2509, 0.5
  %v2512 = vmul.f32 %v2510, 0.5
  %v2513 = vtanh.pop %v2511
  %v2514 = vtanh.pop %v2512
  %v2515 = vadd.f32 %v2513, 1.0
  %v2516 = vadd.f32 %v2514, 1.0
  %v2517 = vmul.f32 %v2515, 0.5
  %v2518 = vmul.f32 %v2516, 0.5
  %v2519 = vadd.f32 %v2498, %v961
  %v2520 = vadd.f32 %v2502, %v961
  %v2521 = vmul.f32 %v2517, %v2519
  %v2522 = vmul.f32 %v2518, %v2520
  %v2523 = vadd.f32 %v2506, %v2521
  %v2524 = vadd.f32 %v2508, %v2522
  %v2525 = vtanh.pop %v2523
  %v2526 = vtanh.pop %v2524
  %v2527 = vsub.f32 1.0, %v2517
  %v2528 = vsub.f32 1.0, %v2518
  %2531 = vrot.lane.b32.xlu0 %v2525, 64
  %v2532 = vpop.permute.xlu0 %2531
  %2533 = vrot.lane.b32.xlu0 %v2526, 64
  %v2534 = vpop.permute.xlu0 %2533
  %v2537 = vmul.f32 %v2527, %v2532
  %v2538 = vmul.f32 %v2528, %v2534
  %v2539 = vmul.f32 %v2517, %v2448
  %v2540 = vmul.f32 %v2518, %v2449
  %v2541 = vadd.f32 %v2537, %v2539
  %v2542 = vadd.f32 %v2538, %v2540
  %v2543 = vpack.c.bf16 %v2542, %v2541
  %2545 = vrot.lane.b32.xlu0 %v2543, 64
  %v2546 = vpop.permute.xlu0 %2545
  %v2548 = vsel %vm852, %v2546, 0
  %2550 = vmatprep.subr.bf16.mxu0 %v988
  %2551 = vmatpush1.bf16.msra.mxu0 %v987
  %2552 = vmatprep.subr.bf16.mxu0 %v990
  %2553 = vmatpush1.bf16.msra.mxu0 %v989
  %2554 = vmatprep.subr.bf16.mxu0 %v992
  %2555 = vmatpush1.bf16.msra.mxu0 %v991
  %2556 = vmatprep.subr.bf16.mxu0 %v994
  %2557 = vmatpush1.bf16.msra.mxu0 %v993
  %2558 = vmatprep.subr.bf16.mxu0 0
  %2559 = vmatpush1.bf16.msra.mxu0 0
  %2560 = vmatprep.subr.bf16.mxu0 0
  %2561 = vmatpush1.bf16.msra.mxu0 0
  %2562 = vmatprep.subr.bf16.mxu0 0
  %2563 = vmatpush1.bf16.msra.mxu0 0
  %2564 = vmatprep.subr.bf16.mxu0 0
  %2565 = vmatpush1.bf16.msra.mxu0 0
  %2566 = vmatprep.subr.bf16.mxu0 0
  %2567 = vmatpush1.bf16.msra.mxu0 0
  %2568 = vmatprep.subr.bf16.mxu0 0
  %2569 = vmatpush1.bf16.msra.mxu0 0
  %2570 = vmatprep.subr.bf16.mxu0 0
  %2571 = vmatpush1.bf16.msra.mxu0 0
  %2572 = vmatprep.subr.bf16.mxu0 0
  %2573 = vmatpush1.bf16.msra.mxu0 0
  %2574 = vmatprep.subr.bf16.mxu0 0
  %2575 = vmatpush1.bf16.msra.mxu0 0
  %2576 = vmatprep.subr.bf16.mxu0 0
  %2577 = vmatpush1.bf16.msra.mxu0 0
  %2578 = vmatprep.subr.bf16.mxu0 0
  %2579 = vmatpush1.bf16.msra.mxu0 0
  %2580 = vmatprep.subr.bf16.mxu0 0
  %2581 = vmatpush1.bf16.msra.mxu0 0
  %2582 = vmatprep.mubr.bf16.mxu0 0
  %2583 = vmatmul.mubr.bf16.gmra.mrb[0].mxu0 %v2548
  %v2584 = vpop.f32.mrb[0].mxu0
  %v2585 = vadd.f32 0.0, %v2584
  %v2586 = vpop.f32.mrb[0].mxu0
  %v2587 = vadd.f32 0.0, %v2586
  %v2588 = vpop.f32.mrb[0].mxu0
  %v2589 = vadd.f32 0.0, %v2588
  %v2590 = vpop.f32.mrb[0].mxu0
  %v2591 = vadd.f32 0.0, %v2590
  %2592 = vdwg.mxu0
  %s2593 = scalar_lea.vmem [#allocation2], 544
  %v2594 = vld [vmem:[%s2593] sm:$0xff]
  %v2595 = vld [vmem:[%s2593 + $0x8] sm:$0xff]
  %v2596 = vld [vmem:[%s2593 + $0x10] sm:$0xff]
  %v2597 = vld [vmem:[%s2593 + $0x18] sm:$0xff]
  %v2598 = vadd.f32 %v2594, %v2585
  %v2599 = vadd.f32 %v2596, %v2589
  %v2600 = vmul.f32 %v2598, 0.5
  %v2601 = vmul.f32 %v2599, 0.5
  %v2602 = vtanh.pop %v2600
  %v2603 = vtanh.pop %v2601
  %v2604 = vadd.f32 %v2602, 1.0
  %v2605 = vadd.f32 %v2603, 1.0
  %v2606 = vmul.f32 %v2604, 0.5
  %v2607 = vmul.f32 %v2605, 0.5
  %v2608 = vadd.f32 %v2587, %v961
  %v2609 = vadd.f32 %v2591, %v961
  %v2610 = vmul.f32 %v2606, %v2608
  %v2611 = vmul.f32 %v2607, %v2609
  %v2612 = vadd.f32 %v2595, %v2610
  %v2613 = vadd.f32 %v2597, %v2611
  %v2614 = vtanh.pop %v2612
  %v2615 = vtanh.pop %v2613
  %v2616 = vsub.f32 1.0, %v2606
  %v2617 = vsub.f32 1.0, %v2607
  %2620 = vrot.lane.b32.xlu0 %v2614, 64
  %v2621 = vpop.permute.xlu0 %2620
  %2622 = vrot.lane.b32.xlu0 %v2615, 64
  %v2623 = vpop.permute.xlu0 %2622
  %v2626 = vmul.f32 %v2616, %v2621
  %v2627 = vmul.f32 %v2617, %v2623
  %v2628 = vmul.f32 %v2606, %v2541
  %v2629 = vmul.f32 %v2607, %v2542
  %v2630 = vadd.f32 %v2626, %v2628
  %v2631 = vadd.f32 %v2627, %v2629
  %v2632 = vpack.c.bf16 %v2631, %v2630
  %v2634 = vsel %vm852, %v2546, %v2632
  %2636 = vst [vmem:[#allocation3 + $0x40] sm:$0xff] %v2634
  %2638 = vrot.lane.b32.xlu0 %v2632, 64
  %v2639 = vpop.permute.xlu0 %2638
  %v2641 = vsel %vm852, %v2639, 0
  %2643 = vmatprep.subr.bf16.mxu0 %v988
  %2644 = vmatpush1.bf16.msra.mxu0 %v987
  %2645 = vmatprep.subr.bf16.mxu0 %v990
  %2646 = vmatpush1.bf16.msra.mxu0 %v989
  %2647 = vmatprep.subr.bf16.mxu0 %v992
  %2648 = vmatpush1.bf16.msra.mxu0 %v991
  %2649 = vmatprep.subr.bf16.mxu0 %v994
  %2650 = vmatpush1.bf16.msra.mxu0 %v993
  %2651 = vmatprep.subr.bf16.mxu0 0
  %2652 = vmatpush1.bf16.msra.mxu0 0
  %2653 = vmatprep.subr.bf16.mxu0 0
  %2654 = vmatpush1.bf16.msra.mxu0 0
  %2655 = vmatprep.subr.bf16.mxu0 0
  %2656 = vmatpush1.bf16.msra.mxu0 0
  %2657 = vmatprep.subr.bf16.mxu0 0
  %2658 = vmatpush1.bf16.msra.mxu0 0
  %2659 = vmatprep.subr.bf16.mxu0 0
  %2660 = vmatpush1.bf16.msra.mxu0 0
  %2661 = vmatprep.subr.bf16.mxu0 0
  %2662 = vmatpush1.bf16.msra.mxu0 0
  %2663 = vmatprep.subr.bf16.mxu0 0
  %2664 = vmatpush1.bf16.msra.mxu0 0
  %2665 = vmatprep.subr.bf16.mxu0 0
  %2666 = vmatpush1.bf16.msra.mxu0 0
  %2667 = vmatprep.subr.bf16.mxu0 0
  %2668 = vmatpush1.bf16.msra.mxu0 0
  %2669 = vmatprep.subr.bf16.mxu0 0
  %2670 = vmatpush1.bf16.msra.mxu0 0
  %2671 = vmatprep.subr.bf16.mxu0 0
  %2672 = vmatpush1.bf16.msra.mxu0 0
  %2673 = vmatprep.subr.bf16.mxu0 0
  %2674 = vmatpush1.bf16.msra.mxu0 0
  %2675 = vmatprep.mubr.bf16.mxu0 0
  %2676 = vmatmul.mubr.bf16.gmra.mrb[0].mxu0 %v2641
  %v2677 = vpop.f32.mrb[0].mxu0
  %v2678 = vadd.f32 0.0, %v2677
  %v2679 = vpop.f32.mrb[0].mxu0
  %v2680 = vadd.f32 0.0, %v2679
  %v2681 = vpop.f32.mrb[0].mxu0
  %v2682 = vadd.f32 0.0, %v2681
  %v2683 = vpop.f32.mrb[0].mxu0
  %v2684 = vadd.f32 0.0, %v2683
  %2685 = vdwg.mxu0
  %s2686 = scalar_lea.vmem [#allocation2], 576
  %v2687 = vld [vmem:[%s2686] sm:$0xff]
  %v2688 = vld [vmem:[%s2686 + $0x8] sm:$0xff]
  %v2689 = vld [vmem:[%s2686 + $0x10] sm:$0xff]
  %v2690 = vld [vmem:[%s2686 + $0x18] sm:$0xff]
  %v2691 = vadd.f32 %v2687, %v2678
  %v2692 = vadd.f32 %v2689, %v2682
  %v2693 = vmul.f32 %v2691, 0.5
  %v2694 = vmul.f32 %v2692, 0.5
  %v2695 = vtanh.pop %v2693
  %v2696 = vtanh.pop %v2694
  %v2697 = vadd.f32 %v2695, 1.0
  %v2698 = vadd.f32 %v2696, 1.0
  %v2699 = vmul.f32 %v2697, 0.5
  %v2700 = vmul.f32 %v2698, 0.5
  %v2701 = vadd.f32 %v2680, %v961
  %v2702 = vadd.f32 %v2684, %v961
  %v2703 = vmul.f32 %v2699, %v2701
  %v2704 = vmul.f32 %v2700, %v2702
  %v2705 = vadd.f32 %v2688, %v2703
  %v2706 = vadd.f32 %v2690, %v2704
  %v2707 = vtanh.pop %v2705
  %v2708 = vtanh.pop %v2706
  %v2709 = vsub.f32 1.0, %v2699
  %v2710 = vsub.f32 1.0, %v2700
  %2713 = vrot.lane.b32.xlu0 %v2707, 64
  %v2714 = vpop.permute.xlu0 %2713
  %2715 = vrot.lane.b32.xlu0 %v2708, 64
  %v2716 = vpop.permute.xlu0 %2715
  %v2719 = vmul.f32 %v2709, %v2714
  %v2720 = vmul.f32 %v2710, %v2716
  %v2721 = vmul.f32 %v2699, %v2630
  %v2722 = vmul.f32 %v2700, %v2631
  %v2723 = vadd.f32 %v2719, %v2721
  %v2724 = vadd.f32 %v2720, %v2722
  %v2725 = vpack.c.bf16 %v2724, %v2723
  %2727 = vrot.lane.b32.xlu0 %v2725, 64
  %v2728 = vpop.permute.xlu0 %2727
  %v2730 = vsel %vm852, %v2728, 0
  %2732 = vmatprep.subr.bf16.mxu0 %v988
  %2733 = vmatpush1.bf16.msra.mxu0 %v987
  %2734 = vmatprep.subr.bf16.mxu0 %v990
  %2735 = vmatpush1.bf16.msra.mxu0 %v989
  %2736 = vmatprep.subr.bf16.mxu0 %v992
  %2737 = vmatpush1.bf16.msra.mxu0 %v991
  %2738 = vmatprep.subr.bf16.mxu0 %v994
  %2739 = vmatpush1.bf16.msra.mxu0 %v993
  %2740 = vmatprep.subr.bf16.mxu0 0
  %2741 = vmatpush1.bf16.msra.mxu0 0
  %2742 = vmatprep.subr.bf16.mxu0 0
  %2743 = vmatpush1.bf16.msra.mxu0 0
  %2744 = vmatprep.subr.bf16.mxu0 0
  %2745 = vmatpush1.bf16.msra.mxu0 0
  %2746 = vmatprep.subr.bf16.mxu0 0
  %2747 = vmatpush1.bf16.msra.mxu0 0
  %2748 = vmatprep.subr.bf16.mxu0 0
  %2749 = vmatpush1.bf16.msra.mxu0 0
  %2750 = vmatprep.subr.bf16.mxu0 0
  %2751 = vmatpush1.bf16.msra.mxu0 0
  %2752 = vmatprep.subr.bf16.mxu0 0
  %2753 = vmatpush1.bf16.msra.mxu0 0
  %2754 = vmatprep.subr.bf16.mxu0 0
  %2755 = vmatpush1.bf16.msra.mxu0 0
  %2756 = vmatprep.subr.bf16.mxu0 0
  %2757 = vmatpush1.bf16.msra.mxu0 0
  %2758 = vmatprep.subr.bf16.mxu0 0
  %2759 = vmatpush1.bf16.msra.mxu0 0
  %2760 = vmatprep.subr.bf16.mxu0 0
  %2761 = vmatpush1.bf16.msra.mxu0 0
  %2762 = vmatprep.subr.bf16.mxu0 0
  %2763 = vmatpush1.bf16.msra.mxu0 0
  %2764 = vmatprep.mubr.bf16.mxu0 0
  %2765 = vmatmul.mubr.bf16.gmra.mrb[0].mxu0 %v2730
  %v2766 = vpop.f32.mrb[0].mxu0
  %v2767 = vadd.f32 0.0, %v2766
  %v2768 = vpop.f32.mrb[0].mxu0
  %v2769 = vadd.f32 0.0, %v2768
  %v2770 = vpop.f32.mrb[0].mxu0
  %v2771 = vadd.f32 0.0, %v2770
  %v2772 = vpop.f32.mrb[0].mxu0
  %v2773 = vadd.f32 0.0, %v2772
  %2774 = vdwg.mxu0
  %s2775 = scalar_lea.vmem [#allocation2], 608
  %v2776 = vld [vmem:[%s2775] sm:$0xff]
  %v2777 = vld [vmem:[%s2775 + $0x8] sm:$0xff]
  %v2778 = vld [vmem:[%s2775 + $0x10] sm:$0xff]
  %v2779 = vld [vmem:[%s2775 + $0x18] sm:$0xff]
  %v2780 = vadd.f32 %v2776, %v2767
  %v2781 = vadd.f32 %v2778, %v2771
  %v2782 = vmul.f32 %v2780, 0.5
  %v2783 = vmul.f32 %v2781, 0.5
  %v2784 = vtanh.pop %v2782
  %v2785 = vtanh.pop %v2783
  %v2786 = vadd.f32 %v2784, 1.0
  %v2787 = vadd.f32 %v2785, 1.0
  %v2788 = vmul.f32 %v2786, 0.5
  %v2789 = vmul.f32 %v2787, 0.5
  %v2790 = vadd.f32 %v2769, %v961
  %v2791 = vadd.f32 %v2773, %v961
  %v2792 = vmul.f32 %v2788, %v2790
  %v2793 = vmul.f32 %v2789, %v2791
  %v2794 = vadd.f32 %v2777, %v2792
  %v2795 = vadd.f32 %v2779, %v2793
  %v2796 = vtanh.pop %v2794
  %v2797 = vtanh.pop %v2795
  %v2798 = vsub.f32 1.0, %v2788
  %v2799 = vsub.f32 1.0, %v2789
  %2802 = vrot.lane.b32.xlu0 %v2796, 64
  %v2803 = vpop.permute.xlu0 %2802
  %2804 = vrot.lane.b32.xlu0 %v2797, 64
  %v2805 = vpop.permute.xlu0 %2804
  %v2808 = vmul.f32 %v2798, %v2803
  %v2809 = vmul.f32 %v2799, %v2805
  %v2810 = vmul.f32 %v2788, %v2723
  %v2811 = vmul.f32 %v2789, %v2724
  %v2812 = vadd.f32 %v2808, %v2810
  %v2813 = vadd.f32 %v2809, %v2811
  %v2814 = vpack.c.bf16 %v2813, %v2812
  %v2816 = vsel %vm852, %v2728, %v2814
  %2818 = vst [vmem:[#allocation3 + $0x48] sm:$0xff] %v2816
  %2820 = vrot.lane.b32.xlu0 %v2814, 64
  %v2821 = vpop.permute.xlu0 %2820
  %v2823 = vsel %vm852, %v2821, 0
  %2825 = vmatprep.subr.bf16.mxu0 %v988
  %2826 = vmatpush1.bf16.msra.mxu0 %v987
  %2827 = vmatprep.subr.bf16.mxu0 %v990
  %2828 = vmatpush1.bf16.msra.mxu0 %v989
  %2829 = vmatprep.subr.bf16.mxu0 %v992
  %2830 = vmatpush1.bf16.msra.mxu0 %v991
  %2831 = vmatprep.subr.bf16.mxu0 %v994
  %2832 = vmatpush1.bf16.msra.mxu0 %v993
  %2833 = vmatprep.subr.bf16.mxu0 0
  %2834 = vmatpush1.bf16.msra.mxu0 0
  %2835 = vmatprep.subr.bf16.mxu0 0
  %2836 = vmatpush1.bf16.msra.mxu0 0
  %2837 = vmatprep.subr.bf16.mxu0 0
  %2838 = vmatpush1.bf16.msra.mxu0 0
  %2839 = vmatprep.subr.bf16.mxu0 0
  %2840 = vmatpush1.bf16.msra.mxu0 0
  %2841 = vmatprep.subr.bf16.mxu0 0
  %2842 = vmatpush1.bf16.msra.mxu0 0
  %2843 = vmatprep.subr.bf16.mxu0 0
  %2844 = vmatpush1.bf16.msra.mxu0 0
  %2845 = vmatprep.subr.bf16.mxu0 0
  %2846 = vmatpush1.bf16.msra.mxu0 0
  %2847 = vmatprep.subr.bf16.mxu0 0
  %2848 = vmatpush1.bf16.msra.mxu0 0
  %2849 = vmatprep.subr.bf16.mxu0 0
  %2850 = vmatpush1.bf16.msra.mxu0 0
  %2851 = vmatprep.subr.bf16.mxu0 0
  %2852 = vmatpush1.bf16.msra.mxu0 0
  %2853 = vmatprep.subr.bf16.mxu0 0
  %2854 = vmatpush1.bf16.msra.mxu0 0
  %2855 = vmatprep.subr.bf16.mxu0 0
  %2856 = vmatpush1.bf16.msra.mxu0 0
  %2857 = vmatprep.mubr.bf16.mxu0 0
  %2858 = vmatmul.mubr.bf16.gmra.mrb[0].mxu0 %v2823
  %v2859 = vpop.f32.mrb[0].mxu0
  %v2860 = vadd.f32 0.0, %v2859
  %v2861 = vpop.f32.mrb[0].mxu0
  %v2862 = vadd.f32 0.0, %v2861
  %v2863 = vpop.f32.mrb[0].mxu0
  %v2864 = vadd.f32 0.0, %v2863
  %v2865 = vpop.f32.mrb[0].mxu0
  %v2866 = vadd.f32 0.0, %v2865
  %2867 = vdwg.mxu0
  %s2868 = scalar_lea.vmem [#allocation2], 640
  %v2869 = vld [vmem:[%s2868] sm:$0xff]
  %v2870 = vld [vmem:[%s2868 + $0x8] sm:$0xff]
  %v2871 = vld [vmem:[%s2868 + $0x10] sm:$0xff]
  %v2872 = vld [vmem:[%s2868 + $0x18] sm:$0xff]
  %v2873 = vadd.f32 %v2869, %v2860
  %v2874 = vadd.f32 %v2871, %v2864
  %v2875 = vmul.f32 %v2873, 0.5
  %v2876 = vmul.f32 %v2874, 0.5
  %v2877 = vtanh.pop %v2875
  %v2878 = vtanh.pop %v2876
  %v2879 = vadd.f32 %v2877, 1.0
  %v2880 = vadd.f32 %v2878, 1.0
  %v2881 = vmul.f32 %v2879, 0.5
  %v2882 = vmul.f32 %v2880, 0.5
  %v2883 = vadd.f32 %v2862, %v961
  %v2884 = vadd.f32 %v2866, %v961
  %v2885 = vmul.f32 %v2881, %v2883
  %v2886 = vmul.f32 %v2882, %v2884
  %v2887 = vadd.f32 %v2870, %v2885
  %v2888 = vadd.f32 %v2872, %v2886
  %v2889 = vtanh.pop %v2887
  %v2890 = vtanh.pop %v2888
  %v2891 = vsub.f32 1.0, %v2881
  %v2892 = vsub.f32 1.0, %v2882
  %2895 = vrot.lane.b32.xlu0 %v2889, 64
  %v2896 = vpop.permute.xlu0 %2895
  %2897 = vrot.lane.b32.xlu0 %v2890, 64
  %v2898 = vpop.permute.xlu0 %2897
  %v2901 = vmul.f32 %v2891, %v2896
  %v2902 = vmul.f32 %v2892, %v2898
  %v2903 = vmul.f32 %v2881, %v2812
  %v2904 = vmul.f32 %v2882, %v2813
  %v2905 = vadd.f32 %v2901, %v2903
  %v2906 = vadd.f32 %v2902, %v2904
  %v2907 = vpack.c.bf16 %v2906, %v2905
  %2909 = vrot.lane.b32.xlu0 %v2907, 64
  %v2910 = vpop.permute.xlu0 %2909
  %v2912 = vsel %vm852, %v2910, 0
  %2914 = vmatprep.subr.bf16.mxu0 %v988
  %2915 = vmatpush1.bf16.msra.mxu0 %v987
  %2916 = vmatprep.subr.bf16.mxu0 %v990
  %2917 = vmatpush1.bf16.msra.mxu0 %v989
  %2918 = vmatprep.subr.bf16.mxu0 %v992
  %2919 = vmatpush1.bf16.msra.mxu0 %v991
  %2920 = vmatprep.subr.bf16.mxu0 %v994
  %2921 = vmatpush1.bf16.msra.mxu0 %v993
  %2922 = vmatprep.subr.bf16.mxu0 0
  %2923 = vmatpush1.bf16.msra.mxu0 0
  %2924 = vmatprep.subr.bf16.mxu0 0
  %2925 = vmatpush1.bf16.msra.mxu0 0
  %2926 = vmatprep.subr.bf16.mxu0 0
  %2927 = vmatpush1.bf16.msra.mxu0 0
  %2928 = vmatprep.subr.bf16.mxu0 0
  %2929 = vmatpush1.bf16.msra.mxu0 0
  %2930 = vmatprep.subr.bf16.mxu0 0
  %2931 = vmatpush1.bf16.msra.mxu0 0
  %2932 = vmatprep.subr.bf16.mxu0 0
  %2933 = vmatpush1.bf16.msra.mxu0 0
  %2934 = vmatprep.subr.bf16.mxu0 0
  %2935 = vmatpush1.bf16.msra.mxu0 0
  %2936 = vmatprep.subr.bf16.mxu0 0
  %2937 = vmatpush1.bf16.msra.mxu0 0
  %2938 = vmatprep.subr.bf16.mxu0 0
  %2939 = vmatpush1.bf16.msra.mxu0 0
  %2940 = vmatprep.subr.bf16.mxu0 0
  %2941 = vmatpush1.bf16.msra.mxu0 0
  %2942 = vmatprep.subr.bf16.mxu0 0
  %2943 = vmatpush1.bf16.msra.mxu0 0
  %2944 = vmatprep.subr.bf16.mxu0 0
  %2945 = vmatpush1.bf16.msra.mxu0 0
  %2946 = vmatprep.mubr.bf16.mxu0 0
  %2947 = vmatmul.mubr.bf16.gmra.mrb[0].mxu0 %v2912
  %v2948 = vpop.f32.mrb[0].mxu0
  %v2949 = vadd.f32 0.0, %v2948
  %v2950 = vpop.f32.mrb[0].mxu0
  %v2951 = vadd.f32 0.0, %v2950
  %v2952 = vpop.f32.mrb[0].mxu0
  %v2953 = vadd.f32 0.0, %v2952
  %v2954 = vpop.f32.mrb[0].mxu0
  %v2955 = vadd.f32 0.0, %v2954
  %2956 = vdwg.mxu0
  %s2957 = scalar_lea.vmem [#allocation2], 672
  %v2958 = vld [vmem:[%s2957] sm:$0xff]
  %v2959 = vld [vmem:[%s2957 + $0x8] sm:$0xff]
  %v2960 = vld [vmem:[%s2957 + $0x10] sm:$0xff]
  %v2961 = vld [vmem:[%s2957 + $0x18] sm:$0xff]
  %v2962 = vadd.f32 %v2958, %v2949
  %v2963 = vadd.f32 %v2960, %v2953
  %v2964 = vmul.f32 %v2962, 0.5
  %v2965 = vmul.f32 %v2963, 0.5
  %v2966 = vtanh.pop %v2964
  %v2967 = vtanh.pop %v2965
  %v2968 = vadd.f32 %v2966, 1.0
  %v2969 = vadd.f32 %v2967, 1.0
  %v2970 = vmul.f32 %v2968, 0.5
  %v2971 = vmul.f32 %v2969, 0.5
  %v2972 = vadd.f32 %v2951, %v961
  %v2973 = vadd.f32 %v2955, %v961
  %v2974 = vmul.f32 %v2970, %v2972
  %v2975 = vmul.f32 %v2971, %v2973
  %v2976 = vadd.f32 %v2959, %v2974
  %v2977 = vadd.f32 %v2961, %v2975
  %v2978 = vtanh.pop %v2976
  %v2979 = vtanh.pop %v2977
  %v2980 = vsub.f32 1.0, %v2970
  %v2981 = vsub.f32 1.0, %v2971
  %2984 = vrot.lane.b32.xlu0 %v2978, 64
  %v2985 = vpop.permute.xlu0 %2984
  %2986 = vrot.lane.b32.xlu0 %v2979, 64
  %v2987 = vpop.permute.xlu0 %2986
  %v2990 = vmul.f32 %v2980, %v2985
  %v2991 = vmul.f32 %v2981, %v2987
  %v2992 = vmul.f32 %v2970, %v2905
  %v2993 = vmul.f32 %v2971, %v2906
  %v2994 = vadd.f32 %v2990, %v2992
  %v2995 = vadd.f32 %v2991, %v2993
  %v2996 = vpack.c.bf16 %v2995, %v2994
  %v2998 = vsel %vm852, %v2910, %v2996
  %3000 = vst [vmem:[#allocation3 + $0x50] sm:$0xff] %v2998
  %3002 = vrot.lane.b32.xlu0 %v2996, 64
  %v3003 = vpop.permute.xlu0 %3002
  %v3005 = vsel %vm852, %v3003, 0
  %3007 = vmatprep.subr.bf16.mxu0 %v988
  %3008 = vmatpush1.bf16.msra.mxu0 %v987
  %3009 = vmatprep.subr.bf16.mxu0 %v990
  %3010 = vmatpush1.bf16.msra.mxu0 %v989
  %3011 = vmatprep.subr.bf16.mxu0 %v992
  %3012 = vmatpush1.bf16.msra.mxu0 %v991
  %3013 = vmatprep.subr.bf16.mxu0 %v994
  %3014 = vmatpush1.bf16.msra.mxu0 %v993
  %3015 = vmatprep.subr.bf16.mxu0 0
  %3016 = vmatpush1.bf16.msra.mxu0 0
  %3017 = vmatprep.subr.bf16.mxu0 0
  %3018 = vmatpush1.bf16.msra.mxu0 0
  %3019 = vmatprep.subr.bf16.mxu0 0
  %3020 = vmatpush1.bf16.msra.mxu0 0
  %3021 = vmatprep.subr.bf16.mxu0 0
  %3022 = vmatpush1.bf16.msra.mxu0 0
  %3023 = vmatprep.subr.bf16.mxu0 0
  %3024 = vmatpush1.bf16.msra.mxu0 0
  %3025 = vmatprep.subr.bf16.mxu0 0
  %3026 = vmatpush1.bf16.msra.mxu0 0
  %3027 = vmatprep.subr.bf16.mxu0 0
  %3028 = vmatpush1.bf16.msra.mxu0 0
  %3029 = vmatprep.subr.bf16.mxu0 0
  %3030 = vmatpush1.bf16.msra.mxu0 0
  %3031 = vmatprep.subr.bf16.mxu0 0
  %3032 = vmatpush1.bf16.msra.mxu0 0
  %3033 = vmatprep.subr.bf16.mxu0 0
  %3034 = vmatpush1.bf16.msra.mxu0 0
  %3035 = vmatprep.subr.bf16.mxu0 0
  %3036 = vmatpush1.bf16.msra.mxu0 0
  %3037 = vmatprep.subr.bf16.mxu0 0
  %3038 = vmatpush1.bf16.msra.mxu0 0
  %3039 = vmatprep.mubr.bf16.mxu0 0
  %3040 = vmatmul.mubr.bf16.gmra.mrb[0].mxu0 %v3005
  %v3041 = vpop.f32.mrb[0].mxu0
  %v3042 = vadd.f32 0.0, %v3041
  %v3043 = vpop.f32.mrb[0].mxu0
  %v3044 = vadd.f32 0.0, %v3043
  %v3045 = vpop.f32.mrb[0].mxu0
  %v3046 = vadd.f32 0.0, %v3045
  %v3047 = vpop.f32.mrb[0].mxu0
  %v3048 = vadd.f32 0.0, %v3047
  %3049 = vdwg.mxu0
  %s3050 = scalar_lea.vmem [#allocation2], 704
  %v3051 = vld [vmem:[%s3050] sm:$0xff]
  %v3052 = vld [vmem:[%s3050 + $0x8] sm:$0xff]
  %v3053 = vld [vmem:[%s3050 + $0x10] sm:$0xff]
  %v3054 = vld [vmem:[%s3050 + $0x18] sm:$0xff]
  %v3055 = vadd.f32 %v3051, %v3042
  %v3056 = vadd.f32 %v3053, %v3046
  %v3057 = vmul.f32 %v3055, 0.5
  %v3058 = vmul.f32 %v3056, 0.5
  %v3059 = vtanh.pop %v3057
  %v3060 = vtanh.pop %v3058
  %v3061 = vadd.f32 %v3059, 1.0
  %v3062 = vadd.f32 %v3060, 1.0
  %v3063 = vmul.f32 %v3061, 0.5
  %v3064 = vmul.f32 %v3062, 0.5
  %v3065 = vadd.f32 %v3044, %v961
  %v3066 = vadd.f32 %v3048, %v961
  %v3067 = vmul.f32 %v3063, %v3065
  %v3068 = vmul.f32 %v3064, %v3066
  %v3069 = vadd.f32 %v3052, %v3067
  %v3070 = vadd.f32 %v3054, %v3068
  %v3071 = vtanh.pop %v3069
  %v3072 = vtanh.pop %v3070
  %v3073 = vsub.f32 1.0, %v3063
  %v3074 = vsub.f32 1.0, %v3064
  %3077 = vrot.lane.b32.xlu0 %v3071, 64
  %v3078 = vpop.permute.xlu0 %3077
  %3079 = vrot.lane.b32.xlu0 %v3072, 64
  %v3080 = vpop.permute.xlu0 %3079
  %v3083 = vmul.f32 %v3073, %v3078
  %v3084 = vmul.f32 %v3074, %v3080
  %v3085 = vmul.f32 %v3063, %v2994
  %v3086 = vmul.f32 %v3064, %v2995
  %v3087 = vadd.f32 %v3083, %v3085
  %v3088 = vadd.f32 %v3084, %v3086
  %v3089 = vpack.c.bf16 %v3088, %v3087
  %3091 = vrot.lane.b32.xlu0 %v3089, 64
  %v3092 = vpop.permute.xlu0 %3091
  %v3094 = vsel %vm852, %v3092, 0
  %3096 = vmatprep.subr.bf16.mxu0 %v988
  %3097 = vmatpush1.bf16.msra.mxu0 %v987
  %3098 = vmatprep.subr.bf16.mxu0 %v990
  %3099 = vmatpush1.bf16.msra.mxu0 %v989
  %3100 = vmatprep.subr.bf16.mxu0 %v992
  %3101 = vmatpush1.bf16.msra.mxu0 %v991
  %3102 = vmatprep.subr.bf16.mxu0 %v994
  %3103 = vmatpush1.bf16.msra.mxu0 %v993
  %3104 = vmatprep.subr.bf16.mxu0 0
  %3105 = vmatpush1.bf16.msra.mxu0 0
  %3106 = vmatprep.subr.bf16.mxu0 0
  %3107 = vmatpush1.bf16.msra.mxu0 0
  %3108 = vmatprep.subr.bf16.mxu0 0
  %3109 = vmatpush1.bf16.msra.mxu0 0
  %3110 = vmatprep.subr.bf16.mxu0 0
  %3111 = vmatpush1.bf16.msra.mxu0 0
  %3112 = vmatprep.subr.bf16.mxu0 0
  %3113 = vmatpush1.bf16.msra.mxu0 0
  %3114 = vmatprep.subr.bf16.mxu0 0
  %3115 = vmatpush1.bf16.msra.mxu0 0
  %3116 = vmatprep.subr.bf16.mxu0 0
  %3117 = vmatpush1.bf16.msra.mxu0 0
  %3118 = vmatprep.subr.bf16.mxu0 0
  %3119 = vmatpush1.bf16.msra.mxu0 0
  %3120 = vmatprep.subr.bf16.mxu0 0
  %3121 = vmatpush1.bf16.msra.mxu0 0
  %3122 = vmatprep.subr.bf16.mxu0 0
  %3123 = vmatpush1.bf16.msra.mxu0 0
  %3124 = vmatprep.subr.bf16.mxu0 0
  %3125 = vmatpush1.bf16.msra.mxu0 0
  %3126 = vmatprep.subr.bf16.mxu0 0
  %3127 = vmatpush1.bf16.msra.mxu0 0
  %3128 = vmatprep.mubr.bf16.mxu0 0
  %3129 = vmatmul.mubr.bf16.gmra.mrb[0].mxu0 %v3094
  %v3130 = vpop.f32.mrb[0].mxu0
  %v3131 = vadd.f32 0.0, %v3130
  %v3132 = vpop.f32.mrb[0].mxu0
  %v3133 = vadd.f32 0.0, %v3132
  %v3134 = vpop.f32.mrb[0].mxu0
  %v3135 = vadd.f32 0.0, %v3134
  %v3136 = vpop.f32.mrb[0].mxu0
  %v3137 = vadd.f32 0.0, %v3136
  %3138 = vdwg.mxu0
  %s3139 = scalar_lea.vmem [#allocation2], 736
  %v3140 = vld [vmem:[%s3139] sm:$0xff]
  %v3141 = vld [vmem:[%s3139 + $0x8] sm:$0xff]
  %v3142 = vld [vmem:[%s3139 + $0x10] sm:$0xff]
  %v3143 = vld [vmem:[%s3139 + $0x18] sm:$0xff]
  %v3144 = vadd.f32 %v3140, %v3131
  %v3145 = vadd.f32 %v3142, %v3135
  %v3146 = vmul.f32 %v3144, 0.5
  %v3147 = vmul.f32 %v3145, 0.5
  %v3148 = vtanh.pop %v3146
  %v3149 = vtanh.pop %v3147
  %v3150 = vadd.f32 %v3148, 1.0
  %v3151 = vadd.f32 %v3149, 1.0
  %v3152 = vmul.f32 %v3150, 0.5
  %v3153 = vmul.f32 %v3151, 0.5
  %v3154 = vadd.f32 %v3133, %v961
  %v3155 = vadd.f32 %v3137, %v961
  %v3156 = vmul.f32 %v3152, %v3154
  %v3157 = vmul.f32 %v3153, %v3155
  %v3158 = vadd.f32 %v3141, %v3156
  %v3159 = vadd.f32 %v3143, %v3157
  %v3160 = vtanh.pop %v3158
  %v3161 = vtanh.pop %v3159
  %v3162 = vsub.f32 1.0, %v3152
  %v3163 = vsub.f32 1.0, %v3153
  %3166 = vrot.lane.b32.xlu0 %v3160, 64
  %v3167 = vpop.permute.xlu0 %3166
  %3168 = vrot.lane.b32.xlu0 %v3161, 64
  %v3169 = vpop.permute.xlu0 %3168
  %v3172 = vmul.f32 %v3162, %v3167
  %v3173 = vmul.f32 %v3163, %v3169
  %v3174 = vmul.f32 %v3152, %v3087
  %v3175 = vmul.f32 %v3153, %v3088
  %v3176 = vadd.f32 %v3172, %v3174
  %v3177 = vadd.f32 %v3173, %v3175
  %v3178 = vpack.c.bf16 %v3177, %v3176
  %v3180 = vsel %vm852, %v3092, %v3178
  %3182 = vst [vmem:[#allocation3 + $0x58] sm:$0xff] %v3180
  %v3183 = vld [vmem:[#allocation3] sm:$0xff]
  %v3184 = vld [vmem:[#allocation3 + $0x8] sm:$0xff]
  %v3185 = vld [vmem:[#allocation3 + $0x10] sm:$0xff]
  %v3186 = vld [vmem:[#allocation3 + $0x18] sm:$0xff]
  %v3187 = vld [vmem:[#allocation3 + $0x20] sm:$0xff]
  %v3188 = vld [vmem:[#allocation3 + $0x28] sm:$0xff]
  %v3189 = vld [vmem:[#allocation3 + $0x30] sm:$0xff]
  %v3190 = vld [vmem:[#allocation3 + $0x38] sm:$0xff]
  %v3191 = vld [vmem:[#allocation3 + $0x40] sm:$0xff]
  %v3192 = vld [vmem:[#allocation3 + $0x48] sm:$0xff]
  %v3193 = vld [vmem:[#allocation3 + $0x50] sm:$0xff]
  %v3194 = vld [vmem:[#allocation3 + $0x58] sm:$0xff]
  %v3195 = vld [vmem:[%s4] sm:$0xf]
  %v3196 = vld [vmem:[%s4 + $0x4] sm:$0xf]
  %v3197 = vld [vmem:[%s4 + $0x8] sm:$0xf]
  %v3198 = vld [vmem:[%s4 + $0xc] sm:$0xf]
  %v3199 = vld [vmem:[%s4 + $0x10] sm:$0xf]
  %v3200 = vld [vmem:[%s4 + $0x14] sm:$0xf]
  %v3201 = vld [vmem:[%s4 + $0x18] sm:$0xf]
  %v3202 = vld [vmem:[%s4 + $0x1c] sm:$0xf]
  %v3203 = vld [vmem:[%s4 + $0x20] sm:$0xf]
  %v3204 = vld [vmem:[%s4 + $0x24] sm:$0xf]
  %v3205 = vld [vmem:[%s4 + $0x28] sm:$0xf]
  %v3206 = vld [vmem:[%s4 + $0x2c] sm:$0xf]
  %v3207 = vld [vmem:[%s4 + $0x30] sm:$0xf]
  %v3208 = vld [vmem:[%s4 + $0x34] sm:$0xf]
  %v3209 = vld [vmem:[%s4 + $0x38] sm:$0xf]
  %v3210 = vld [vmem:[%s4 + $0x3c] sm:$0xf]
  %v3211 = vld [vmem:[%s4 + $0x40] sm:$0xf]
  %v3212 = vld [vmem:[%s4 + $0x44] sm:$0xf]
  %v3213 = vld [vmem:[%s4 + $0x48] sm:$0xf]
  %v3214 = vld [vmem:[%s4 + $0x4c] sm:$0xf]
  %v3215 = vld [vmem:[%s4 + $0x50] sm:$0xf]
  %v3216 = vld [vmem:[%s4 + $0x54] sm:$0xf]
  %v3217 = vld [vmem:[%s4 + $0x58] sm:$0xf]
  %v3218 = vld [vmem:[%s4 + $0x5c] sm:$0xf]
  %v3219 = vld [vmem:[%s4 + $0x60] sm:$0xf]
  %v3220 = vld [vmem:[%s4 + $0x64] sm:$0xf]
  %v3221 = vld [vmem:[%s4 + $0x68] sm:$0xf]
  %v3222 = vld [vmem:[%s4 + $0x6c] sm:$0xf]
  %v3223 = vld [vmem:[%s4 + $0x70] sm:$0xf]
  %v3224 = vld [vmem:[%s4 + $0x74] sm:$0xf]
  %v3225 = vld [vmem:[%s4 + $0x78] sm:$0xf]
  %v3226 = vld [vmem:[%s4 + $0x7c] sm:$0xf]
  %v3227 = vld [vmem:[%s4 + $0x80] sm:$0xf]
  %v3228 = vld [vmem:[%s4 + $0x84] sm:$0xf]
  %v3229 = vld [vmem:[%s4 + $0x88] sm:$0xf]
  %v3230 = vld [vmem:[%s4 + $0x8c] sm:$0xf]
  %v3231 = vld [vmem:[%s4 + $0x90] sm:$0xf]
  %v3232 = vld [vmem:[%s4 + $0x94] sm:$0xf]
  %v3233 = vld [vmem:[%s4 + $0x98] sm:$0xf]
  %v3234 = vld [vmem:[%s4 + $0x9c] sm:$0xf]
  %v3235 = vld [vmem:[%s4 + $0xa0] sm:$0xf]
  %v3236 = vld [vmem:[%s4 + $0xa4] sm:$0xf]
  %v3237 = vld [vmem:[%s4 + $0xa8] sm:$0xf]
  %v3238 = vld [vmem:[%s4 + $0xac] sm:$0xf]
  %v3239 = vld [vmem:[%s4 + $0xb0] sm:$0xf]
  %v3240 = vld [vmem:[%s4 + $0xb4] sm:$0xf]
  %v3241 = vld [vmem:[%s4 + $0xb8] sm:$0xf]
  %v3242 = vld [vmem:[%s4 + $0xbc] sm:$0xf]
  %v3243 = vld [vmem:[%s4 + $0xc0] sm:$0xf]
  %v3244 = vld [vmem:[%s4 + $0xc4] sm:$0xf]
  %v3245 = vld [vmem:[%s4 + $0xc8] sm:$0xf]
  %v3246 = vld [vmem:[%s4 + $0xcc] sm:$0xf]
  %v3247 = vld [vmem:[%s4 + $0xd0] sm:$0xf]
  %v3248 = vld [vmem:[%s4 + $0xd4] sm:$0xf]
  %v3249 = vld [vmem:[%s4 + $0xd8] sm:$0xf]
  %v3250 = vld [vmem:[%s4 + $0xdc] sm:$0xf]
  %v3251 = vld [vmem:[%s4 + $0xe0] sm:$0xf]
  %v3252 = vld [vmem:[%s4 + $0xe4] sm:$0xf]
  %v3253 = vld [vmem:[%s4 + $0xe8] sm:$0xf]
  %v3254 = vld [vmem:[%s4 + $0xec] sm:$0xf]
  %v3255 = vld [vmem:[%s4 + $0xf0] sm:$0xf]
  %v3256 = vld [vmem:[%s4 + $0xf4] sm:$0xf]
  %v3257 = vld [vmem:[%s4 + $0xf8] sm:$0xf]
  %v3258 = vld [vmem:[%s4 + $0xfc] sm:$0xf]
  %v3259 = vld [vmem:[%s4 + $0x100] sm:$0xf]
  %v3260 = vld [vmem:[%s4 + $0x104] sm:$0xf]
  %v3261 = vld [vmem:[%s4 + $0x108] sm:$0xf]
  %v3262 = vld [vmem:[%s4 + $0x10c] sm:$0xf]
  %v3263 = vld [vmem:[%s4 + $0x110] sm:$0xf]
  %v3264 = vld [vmem:[%s4 + $0x114] sm:$0xf]
  %v3265 = vld [vmem:[%s4 + $0x118] sm:$0xf]
  %v3266 = vld [vmem:[%s4 + $0x11c] sm:$0xf]
  %v3267 = vld [vmem:[%s4 + $0x120] sm:$0xf]
  %v3268 = vld [vmem:[%s4 + $0x124] sm:$0xf]
  %v3269 = vld [vmem:[%s4 + $0x128] sm:$0xf]
  %v3270 = vld [vmem:[%s4 + $0x12c] sm:$0xf]
  %v3271 = vld [vmem:[%s4 + $0x130] sm:$0xf]
  %v3272 = vld [vmem:[%s4 + $0x134] sm:$0xf]
  %v3273 = vld [vmem:[%s4 + $0x138] sm:$0xf]
  %v3274 = vld [vmem:[%s4 + $0x13c] sm:$0xf]
  %v3275 = vld [vmem:[%s4 + $0x140] sm:$0xf]
  %v3276 = vld [vmem:[%s4 + $0x144] sm:$0xf]
  %v3277 = vld [vmem:[%s4 + $0x148] sm:$0xf]
  %v3278 = vld [vmem:[%s4 + $0x14c] sm:$0xf]
  %v3279 = vld [vmem:[%s4 + $0x150] sm:$0xf]
  %v3280 = vld [vmem:[%s4 + $0x154] sm:$0xf]
  %v3281 = vld [vmem:[%s4 + $0x158] sm:$0xf]
  %v3282 = vld [vmem:[%s4 + $0x15c] sm:$0xf]
  %v3283 = vld [vmem:[%s4 + $0x160] sm:$0xf]
  %v3284 = vld [vmem:[%s4 + $0x164] sm:$0xf]
  %v3285 = vld [vmem:[%s4 + $0x168] sm:$0xf]
  %v3286 = vld [vmem:[%s4 + $0x16c] sm:$0xf]
  %v3287 = vld [vmem:[%s4 + $0x170] sm:$0xf]
  %v3288 = vld [vmem:[%s4 + $0x174] sm:$0xf]
  %v3289 = vld [vmem:[%s4 + $0x178] sm:$0xf]
  %v3290 = vld [vmem:[%s4 + $0x17c] sm:$0xf]
  %v3291 = vld [vmem:[%s4 + $0x180] sm:$0xf]
  %v3292 = vld [vmem:[%s4 + $0x184] sm:$0xf]
  %v3293 = vld [vmem:[%s4 + $0x188] sm:$0xf]
  %v3294 = vld [vmem:[%s4 + $0x18c] sm:$0xf]
  %v3295 = vld [vmem:[%s4 + $0x190] sm:$0xf]
  %v3296 = vld [vmem:[%s4 + $0x194] sm:$0xf]
  %v3297 = vld [vmem:[%s4 + $0x198] sm:$0xf]
  %v3298 = vld [vmem:[%s4 + $0x19c] sm:$0xf]
  %v3299 = vld [vmem:[%s4 + $0x1a0] sm:$0xf]
  %v3300 = vld [vmem:[%s4 + $0x1a4] sm:$0xf]
  %v3301 = vld [vmem:[%s4 + $0x1a8] sm:$0xf]
  %v3302 = vld [vmem:[%s4 + $0x1ac] sm:$0xf]
  %v3303 = vld [vmem:[%s4 + $0x1b0] sm:$0xf]
  %v3304 = vld [vmem:[%s4 + $0x1b4] sm:$0xf]
  %v3305 = vld [vmem:[%s4 + $0x1b8] sm:$0xf]
  %v3306 = vld [vmem:[%s4 + $0x1bc] sm:$0xf]
  %v3307 = vld [vmem:[%s4 + $0x1c0] sm:$0xf]
  %v3308 = vld [vmem:[%s4 + $0x1c4] sm:$0xf]
  %v3309 = vld [vmem:[%s4 + $0x1c8] sm:$0xf]
  %v3310 = vld [vmem:[%s4 + $0x1cc] sm:$0xf]
  %v3311 = vld [vmem:[%s4 + $0x1d0] sm:$0xf]
  %v3312 = vld [vmem:[%s4 + $0x1d4] sm:$0xf]
  %v3313 = vld [vmem:[%s4 + $0x1d8] sm:$0xf]
  %v3314 = vld [vmem:[%s4 + $0x1dc] sm:$0xf]
  %v3315 = vld [vmem:[%s4 + $0x1e0] sm:$0xf]
  %v3316 = vld [vmem:[%s4 + $0x1e4] sm:$0xf]
  %v3317 = vld [vmem:[%s4 + $0x1e8] sm:$0xf]
  %v3318 = vld [vmem:[%s4 + $0x1ec] sm:$0xf]
  %v3319 = vld [vmem:[%s4 + $0x1f0] sm:$0xf]
  %v3320 = vld [vmem:[%s4 + $0x1f4] sm:$0xf]
  %v3321 = vld [vmem:[%s4 + $0x1f8] sm:$0xf]
  %v3322 = vld [vmem:[%s4 + $0x1fc] sm:$0xf]
  %v3323 = vld [vmem:[%s4 + $0x200] sm:$0xf]
  %v3324 = vld [vmem:[%s4 + $0x204] sm:$0xf]
  %v3325 = vld [vmem:[%s4 + $0x208] sm:$0xf]
  %v3326 = vld [vmem:[%s4 + $0x20c] sm:$0xf]
  %v3327 = vld [vmem:[%s4 + $0x210] sm:$0xf]
  %v3328 = vld [vmem:[%s4 + $0x214] sm:$0xf]
  %v3329 = vld [vmem:[%s4 + $0x218] sm:$0xf]
  %v3330 = vld [vmem:[%s4 + $0x21c] sm:$0xf]
  %v3331 = vld [vmem:[%s4 + $0x220] sm:$0xf]
  %v3332 = vld [vmem:[%s4 + $0x224] sm:$0xf]
  %v3333 = vld [vmem:[%s4 + $0x228] sm:$0xf]
  %v3334 = vld [vmem:[%s4 + $0x22c] sm:$0xf]
  %v3335 = vld [vmem:[%s4 + $0x230] sm:$0xf]
  %v3336 = vld [vmem:[%s4 + $0x234] sm:$0xf]
  %v3337 = vld [vmem:[%s4 + $0x238] sm:$0xf]
  %v3338 = vld [vmem:[%s4 + $0x23c] sm:$0xf]
  %v3339 = vld [vmem:[%s4 + $0x240] sm:$0xf]
  %v3340 = vld [vmem:[%s4 + $0x244] sm:$0xf]
  %v3341 = vld [vmem:[%s4 + $0x248] sm:$0xf]
  %v3342 = vld [vmem:[%s4 + $0x24c] sm:$0xf]
  %v3343 = vld [vmem:[%s4 + $0x250] sm:$0xf]
  %v3344 = vld [vmem:[%s4 + $0x254] sm:$0xf]
  %v3345 = vld [vmem:[%s4 + $0x258] sm:$0xf]
  %v3346 = vld [vmem:[%s4 + $0x25c] sm:$0xf]
  %v3347 = vld [vmem:[%s4 + $0x260] sm:$0xf]
  %v3348 = vld [vmem:[%s4 + $0x264] sm:$0xf]
  %v3349 = vld [vmem:[%s4 + $0x268] sm:$0xf]
  %v3350 = vld [vmem:[%s4 + $0x26c] sm:$0xf]
  %v3351 = vld [vmem:[%s4 + $0x270] sm:$0xf]
  %v3352 = vld [vmem:[%s4 + $0x274] sm:$0xf]
  %v3353 = vld [vmem:[%s4 + $0x278] sm:$0xf]
  %v3354 = vld [vmem:[%s4 + $0x27c] sm:$0xf]
  %v3355 = vld [vmem:[%s4 + $0x280] sm:$0xf]
  %v3356 = vld [vmem:[%s4 + $0x284] sm:$0xf]
  %v3357 = vld [vmem:[%s4 + $0x288] sm:$0xf]
  %v3358 = vld [vmem:[%s4 + $0x28c] sm:$0xf]
  %v3359 = vld [vmem:[%s4 + $0x290] sm:$0xf]
  %v3360 = vld [vmem:[%s4 + $0x294] sm:$0xf]
  %v3361 = vld [vmem:[%s4 + $0x298] sm:$0xf]
  %v3362 = vld [vmem:[%s4 + $0x29c] sm:$0xf]
  %v3363 = vld [vmem:[%s4 + $0x2a0] sm:$0xf]
  %v3364 = vld [vmem:[%s4 + $0x2a4] sm:$0xf]
  %v3365 = vld [vmem:[%s4 + $0x2a8] sm:$0xf]
  %v3366 = vld [vmem:[%s4 + $0x2ac] sm:$0xf]
  %v3367 = vld [vmem:[%s4 + $0x2b0] sm:$0xf]
  %v3368 = vld [vmem:[%s4 + $0x2b4] sm:$0xf]
  %v3369 = vld [vmem:[%s4 + $0x2b8] sm:$0xf]
  %v3370 = vld [vmem:[%s4 + $0x2bc] sm:$0xf]
  %v3371 = vld [vmem:[%s4 + $0x2c0] sm:$0xf]
  %v3372 = vld [vmem:[%s4 + $0x2c4] sm:$0xf]
  %v3373 = vld [vmem:[%s4 + $0x2c8] sm:$0xf]
  %v3374 = vld [vmem:[%s4 + $0x2cc] sm:$0xf]
  %v3375 = vld [vmem:[%s4 + $0x2d0] sm:$0xf]
  %v3376 = vld [vmem:[%s4 + $0x2d4] sm:$0xf]
  %v3377 = vld [vmem:[%s4 + $0x2d8] sm:$0xf]
  %v3378 = vld [vmem:[%s4 + $0x2dc] sm:$0xf]
  %v3379 = vld [vmem:[%s4 + $0x2e0] sm:$0xf]
  %v3380 = vld [vmem:[%s4 + $0x2e4] sm:$0xf]
  %v3381 = vld [vmem:[%s4 + $0x2e8] sm:$0xf]
  %v3382 = vld [vmem:[%s4 + $0x2ec] sm:$0xf]
  %v3383 = vld [vmem:[%s4 + $0x2f0] sm:$0xf]
  %v3384 = vld [vmem:[%s4 + $0x2f4] sm:$0xf]
  %v3385 = vld [vmem:[%s4 + $0x2f8] sm:$0xf]
  %v3386 = vld [vmem:[%s4 + $0x2fc] sm:$0xf]
  %v3387 = vld [vmem:[%s5] sm:$0x1]
  %v3389 = vlaneseq
  %v3390 = vshrl.u32 %v3389, 7
  %v3391 = vsub.s32 0, %v3390
  %v3392 = vrot.slane %v3387, %v3391
  %v3586 = vunpack.c.l.b16 %v3195
  %v3587 = vunpack.c.l.b16 %v3196
  %v3588 = vunpack.c.l.b16 %v3197
  %v3589 = vunpack.c.l.b16 %v3198
  %v3590 = vunpack.c.l.b16 %v3199
  %v3591 = vunpack.c.l.b16 %v3200
  %v3592 = vunpack.c.l.b16 %v3201
  %v3593 = vunpack.c.l.b16 %v3202
  %v3594 = vunpack.c.l.b16 %v3203
  %v3595 = vunpack.c.l.b16 %v3204
  %v3596 = vunpack.c.l.b16 %v3205
  %v3597 = vunpack.c.l.b16 %v3206
  %v3598 = vunpack.c.l.b16 %v3207
  %v3599 = vunpack.c.l.b16 %v3208
  %v3600 = vunpack.c.l.b16 %v3209
  %v3601 = vunpack.c.l.b16 %v3210
  %v3602 = vunpack.c.l.b16 %v3211
  %v3603 = vunpack.c.l.b16 %v3212
  %v3604 = vunpack.c.l.b16 %v3213
  %v3605 = vunpack.c.l.b16 %v3214
  %v3606 = vunpack.c.l.b16 %v3215
  %v3607 = vunpack.c.l.b16 %v3216
  %v3608 = vunpack.c.l.b16 %v3217
  %v3609 = vunpack.c.l.b16 %v3218
  %v3610 = vunpack.c.l.b16 %v3219
  %v3611 = vunpack.c.l.b16 %v3220
  %v3612 = vunpack.c.l.b16 %v3221
  %v3613 = vunpack.c.l.b16 %v3222
  %v3614 = vunpack.c.l.b16 %v3223
  %v3615 = vunpack.c.l.b16 %v3224
  %v3616 = vunpack.c.l.b16 %v3225
  %v3617 = vunpack.c.l.b16 %v3226
  %v3618 = vunpack.c.l.b16 %v3227
  %v3619 = vunpack.c.l.b16 %v3228
  %v3620 = vunpack.c.l.b16 %v3229
  %v3621 = vunpack.c.l.b16 %v3230
  %v3622 = vunpack.c.l.b16 %v3231
  %v3623 = vunpack.c.l.b16 %v3232
  %v3624 = vunpack.c.l.b16 %v3233
  %v3625 = vunpack.c.l.b16 %v3234
  %v3626 = vunpack.c.l.b16 %v3235
  %v3627 = vunpack.c.l.b16 %v3236
  %v3628 = vunpack.c.l.b16 %v3237
  %v3629 = vunpack.c.l.b16 %v3238
  %v3630 = vunpack.c.l.b16 %v3239
  %v3631 = vunpack.c.l.b16 %v3240
  %v3632 = vunpack.c.l.b16 %v3241
  %v3633 = vunpack.c.l.b16 %v3242
  %v3634 = vunpack.c.l.b16 %v3243
  %v3635 = vunpack.c.l.b16 %v3244
  %v3636 = vunpack.c.l.b16 %v3245
  %v3637 = vunpack.c.l.b16 %v3246
  %v3638 = vunpack.c.l.b16 %v3247
  %v3639 = vunpack.c.l.b16 %v3248
  %v3640 = vunpack.c.l.b16 %v3249
  %v3641 = vunpack.c.l.b16 %v3250
  %v3642 = vunpack.c.l.b16 %v3251
  %v3643 = vunpack.c.l.b16 %v3252
  %v3644 = vunpack.c.l.b16 %v3253
  %v3645 = vunpack.c.l.b16 %v3254
  %v3646 = vunpack.c.l.b16 %v3255
  %v3647 = vunpack.c.l.b16 %v3256
  %v3648 = vunpack.c.l.b16 %v3257
  %v3649 = vunpack.c.l.b16 %v3258
  %v3650 = vunpack.c.l.b16 %v3259
  %v3651 = vunpack.c.l.b16 %v3260
  %v3652 = vunpack.c.l.b16 %v3261
  %v3653 = vunpack.c.l.b16 %v3262
  %v3654 = vunpack.c.l.b16 %v3263
  %v3655 = vunpack.c.l.b16 %v3264
  %v3656 = vunpack.c.l.b16 %v3265
  %v3657 = vunpack.c.l.b16 %v3266
  %v3658 = vunpack.c.l.b16 %v3267
  %v3659 = vunpack.c.l.b16 %v3268
  %v3660 = vunpack.c.l.b16 %v3269
  %v3661 = vunpack.c.l.b16 %v3270
  %v3662 = vunpack.c.l.b16 %v3271
  %v3663 = vunpack.c.l.b16 %v3272
  %v3664 = vunpack.c.l.b16 %v3273
  %v3665 = vunpack.c.l.b16 %v3274
  %v3666 = vunpack.c.l.b16 %v3275
  %v3667 = vunpack.c.l.b16 %v3276
  %v3668 = vunpack.c.l.b16 %v3277
  %v3669 = vunpack.c.l.b16 %v3278
  %v3670 = vunpack.c.l.b16 %v3279
  %v3671 = vunpack.c.l.b16 %v3280
  %v3672 = vunpack.c.l.b16 %v3281
  %v3673 = vunpack.c.l.b16 %v3282
  %v3674 = vunpack.c.l.b16 %v3283
  %v3675 = vunpack.c.l.b16 %v3284
  %v3676 = vunpack.c.l.b16 %v3285
  %v3677 = vunpack.c.l.b16 %v3286
  %v3678 = vunpack.c.l.b16 %v3287
  %v3679 = vunpack.c.l.b16 %v3288
  %v3680 = vunpack.c.l.b16 %v3289
  %v3681 = vunpack.c.l.b16 %v3290
  %v3682 = vunpack.c.l.b16 %v3291
  %v3683 = vunpack.c.l.b16 %v3292
  %v3684 = vunpack.c.l.b16 %v3293
  %v3685 = vunpack.c.l.b16 %v3294
  %v3686 = vunpack.c.l.b16 %v3295
  %v3687 = vunpack.c.l.b16 %v3296
  %v3688 = vunpack.c.l.b16 %v3297
  %v3689 = vunpack.c.l.b16 %v3298
  %v3690 = vunpack.c.l.b16 %v3299
  %v3691 = vunpack.c.l.b16 %v3300
  %v3692 = vunpack.c.l.b16 %v3301
  %v3693 = vunpack.c.l.b16 %v3302
  %v3694 = vunpack.c.l.b16 %v3303
  %v3695 = vunpack.c.l.b16 %v3304
  %v3696 = vunpack.c.l.b16 %v3305
  %v3697 = vunpack.c.l.b16 %v3306
  %v3698 = vunpack.c.l.b16 %v3307
  %v3699 = vunpack.c.l.b16 %v3308
  %v3700 = vunpack.c.l.b16 %v3309
  %v3701 = vunpack.c.l.b16 %v3310
  %v3702 = vunpack.c.l.b16 %v3311
  %v3703 = vunpack.c.l.b16 %v3312
  %v3704 = vunpack.c.l.b16 %v3313
  %v3705 = vunpack.c.l.b16 %v3314
  %v3706 = vunpack.c.l.b16 %v3315
  %v3707 = vunpack.c.l.b16 %v3316
  %v3708 = vunpack.c.l.b16 %v3317
  %v3709 = vunpack.c.l.b16 %v3318
  %v3710 = vunpack.c.l.b16 %v3319
  %v3711 = vunpack.c.l.b16 %v3320
  %v3712 = vunpack.c.l.b16 %v3321
  %v3713 = vunpack.c.l.b16 %v3322
  %v3714 = vunpack.c.l.b16 %v3323
  %v3715 = vunpack.c.l.b16 %v3324
  %v3716 = vunpack.c.l.b16 %v3325
  %v3717 = vunpack.c.l.b16 %v3326
  %v3718 = vunpack.c.l.b16 %v3327
  %v3719 = vunpack.c.l.b16 %v3328
  %v3720 = vunpack.c.l.b16 %v3329
  %v3721 = vunpack.c.l.b16 %v3330
  %v3722 = vunpack.c.l.b16 %v3331
  %v3723 = vunpack.c.l.b16 %v3332
  %v3724 = vunpack.c.l.b16 %v3333
  %v3725 = vunpack.c.l.b16 %v3334
  %v3726 = vunpack.c.l.b16 %v3335
  %v3727 = vunpack.c.l.b16 %v3336
  %v3728 = vunpack.c.l.b16 %v3337
  %v3729 = vunpack.c.l.b16 %v3338
  %v3730 = vunpack.c.l.b16 %v3339
  %v3731 = vunpack.c.l.b16 %v3340
  %v3732 = vunpack.c.l.b16 %v3341
  %v3733 = vunpack.c.l.b16 %v3342
  %v3734 = vunpack.c.l.b16 %v3343
  %v3735 = vunpack.c.l.b16 %v3344
  %v3736 = vunpack.c.l.b16 %v3345
  %v3737 = vunpack.c.l.b16 %v3346
  %v3738 = vunpack.c.l.b16 %v3347
  %v3739 = vunpack.c.l.b16 %v3348
  %v3740 = vunpack.c.l.b16 %v3349
  %v3741 = vunpack.c.l.b16 %v3350
  %v3742 = vunpack.c.l.b16 %v3351
  %v3743 = vunpack.c.l.b16 %v3352
  %v3744 = vunpack.c.l.b16 %v3353
  %v3745 = vunpack.c.l.b16 %v3354
  %v3746 = vunpack.c.l.b16 %v3355
  %v3747 = vunpack.c.l.b16 %v3356
  %v3748 = vunpack.c.l.b16 %v3357
  %v3749 = vunpack.c.l.b16 %v3358
  %v3750 = vunpack.c.l.b16 %v3359
  %v3751 = vunpack.c.l.b16 %v3360
  %v3752 = vunpack.c.l.b16 %v3361
  %v3753 = vunpack.c.l.b16 %v3362
  %v3754 = vunpack.c.l.b16 %v3363
  %v3755 = vunpack.c.l.b16 %v3364
  %v3756 = vunpack.c.l.b16 %v3365
  %v3757 = vunpack.c.l.b16 %v3366
  %v3758 = vunpack.c.l.b16 %v3367
  %v3759 = vunpack.c.l.b16 %v3368
  %v3760 = vunpack.c.l.b16 %v3369
  %v3761 = vunpack.c.l.b16 %v3370
  %v3762 = vunpack.c.l.b16 %v3371
  %v3763 = vunpack.c.l.b16 %v3372
  %v3764 = vunpack.c.l.b16 %v3373
  %v3765 = vunpack.c.l.b16 %v3374
  %v3766 = vunpack.c.l.b16 %v3375
  %v3767 = vunpack.c.l.b16 %v3376
  %v3768 = vunpack.c.l.b16 %v3377
  %v3769 = vunpack.c.l.b16 %v3378
  %v3770 = vunpack.c.l.b16 %v3379
  %v3771 = vunpack.c.l.b16 %v3380
  %v3772 = vunpack.c.l.b16 %v3381
  %v3773 = vunpack.c.l.b16 %v3382
  %v3774 = vunpack.c.l.b16 %v3383
  %v3775 = vunpack.c.l.b16 %v3384
  %v3776 = vunpack.c.l.b16 %v3385
  %v3777 = vunpack.c.l.b16 %v3386
  %v3778 = vpack.c.b16 %v3587, %v3586
  %v3779 = vpack.c.b16 %v3589, %v3588
  %v3780 = vpack.c.b16 %v3591, %v3590
  %v3781 = vpack.c.b16 %v3593, %v3592
  %v3782 = vpack.c.b16 %v3595, %v3594
  %v3783 = vpack.c.b16 %v3597, %v3596
  %v3784 = vpack.c.b16 %v3599, %v3598
  %v3785 = vpack.c.b16 %v3601, %v3600
  %v3786 = vpack.c.b16 %v3603, %v3602
  %v3787 = vpack.c.b16 %v3605, %v3604
  %v3788 = vpack.c.b16 %v3607, %v3606
  %v3789 = vpack.c.b16 %v3609, %v3608
  %v3790 = vpack.c.b16 %v3611, %v3610
  %v3791 = vpack.c.b16 %v3613, %v3612
  %v3792 = vpack.c.b16 %v3615, %v3614
  %v3793 = vpack.c.b16 %v3617, %v3616
  %v3794 = vpack.c.b16 %v3619, %v3618
  %v3795 = vpack.c.b16 %v3621, %v3620
  %v3796 = vpack.c.b16 %v3623, %v3622
  %v3797 = vpack.c.b16 %v3625, %v3624
  %v3798 = vpack.c.b16 %v3627, %v3626
  %v3799 = vpack.c.b16 %v3629, %v3628
  %v3800 = vpack.c.b16 %v3631, %v3630
  %v3801 = vpack.c.b16 %v3633, %v3632
  %v3802 = vpack.c.b16 %v3635, %v3634
  %v3803 = vpack.c.b16 %v3637, %v3636
  %v3804 = vpack.c.b16 %v3639, %v3638
  %v3805 = vpack.c.b16 %v3641, %v3640
  %v3806 = vpack.c.b16 %v3643, %v3642
  %v3807 = vpack.c.b16 %v3645, %v3644
  %v3808 = vpack.c.b16 %v3647, %v3646
  %v3809 = vpack.c.b16 %v3649, %v3648
  %v3810 = vpack.c.b16 %v3651, %v3650
  %v3811 = vpack.c.b16 %v3653, %v3652
  %v3812 = vpack.c.b16 %v3655, %v3654
  %v3813 = vpack.c.b16 %v3657, %v3656
  %v3814 = vpack.c.b16 %v3659, %v3658
  %v3815 = vpack.c.b16 %v3661, %v3660
  %v3816 = vpack.c.b16 %v3663, %v3662
  %v3817 = vpack.c.b16 %v3665, %v3664
  %v3818 = vpack.c.b16 %v3667, %v3666
  %v3819 = vpack.c.b16 %v3669, %v3668
  %v3820 = vpack.c.b16 %v3671, %v3670
  %v3821 = vpack.c.b16 %v3673, %v3672
  %v3822 = vpack.c.b16 %v3675, %v3674
  %v3823 = vpack.c.b16 %v3677, %v3676
  %v3824 = vpack.c.b16 %v3679, %v3678
  %v3825 = vpack.c.b16 %v3681, %v3680
  %v3826 = vpack.c.b16 %v3683, %v3682
  %v3827 = vpack.c.b16 %v3685, %v3684
  %v3828 = vpack.c.b16 %v3687, %v3686
  %v3829 = vpack.c.b16 %v3689, %v3688
  %v3830 = vpack.c.b16 %v3691, %v3690
  %v3831 = vpack.c.b16 %v3693, %v3692
  %v3832 = vpack.c.b16 %v3695, %v3694
  %v3833 = vpack.c.b16 %v3697, %v3696
  %v3834 = vpack.c.b16 %v3699, %v3698
  %v3835 = vpack.c.b16 %v3701, %v3700
  %v3836 = vpack.c.b16 %v3703, %v3702
  %v3837 = vpack.c.b16 %v3705, %v3704
  %v3838 = vpack.c.b16 %v3707, %v3706
  %v3839 = vpack.c.b16 %v3709, %v3708
  %v3840 = vpack.c.b16 %v3711, %v3710
  %v3841 = vpack.c.b16 %v3713, %v3712
  %v3842 = vpack.c.b16 %v3715, %v3714
  %v3843 = vpack.c.b16 %v3717, %v3716
  %v3844 = vpack.c.b16 %v3719, %v3718
  %v3845 = vpack.c.b16 %v3721, %v3720
  %v3846 = vpack.c.b16 %v3723, %v3722
  %v3847 = vpack.c.b16 %v3725, %v3724
  %v3848 = vpack.c.b16 %v3727, %v3726
  %v3849 = vpack.c.b16 %v3729, %v3728
  %v3850 = vpack.c.b16 %v3731, %v3730
  %v3851 = vpack.c.b16 %v3733, %v3732
  %v3852 = vpack.c.b16 %v3735, %v3734
  %v3853 = vpack.c.b16 %v3737, %v3736
  %v3854 = vpack.c.b16 %v3739, %v3738
  %v3855 = vpack.c.b16 %v3741, %v3740
  %v3856 = vpack.c.b16 %v3743, %v3742
  %v3857 = vpack.c.b16 %v3745, %v3744
  %v3858 = vpack.c.b16 %v3747, %v3746
  %v3859 = vpack.c.b16 %v3749, %v3748
  %v3860 = vpack.c.b16 %v3751, %v3750
  %v3861 = vpack.c.b16 %v3753, %v3752
  %v3862 = vpack.c.b16 %v3755, %v3754
  %v3863 = vpack.c.b16 %v3757, %v3756
  %v3864 = vpack.c.b16 %v3759, %v3758
  %v3865 = vpack.c.b16 %v3761, %v3760
  %v3866 = vpack.c.b16 %v3763, %v3762
  %v3867 = vpack.c.b16 %v3765, %v3764
  %v3868 = vpack.c.b16 %v3767, %v3766
  %v3869 = vpack.c.b16 %v3769, %v3768
  %v3870 = vpack.c.b16 %v3771, %v3770
  %v3871 = vpack.c.b16 %v3773, %v3772
  %v3872 = vpack.c.b16 %v3775, %v3774
  %v3873 = vpack.c.b16 %v3777, %v3776
  %3970 = vmatprep.subr.bf16.mxu0 0
  %3971 = vmatpush1.bf16.msra.mxu0 %v3778
  %3972 = vmatprep.subr.bf16.mxu0 0
  %3973 = vmatpush1.bf16.msra.mxu0 %v3779
  %3974 = vmatprep.subr.bf16.mxu0 0
  %3975 = vmatpush1.bf16.msra.mxu0 %v3780
  %3976 = vmatprep.subr.bf16.mxu0 0
  %3977 = vmatpush1.bf16.msra.mxu0 %v3781
  %3978 = vmatprep.subr.bf16.mxu0 0
  %3979 = vmatpush1.bf16.msra.mxu0 %v3782
  %3980 = vmatprep.subr.bf16.mxu0 0
  %3981 = vmatpush1.bf16.msra.mxu0 %v3783
  %3982 = vmatprep.subr.bf16.mxu0 0
  %3983 = vmatpush1.bf16.msra.mxu0 %v3784
  %3984 = vmatprep.subr.bf16.mxu0 0
  %3985 = vmatpush1.bf16.msra.mxu0 %v3785
  %3986 = vmatprep.subr.bf16.mxu0 0
  %3987 = vmatpush1.bf16.msra.mxu0 %v3786
  %3988 = vmatprep.subr.bf16.mxu0 0
  %3989 = vmatpush1.bf16.msra.mxu0 %v3787
  %3990 = vmatprep.subr.bf16.mxu0 0
  %3991 = vmatpush1.bf16.msra.mxu0 %v3788
  %3992 = vmatprep.subr.bf16.mxu0 0
  %3993 = vmatpush1.bf16.msra.mxu0 %v3789
  %3994 = vmatprep.subr.bf16.mxu0 0
  %3995 = vmatpush1.bf16.msra.mxu0 %v3790
  %3996 = vmatprep.subr.bf16.mxu0 0
  %3997 = vmatpush1.bf16.msra.mxu0 %v3791
  %3998 = vmatprep.subr.bf16.mxu0 0
  %3999 = vmatpush1.bf16.msra.mxu0 %v3792
  %4000 = vmatprep.subr.bf16.mxu0 0
  %4001 = vmatpush1.bf16.msra.mxu0 %v3793
  %4002 = vmatprep.mubr.bf16.mxu0 %v3184
  %4003 = vmatmul.mubr.bf16.gmra.mrb[0].mxu0 %v3183
  %v4004 = vpop.f32.mrb[0].mxu0
  %v4005 = vadd.f32 %v3392, %v4004
  %v4006 = vpop.f32.mrb[0].mxu0
  %v4007 = vpop.f32.mrb[0].mxu0
  %v4008 = vadd.f32 %v3392, %v4007
  %v4009 = vpop.f32.mrb[0].mxu0
  %4010 = vdwg.mxu0
  %4011 = vmatprep.subr.bf16.mxu0 0
  %4012 = vmatpush1.bf16.msra.mxu0 %v3794
  %4013 = vmatprep.subr.bf16.mxu0 0
  %4014 = vmatpush1.bf16.msra.mxu0 %v3795
  %4015 = vmatprep.subr.bf16.mxu0 0
  %4016 = vmatpush1.bf16.msra.mxu0 %v3796
  %4017 = vmatprep.subr.bf16.mxu0 0
  %4018 = vmatpush1.bf16.msra.mxu0 %v3797
  %4019 = vmatprep.subr.bf16.mxu0 0
  %4020 = vmatpush1.bf16.msra.mxu0 %v3798
  %4021 = vmatprep.subr.bf16.mxu0 0
  %4022 = vmatpush1.bf16.msra.mxu0 %v3799
  %4023 = vmatprep.subr.bf16.mxu0 0
  %4024 = vmatpush1.bf16.msra.mxu0 %v3800
  %4025 = vmatprep.subr.bf16.mxu0 0
  %4026 = vmatpush1.bf16.msra.mxu0 %v3801
  %4027 = vmatprep.subr.bf16.mxu0 0
  %4028 = vmatpush1.bf16.msra.mxu0 %v3802
  %4029 = vmatprep.subr.bf16.mxu0 0
  %4030 = vmatpush1.bf16.msra.mxu0 %v3803
  %4031 = vmatprep.subr.bf16.mxu0 0
  %4032 = vmatpush1.bf16.msra.mxu0 %v3804
  %4033 = vmatprep.subr.bf16.mxu0 0
  %4034 = vmatpush1.bf16.msra.mxu0 %v3805
  %4035 = vmatprep.subr.bf16.mxu0 0
  %4036 = vmatpush1.bf16.msra.mxu0 %v3806
  %4037 = vmatprep.subr.bf16.mxu0 0
  %4038 = vmatpush1.bf16.msra.mxu0 %v3807
  %4039 = vmatprep.subr.bf16.mxu0 0
  %4040 = vmatpush1.bf16.msra.mxu0 %v3808
  %4041 = vmatprep.subr.bf16.mxu0 0
  %4042 = vmatpush1.bf16.msra.mxu0 %v3809
  %4043 = vmatprep.mubr.bf16.mxu0 %v3186
  %4044 = vmatmul.mubr.bf16.gmra.mrb[0].mxu0 %v3185
  %v4045 = vpop.f32.mrb[0].mxu0
  %v4046 = vadd.f32 %v4005, %v4045
  %v4047 = vpop.f32.mrb[0].mxu0
  %v4048 = vpop.f32.mrb[0].mxu0
  %v4049 = vadd.f32 %v4008, %v4048
  %v4050 = vpop.f32.mrb[0].mxu0
  %4051 = vdwg.mxu0
  %4052 = vmatprep.subr.bf16.mxu0 0
  %4053 = vmatpush1.bf16.msra.mxu0 %v3810
  %4054 = vmatprep.subr.bf16.mxu0 0
  %4055 = vmatpush1.bf16.msra.mxu0 %v3811
  %4056 = vmatprep.subr.bf16.mxu0 0
  %4057 = vmatpush1.bf16.msra.mxu0 %v3812
  %4058 = vmatprep.subr.bf16.mxu0 0
  %4059 = vmatpush1.bf16.msra.mxu0 %v3813
  %4060 = vmatprep.subr.bf16.mxu0 0
  %4061 = vmatpush1.bf16.msra.mxu0 %v3814
  %4062 = vmatprep.subr.bf16.mxu0 0
  %4063 = vmatpush1.bf16.msra.mxu0 %v3815
  %4064 = vmatprep.subr.bf16.mxu0 0
  %4065 = vmatpush1.bf16.msra.mxu0 %v3816
  %4066 = vmatprep.subr.bf16.mxu0 0
  %4067 = vmatpush1.bf16.msra.mxu0 %v3817
  %4068 = vmatprep.subr.bf16.mxu0 0
  %4069 = vmatpush1.bf16.msra.mxu0 %v3818
  %4070 = vmatprep.subr.bf16.mxu0 0
  %4071 = vmatpush1.bf16.msra.mxu0 %v3819
  %4072 = vmatprep.subr.bf16.mxu0 0
  %4073 = vmatpush1.bf16.msra.mxu0 %v3820
  %4074 = vmatprep.subr.bf16.mxu0 0
  %4075 = vmatpush1.bf16.msra.mxu0 %v3821
  %4076 = vmatprep.subr.bf16.mxu0 0
  %4077 = vmatpush1.bf16.msra.mxu0 %v3822
  %4078 = vmatprep.subr.bf16.mxu0 0
  %4079 = vmatpush1.bf16.msra.mxu0 %v3823
  %4080 = vmatprep.subr.bf16.mxu0 0
  %4081 = vmatpush1.bf16.msra.mxu0 %v3824
  %4082 = vmatprep.subr.bf16.mxu0 0
  %4083 = vmatpush1.bf16.msra.mxu0 %v3825
  %4084 = vmatprep.mubr.bf16.mxu0 %v3188
  %4085 = vmatmul.mubr.bf16.gmra.mrb[0].mxu0 %v3187
  %v4086 = vpop.f32.mrb[0].mxu0
  %v4087 = vadd.f32 %v4046, %v4086
  %v4088 = vpop.f32.mrb[0].mxu0
  %v4089 = vpop.f32.mrb[0].mxu0
  %v4090 = vadd.f32 %v4049, %v4089
  %v4091 = vpop.f32.mrb[0].mxu0
  %4092 = vdwg.mxu0
  %4093 = vmatprep.subr.bf16.mxu0 0
  %4094 = vmatpush1.bf16.msra.mxu0 %v3826
  %4095 = vmatprep.subr.bf16.mxu0 0
  %4096 = vmatpush1.bf16.msra.mxu0 %v3827
  %4097 = vmatprep.subr.bf16.mxu0 0
  %4098 = vmatpush1.bf16.msra.mxu0 %v3828
  %4099 = vmatprep.subr.bf16.mxu0 0
  %4100 = vmatpush1.bf16.msra.mxu0 %v3829
  %4101 = vmatprep.subr.bf16.mxu0 0
  %4102 = vmatpush1.bf16.msra.mxu0 %v3830
  %4103 = vmatprep.subr.bf16.mxu0 0
  %4104 = vmatpush1.bf16.msra.mxu0 %v3831
  %4105 = vmatprep.subr.bf16.mxu0 0
  %4106 = vmatpush1.bf16.msra.mxu0 %v3832
  %4107 = vmatprep.subr.bf16.mxu0 0
  %4108 = vmatpush1.bf16.msra.mxu0 %v3833
  %4109 = vmatprep.subr.bf16.mxu0 0
  %4110 = vmatpush1.bf16.msra.mxu0 %v3834
  %4111 = vmatprep.subr.bf16.mxu0 0
  %4112 = vmatpush1.bf16.msra.mxu0 %v3835
  %4113 = vmatprep.subr.bf16.mxu0 0
  %4114 = vmatpush1.bf16.msra.mxu0 %v3836
  %4115 = vmatprep.subr.bf16.mxu0 0
  %4116 = vmatpush1.bf16.msra.mxu0 %v3837
  %4117 = vmatprep.subr.bf16.mxu0 0
  %4118 = vmatpush1.bf16.msra.mxu0 %v3838
  %4119 = vmatprep.subr.bf16.mxu0 0
  %4120 = vmatpush1.bf16.msra.mxu0 %v3839
  %4121 = vmatprep.subr.bf16.mxu0 0
  %4122 = vmatpush1.bf16.msra.mxu0 %v3840
  %4123 = vmatprep.subr.bf16.mxu0 0
  %4124 = vmatpush1.bf16.msra.mxu0 %v3841
  %4125 = vmatprep.mubr.bf16.mxu0 %v3190
  %4126 = vmatmul.mubr.bf16.gmra.mrb[0].mxu0 %v3189
  %v4127 = vpop.f32.mrb[0].mxu0
  %v4128 = vadd.f32 %v4087, %v4127
  %v4129 = vpop.f32.mrb[0].mxu0
  %v4130 = vpop.f32.mrb[0].mxu0
  %v4131 = vadd.f32 %v4090, %v4130
  %v4132 = vpop.f32.mrb[0].mxu0
  %4133 = vdwg.mxu0
  %4134 = vmatprep.subr.bf16.mxu0 0
  %4135 = vmatpush1.bf16.msra.mxu0 %v3842
  %4136 = vmatprep.subr.bf16.mxu0 0
  %4137 = vmatpush1.bf16.msra.mxu0 %v3843
  %4138 = vmatprep.subr.bf16.mxu0 0
  %4139 = vmatpush1.bf16.msra.mxu0 %v3844
  %4140 = vmatprep.subr.bf16.mxu0 0
  %4141 = vmatpush1.bf16.msra.mxu0 %v3845
  %4142 = vmatprep.subr.bf16.mxu0 0
  %4143 = vmatpush1.bf16.msra.mxu0 %v3846
  %4144 = vmatprep.subr.bf16.mxu0 0
  %4145 = vmatpush1.bf16.msra.mxu0 %v3847
  %4146 = vmatprep.subr.bf16.mxu0 0
  %4147 = vmatpush1.bf16.msra.mxu0 %v3848
  %4148 = vmatprep.subr.bf16.mxu0 0
  %4149 = vmatpush1.bf16.msra.mxu0 %v3849
  %4150 = vmatprep.subr.bf16.mxu0 0
  %4151 = vmatpush1.bf16.msra.mxu0 %v3850
  %4152 = vmatprep.subr.bf16.mxu0 0
  %4153 = vmatpush1.bf16.msra.mxu0 %v3851
  %4154 = vmatprep.subr.bf16.mxu0 0
  %4155 = vmatpush1.bf16.msra.mxu0 %v3852
  %4156 = vmatprep.subr.bf16.mxu0 0
  %4157 = vmatpush1.bf16.msra.mxu0 %v3853
  %4158 = vmatprep.subr.bf16.mxu0 0
  %4159 = vmatpush1.bf16.msra.mxu0 %v3854
  %4160 = vmatprep.subr.bf16.mxu0 0
  %4161 = vmatpush1.bf16.msra.mxu0 %v3855
  %4162 = vmatprep.subr.bf16.mxu0 0
  %4163 = vmatpush1.bf16.msra.mxu0 %v3856
  %4164 = vmatprep.subr.bf16.mxu0 0
  %4165 = vmatpush1.bf16.msra.mxu0 %v3857
  %4166 = vmatprep.mubr.bf16.mxu0 %v3192
  %4167 = vmatmul.mubr.bf16.gmra.mrb[0].mxu0 %v3191
  %v4168 = vpop.f32.mrb[0].mxu0
  %v4169 = vadd.f32 %v4128, %v4168
  %v4170 = vpop.f32.mrb[0].mxu0
  %v4171 = vpop.f32.mrb[0].mxu0
  %v4172 = vadd.f32 %v4131, %v4171
  %v4173 = vpop.f32.mrb[0].mxu0
  %4174 = vdwg.mxu0
  %4175 = vmatprep.subr.bf16.mxu0 0
  %4176 = vmatpush1.bf16.msra.mxu0 %v3858
  %4177 = vmatprep.subr.bf16.mxu0 0
  %4178 = vmatpush1.bf16.msra.mxu0 %v3859
  %4179 = vmatprep.subr.bf16.mxu0 0
  %4180 = vmatpush1.bf16.msra.mxu0 %v3860
  %4181 = vmatprep.subr.bf16.mxu0 0
  %4182 = vmatpush1.bf16.msra.mxu0 %v3861
  %4183 = vmatprep.subr.bf16.mxu0 0
  %4184 = vmatpush1.bf16.msra.mxu0 %v3862
  %4185 = vmatprep.subr.bf16.mxu0 0
  %4186 = vmatpush1.bf16.msra.mxu0 %v3863
  %4187 = vmatprep.subr.bf16.mxu0 0
  %4188 = vmatpush1.bf16.msra.mxu0 %v3864
  %4189 = vmatprep.subr.bf16.mxu0 0
  %4190 = vmatpush1.bf16.msra.mxu0 %v3865
  %4191 = vmatprep.subr.bf16.mxu0 0
  %4192 = vmatpush1.bf16.msra.mxu0 %v3866
  %4193 = vmatprep.subr.bf16.mxu0 0
  %4194 = vmatpush1.bf16.msra.mxu0 %v3867
  %4195 = vmatprep.subr.bf16.mxu0 0
  %4196 = vmatpush1.bf16.msra.mxu0 %v3868
  %4197 = vmatprep.subr.bf16.mxu0 0
  %4198 = vmatpush1.bf16.msra.mxu0 %v3869
  %4199 = vmatprep.subr.bf16.mxu0 0
  %4200 = vmatpush1.bf16.msra.mxu0 %v3870
  %4201 = vmatprep.subr.bf16.mxu0 0
  %4202 = vmatpush1.bf16.msra.mxu0 %v3871
  %4203 = vmatprep.subr.bf16.mxu0 0
  %4204 = vmatpush1.bf16.msra.mxu0 %v3872
  %4205 = vmatprep.subr.bf16.mxu0 0
  %4206 = vmatpush1.bf16.msra.mxu0 %v3873
  %4207 = vmatprep.mubr.bf16.mxu0 %v3194
  %4208 = vmatmul.mubr.bf16.gmra.mrb[0].mxu0 %v3193
  %v4209 = vpop.f32.mrb[0].mxu0
  %v4210 = vadd.f32 %v4169, %v4209
  %v4211 = vpop.f32.mrb[0].mxu0
  %v4212 = vpop.f32.mrb[0].mxu0
  %v4213 = vadd.f32 %v4172, %v4212
  %v4214 = vpop.f32.mrb[0].mxu0
  %4215 = vdwg.mxu0
  %v4216 = vmax.f32 %v4210, 0.0
  %v4217 = vmax.f32 %v4213, 0.0
  %v4218 = vpack.c.bf16 %v4217, %v4216
  %v4219 = vld [vmem:[%s6] sm:$0xf]
  %v4220 = vld [vmem:[%s6 + $0x4] sm:$0xf]
  %v4221 = vld [vmem:[%s6 + $0x8] sm:$0xf]
  %v4222 = vld [vmem:[%s6 + $0xc] sm:$0xf]
  %v4223 = vld [vmem:[%s6 + $0x10] sm:$0xf]
  %v4224 = vld [vmem:[%s6 + $0x14] sm:$0xf]
  %v4225 = vld [vmem:[%s6 + $0x18] sm:$0xf]
  %v4226 = vld [vmem:[%s6 + $0x1c] sm:$0xf]
  %v4227 = vld [vmem:[%s6 + $0x20] sm:$0xf]
  %v4228 = vld [vmem:[%s6 + $0x24] sm:$0xf]
  %v4229 = vld [vmem:[%s6 + $0x28] sm:$0xf]
  %v4230 = vld [vmem:[%s6 + $0x2c] sm:$0xf]
  %v4231 = vld [vmem:[%s6 + $0x30] sm:$0xf]
  %v4232 = vld [vmem:[%s6 + $0x34] sm:$0xf]
  %v4233 = vld [vmem:[%s6 + $0x38] sm:$0xf]
  %v4234 = vld [vmem:[%s6 + $0x3c] sm:$0xf]
  %v4235 = vld [vmem:[%s7] sm:$0x1]
  %v4237 = vlaneseq
  %v4238 = vshrl.u32 %v4237, 7
  %v4239 = vsub.s32 0, %v4238
  %v4240 = vrot.slane %v4235, %v4239
  %v4258 = vunpack.c.l.b16 %v4219
  %v4259 = vunpack.c.l.b16 %v4220
  %v4260 = vunpack.c.l.b16 %v4221
  %v4261 = vunpack.c.l.b16 %v4222
  %v4262 = vunpack.c.l.b16 %v4223
  %v4263 = vunpack.c.l.b16 %v4224
  %v4264 = vunpack.c.l.b16 %v4225
  %v4265 = vunpack.c.l.b16 %v4226
  %v4266 = vunpack.c.l.b16 %v4227
  %v4267 = vunpack.c.l.b16 %v4228
  %v4268 = vunpack.c.l.b16 %v4229
  %v4269 = vunpack.c.l.b16 %v4230
  %v4270 = vunpack.c.l.b16 %v4231
  %v4271 = vunpack.c.l.b16 %v4232
  %v4272 = vunpack.c.l.b16 %v4233
  %v4273 = vunpack.c.l.b16 %v4234
  %v4274 = vpack.c.b16 %v4259, %v4258
  %v4275 = vpack.c.b16 %v4261, %v4260
  %v4276 = vpack.c.b16 %v4263, %v4262
  %v4277 = vpack.c.b16 %v4265, %v4264
  %v4278 = vpack.c.b16 %v4267, %v4266
  %v4279 = vpack.c.b16 %v4269, %v4268
  %v4280 = vpack.c.b16 %v4271, %v4270
  %v4281 = vpack.c.b16 %v4273, %v4272
  %4290 = vmatprep.subr.bf16.mxu0 0
  %4291 = vmatpush1.bf16.msra.mxu0 %v4274
  %4292 = vmatprep.subr.bf16.mxu0 0
  %4293 = vmatpush1.bf16.msra.mxu0 %v4275
  %4294 = vmatprep.subr.bf16.mxu0 0
  %4295 = vmatpush1.bf16.msra.mxu0 %v4276
  %4296 = vmatprep.subr.bf16.mxu0 0
  %4297 = vmatpush1.bf16.msra.mxu0 %v4277
  %4298 = vmatprep.subr.bf16.mxu0 0
  %4299 = vmatpush1.bf16.msra.mxu0 %v4278
  %4300 = vmatprep.subr.bf16.mxu0 0
  %4301 = vmatpush1.bf16.msra.mxu0 %v4279
  %4302 = vmatprep.subr.bf16.mxu0 0
  %4303 = vmatpush1.bf16.msra.mxu0 %v4280
  %4304 = vmatprep.subr.bf16.mxu0 0
  %4305 = vmatpush1.bf16.msra.mxu0 %v4281
  %4306 = vmatprep.subr.bf16.mxu0 0
  %4307 = vmatpush1.bf16.msra.mxu0 0
  %4308 = vmatprep.subr.bf16.mxu0 0
  %4309 = vmatpush1.bf16.msra.mxu0 0
  %4310 = vmatprep.subr.bf16.mxu0 0
  %4311 = vmatpush1.bf16.msra.mxu0 0
  %4312 = vmatprep.subr.bf16.mxu0 0
  %4313 = vmatpush1.bf16.msra.mxu0 0
  %4314 = vmatprep.subr.bf16.mxu0 0
  %4315 = vmatpush1.bf16.msra.mxu0 0
  %4316 = vmatprep.subr.bf16.mxu0 0
  %4317 = vmatpush1.bf16.msra.mxu0 0
  %4318 = vmatprep.subr.bf16.mxu0 0
  %4319 = vmatpush1.bf16.msra.mxu0 0
  %4320 = vmatprep.subr.bf16.mxu0 0
  %4321 = vmatpush1.bf16.msra.mxu0 0
  %4322 = vmatprep.mubr.bf16.mxu0 0
  %4323 = vmatmul.mubr.bf16.gmra.mrb[0].mxu0 %v4218
  %v4324 = vpop.f32.mrb[0].mxu0
  %v4325 = vadd.f32 %v4240, %v4324
  %v4326 = vpop.f32.mrb[0].mxu0
  %v4327 = vpop.f32.mrb[0].mxu0
  %v4328 = vadd.f32 %v4240, %v4327
  %v4329 = vpop.f32.mrb[0].mxu0
  %4330 = vdwg.mxu0
  %v4331 = vmax.f32 %v4325, 0.0
  %v4332 = vmax.f32 %v4328, 0.0
  %v4333 = vpack.c.bf16 %v4332, %v4331
  %v4334 = vld [vmem:[%s8] sm:$0xf]
  %v4335 = vld [vmem:[%s8 + $0x4] sm:$0xf]
  %v4336 = vld [vmem:[%s8 + $0x8] sm:$0xf]
  %v4337 = vld [vmem:[%s8 + $0xc] sm:$0xf]
  %v4338 = vld [vmem:[%s8 + $0x10] sm:$0xf]
  %v4339 = vld [vmem:[%s8 + $0x14] sm:$0xf]
  %v4340 = vld [vmem:[%s8 + $0x18] sm:$0xf]
  %v4341 = vld [vmem:[%s8 + $0x1c] sm:$0xf]
  %v4342 = vld [vmem:[%s9] sm:$0x1]
  %v4344 = vlaneseq
  %v4345 = vshrl.u32 %v4344, 7
  %v4346 = vsub.s32 0, %v4345
  %v4347 = vrot.slane %v4342, %v4346
  %v4357 = vunpack.c.l.b16 %v4334
  %v4358 = vunpack.c.l.b16 %v4335
  %v4359 = vunpack.c.l.b16 %v4336
  %v4360 = vunpack.c.l.b16 %v4337
  %v4361 = vunpack.c.l.b16 %v4338
  %v4362 = vunpack.c.l.b16 %v4339
  %v4363 = vunpack.c.l.b16 %v4340
  %v4364 = vunpack.c.l.b16 %v4341
  %v4365 = vpack.c.b16 %v4358, %v4357
  %v4366 = vpack.c.b16 %v4360, %v4359
  %v4367 = vpack.c.b16 %v4362, %v4361
  %v4368 = vpack.c.b16 %v4364, %v4363
  %v4374 = vsel %vm852, %v4333, 0
  %4376 = vmatprep.subr.bf16.mxu0 0
  %4377 = vmatpush1.bf16.msra.mxu0 %v4365
  %4378 = vmatprep.subr.bf16.mxu0 0
  %4379 = vmatpush1.bf16.msra.mxu0 %v4366
  %4380 = vmatprep.subr.bf16.mxu0 0
  %4381 = vmatpush1.bf16.msra.mxu0 %v4367
  %4382 = vmatprep.subr.bf16.mxu0 0
  %4383 = vmatpush1.bf16.msra.mxu0 %v4368
  %4384 = vmatprep.subr.bf16.mxu0 0
  %4385 = vmatpush1.bf16.msra.mxu0 0
  %4386 = vmatprep.subr.bf16.mxu0 0
  %4387 = vmatpush1.bf16.msra.mxu0 0
  %4388 = vmatprep.subr.bf16.mxu0 0
  %4389 = vmatpush1.bf16.msra.mxu0 0
  %4390 = vmatprep.subr.bf16.mxu0 0
  %4391 = vmatpush1.bf16.msra.mxu0 0
  %4392 = vmatprep.subr.bf16.mxu0 0
  %4393 = vmatpush1.bf16.msra.mxu0 0
  %4394 = vmatprep.subr.bf16.mxu0 0
  %4395 = vmatpush1.bf16.msra.mxu0 0
  %4396 = vmatprep.subr.bf16.mxu0 0
  %4397 = vmatpush1.bf16.msra.mxu0 0
  %4398 = vmatprep.subr.bf16.mxu0 0
  %4399 = vmatpush1.bf16.msra.mxu0 0
  %4400 = vmatprep.subr.bf16.mxu0 0
  %4401 = vmatpush1.bf16.msra.mxu0 0
  %4402 = vmatprep.subr.bf16.mxu0 0
  %4403 = vmatpush1.bf16.msra.mxu0 0
  %4404 = vmatprep.subr.bf16.mxu0 0
  %4405 = vmatpush1.bf16.msra.mxu0 0
  %4406 = vmatprep.subr.bf16.mxu0 0
  %4407 = vmatpush1.bf16.msra.mxu0 0
  %4408 = vmatprep.mubr.bf16.mxu0 0
  %4409 = vmatmul.mubr.bf16.gmra.mrb[0].mxu0 %v4374
  %v4410 = vpop.f32.mrb[0].mxu0
  %v4411 = vadd.f32 %v4347, %v4410
  %v4412 = vpop.f32.mrb[0].mxu0
  %v4413 = vpop.f32.mrb[0].mxu0
  %v4414 = vadd.f32 %v4347, %v4413
  %v4415 = vpop.f32.mrb[0].mxu0
  %4416 = vdwg.mxu0
  %4417 = vst [vmem:[%s10] sm:$0xff] %v4411
  %4418 = vst [vmem:[%s10 + $0x8] sm:$0xff] %v4414
  // Predicated region
  $region42: #{gru_emb_forward.1} parent=0 // pred_check
    _
  $region43: #{gru_emb_forward.1} parent=0 // pred_check_branch
    %4420 = sbr.rel (0) target = $region45
  $region44: #{gru_emb_forward.1} parent=0 // pred_region
    _
  $region45: #{gru_emb_forward.1} parent=0 // pred_fallthru
    _
  // Predicated region
  $region46: #{gru_emb_forward.1} parent=0 // pred_check
    _
  $region47: #{gru_emb_forward.1} parent=0 // pred_check_branch
    %4422 = sbr.rel (0) target = $region49
  $region48: #{gru_emb_forward.1} parent=0 // pred_region
    _
  $region49: #{gru_emb_forward.1} parent=0 // pred_fallthru
    _

</llo_original>
